<compile_context>
chip_gen: v7x
topology: tpu7x:2x2x1
jax: 0.10.0
libtpu: 0.0.40
codegen_flags: <defaults>
</compile_context>

<pallas_src>
import functools
import jax
import jax.numpy as jnp
from jax.experimental import pallas as pl
from jax.experimental.pallas import tpu as pltpu


def _round_up(x, m):
    return ((x + m - 1) // m) * m


def _const_spec(a):
    """Whole-array block with a constant index_map (stays resident across grid steps)."""
    return pl.BlockSpec(a.shape, lambda *_: (0,) * a.ndim)


# ---------------------------------------------------------------------------
# Single fused MBConv kernel (one grid step == one block of `bb` images)
# ---------------------------------------------------------------------------
def _mbconv_kernel(x_ref, ew_ref, eb_ref, dw_ref, db_ref,
                   sw1_ref, sb1_ref, sw2_ref, sb2_ref,
                   pw_ref, pb_ref, o_ref, pad_ref, *,
                   K, stride, H, W, Ho, Wo, pad, bb, mid_p,
                   has_expand, use_residual):
    cin_p = x_ref.shape[-1]
    cout_p = o_ref.shape[-1]
    # (bb, H*W, cin_p) -> (bb*H*W, cin_p); kept in the model dtype for the MXU.
    x2d = x_ref[...].reshape(bb * H * W, cin_p)

    # ---- expand: 1x1 conv (BN scale pre-folded into weights) + SiLU ------
    if has_expand:
        xe = jnp.dot(x2d, ew_ref[...], preferred_element_type=jnp.float32) + eb_ref[...]
        xe = xe * jax.nn.sigmoid(xe)                       # SiLU
    else:
        xe = x2d.astype(jnp.float32)

    # ---- zero-pad into VMEM scratch (border strips only; interior is fully
    #      overwritten every step, so no carried state across grid steps) ---
    Hp, Wp = H + 2 * pad, W + 2 * pad
    if pad > 0:
        zr = jnp.zeros((bb, pad, Wp, mid_p), jnp.float32)
        pad_ref[:, pl.ds(0, pad), :, :] = zr               # top rows
        pad_ref[:, pl.ds(H + pad, pad), :, :] = zr         # bottom rows
        zc = jnp.zeros((bb, Hp, pad, mid_p), jnp.float32)
        pad_ref[:, :, pl.ds(0, pad), :] = zc               # left cols
        pad_ref[:, :, pl.ds(W + pad, pad), :] = zc         # right cols
    pad_ref[:, pl.ds(pad, H), pl.ds(pad, W), :] = xe.reshape(bb, H, W, mid_p)

    # ---- depthwise KxK conv (BN scale pre-folded) + SiLU ------------------
    # Taps are read straight from the scratch Ref: one tap live at a time.
    acc = jnp.zeros((bb, Ho, Wo, mid_p), jnp.float32)
    for dy in range(K):
        for dx in range(K):
            if stride == 1:
                tap = pad_ref[:, pl.ds(dy, Ho), pl.ds(dx, Wo), :]
            else:
                tap = pad_ref[:, pl.ds(dy, Ho, stride), pl.ds(dx, Wo, stride), :]
            acc = acc + tap * dw_ref[pl.ds(dy * K + dx, 1), :]    # (1, mid_p) bcast
    y = acc + db_ref[...]
    y = y * jax.nn.sigmoid(y)                              # SiLU

    # ---- squeeze & excitation: only the (bb, mid_p) sigmoid scale ---------
    pooled = jnp.sum(y.reshape(bb, Ho * Wo, mid_p), axis=1) * (1.0 / (Ho * Wo))
    h = jnp.dot(pooled, sw1_ref[...], preferred_element_type=jnp.float32) + sb1_ref[...]
    h = h * jax.nn.sigmoid(h)                              # SiLU
    se = jax.nn.sigmoid(
        jnp.dot(h, sw2_ref[...], preferred_element_type=jnp.float32) + sb2_ref[...])

    # ---- project: SE-scaled 1x1 conv (BN scale pre-folded) (+ residual) ---
    z = (y * se[:, None, None, :]).reshape(bb * Ho * Wo, mid_p)
    out = jnp.dot(z.astype(pw_ref.dtype), pw_ref[...],
                  preferred_element_type=jnp.float32) + pb_ref[...]
    if use_residual:
        out = out + x2d.astype(jnp.float32)
    # Lane-dense (cout padded to 128) unmasked store.
    o_ref[...] = out.reshape(bb, Ho * Wo, cout_p).astype(o_ref.dtype)


# ---------------------------------------------------------------------------
# Wrapper: layout plumbing + weight folding/padding; all compute in the kernel
# ---------------------------------------------------------------------------
def mbconv_forward(x_nchw, p, *, kernel_size, stride, expand_ratio, use_residual):
    K = kernel_size
    pad = K // 2
    x = jnp.transpose(x_nchw, (0, 2, 3, 1))                # NCHW -> NHWC
    N, H, W, cin = x.shape
    Ho = (H + 2 * pad - K) // stride + 1
    Wo = (W + 2 * pad - K) // stride + 1
    has_expand = expand_ratio != 1
    mid, cout = p["proj_w"].shape
    dt = x.dtype
    f32 = jnp.float32

    # Lane-pad channel axes to multiples of 128 -> unmasked vld/vst throughout.
    cin_p = _round_up(cin, 128)
    mid_p = _round_up(mid, 128)
    cout_p = _round_up(cout, 128)
    if use_residual:
        assert cin_p == cout_p and stride == 1 and Ho == H and Wo == W

    def pad_to(a, shape):
        pads = [(0, t - s) for s, t in zip(a.shape, shape)]
        return a if all(pw_ == (0, 0) for pw_ in pads) else jnp.pad(a, pads)

    # Fold BN scales into the conv weights (wrapper-time, free) and zero-pad.
    if has_expand:
        ew = pad_to((p["expand_w"] * p["expand_s"]).astype(dt), (cin_p, mid_p))
        eb = pad_to(p["expand_b"].astype(f32), (1, mid_p))
    else:
        ew = jnp.zeros((1, 1), dt)                         # dummies (ignored)
        eb = jnp.zeros((1, 1), f32)
    red = p["se_w1"].shape[1]
    dwf = pad_to((p["dw_w"].reshape(K * K, mid) * p["dw_s"]).astype(f32), (K * K, mid_p))
    db = pad_to(p["dw_b"].astype(f32), (1, mid_p))
    sw1 = pad_to(p["se_w1"].astype(f32), (mid_p, red))
    sb1 = p["se_b1"].astype(f32)
    sw2 = pad_to(p["se_w2"].astype(f32), (red, mid_p))
    sb2 = pad_to(p["se_b2"].astype(f32), (1, mid_p))
    pw = pad_to((p["proj_w"] * p["proj_s"]).astype(dt), (mid_p, cout_p))
    pb = pad_to(p["proj_b"].astype(f32), (1, cout_p))

    x2d = pad_to(x, (N, H, W, cin_p)).reshape(N, H * W, cin_p)

    # Batch blocking: several images per grid step (amortizes per-step overhead).
    Hp, Wp = H + 2 * pad, W + 2 * pad
    isz = jnp.dtype(dt).itemsize
    per_image = (Hp * Wp * mid_p * 4                       # pad scratch (f32)
                 + 2 * H * W * cin_p * isz                 # double-buffered input block
                 + 2 * Ho * Wo * cout_p * isz              # double-buffered output block
                 + 5 * H * W * mid_p * 4)                  # live f32 intermediates
    bb_cap = max(1, min(8, (20 << 20) // max(per_image, 1)))
    bb = max(d for d in range(1, N + 1) if N % d == 0 and d <= bb_cap)

    weight_bytes = 2 * sum(int(a.size) * jnp.dtype(a.dtype).itemsize
                           for a in (ew, eb, dwf, db, sw1, sb1, sw2, sb2, pw, pb))
    vmem_limit = int(min(60 << 20, max(32 << 20, 2 * (bb * per_image + weight_bytes))))

    kernel = functools.partial(
        _mbconv_kernel, K=K, stride=stride, H=H, W=W, Ho=Ho, Wo=Wo, pad=pad,
        bb=bb, mid_p=mid_p, has_expand=has_expand, use_residual=use_residual)

    args = (x2d, ew, eb, dwf, db, sw1, sb1, sw2, sb2, pw, pb)
    in_specs = [pl.BlockSpec((bb, H * W, cin_p), lambda n: (n, 0, 0))]
    in_specs += [_const_spec(a) for a in args[1:]]

    out = pl.pallas_call(
        kernel,
        out_shape=jax.ShapeDtypeStruct((N, Ho * Wo, cout_p), dt),
        grid=(N // bb,),
        in_specs=in_specs,
        out_specs=pl.BlockSpec((bb, Ho * Wo, cout_p), lambda n: (n, 0, 0)),
        scratch_shapes=[pltpu.VMEM((bb, Hp, Wp, mid_p), jnp.float32)],
        compiler_params=pltpu.CompilerParams(
            dimension_semantics=("parallel",),
            vmem_limit_bytes=vmem_limit),
    )(*args)

    out = out[..., :cout].reshape(N, Ho, Wo, cout)
    return jnp.transpose(out, (0, 3, 1, 2))                # NHWC -> NCHW


# ---------------------------------------------------------------------------
# Pure-JAX reference (verification; uses the raw, unfolded/unpadded params)
# ---------------------------------------------------------------------------
def reference_forward(x_nchw, p, *, kernel_size, stride, expand_ratio, use_residual):
    x = jnp.transpose(x_nchw, (0, 2, 3, 1)).astype(jnp.float32)
    identity = x
    if expand_ratio != 1:
        x = jnp.einsum("nhwc,cd->nhwd", x, p["expand_w"]) * p["expand_s"] + p["expand_b"]
        x = x * jax.nn.sigmoid(x)
    C = x.shape[-1]
    pad = kernel_size // 2
    x = jax.lax.conv_general_dilated(
        x, p["dw_w"], window_strides=(stride, stride),
        padding=[(pad, pad), (pad, pad)],
        dimension_numbers=("NHWC", "HWIO", "NHWC"),
        feature_group_count=C)
    x = x * p["dw_s"].reshape(1, 1, 1, C) + p["dw_b"].reshape(1, 1, 1, C)
    x = x * jax.nn.sigmoid(x)
    pooled = jnp.mean(x, axis=(1, 2))
    h = pooled @ p["se_w1"] + p["se_b1"]
    h = h * jax.nn.sigmoid(h)
    s = jax.nn.sigmoid(h @ p["se_w2"] + p["se_b2"])
    x = x * s[:, None, None, :]
    x = jnp.einsum("nhwc,cd->nhwd", x, p["proj_w"]) * p["proj_s"] + p["proj_b"]
    if use_residual:
        x = x + identity
    return jnp.transpose(x, (0, 3, 1, 2))


# ---------------------------------------------------------------------------
# Deterministic parameter construction (BN folded to scale/bias, eval mode)
# ---------------------------------------------------------------------------
def _fold_bn(k, c, eps=1e-5):
    k1, k2, k3, k4 = jax.random.split(k, 4)
    gamma = 1.0 + 0.1 * jax.random.normal(k1, (c,), jnp.float32)
    beta = 0.05 * jax.random.normal(k2, (c,), jnp.float32)
    mean = 0.02 * jax.random.normal(k3, (c,), jnp.float32)
    var = 1.0 + 0.1 * jax.random.uniform(k4, (c,), jnp.float32)
    scale = gamma / jnp.sqrt(var + eps)
    bias = beta - mean * scale
    return scale, bias


def make_params(key, in_ch, out_ch, kernel_size, expand_ratio, se_ratio):
    mid = in_ch * expand_ratio
    reduced = int(mid * se_ratio)
    ks = jax.random.split(key, 10)
    p = {}
    p["expand_w"] = 0.1 * jax.random.normal(ks[0], (in_ch, mid), jnp.float32)
    s, b = _fold_bn(ks[1], mid)
    p["expand_s"], p["expand_b"] = s.reshape(1, mid), b.reshape(1, mid)
    p["dw_w"] = 0.1 * jax.random.normal(ks[2], (kernel_size, kernel_size, 1, mid),
                                        jnp.float32)
    s, b = _fold_bn(ks[3], mid)
    p["dw_s"], p["dw_b"] = s.reshape(1, mid), b.reshape(1, mid)
    p["se_w1"] = 0.1 * jax.random.normal(ks[4], (mid, reduced), jnp.float32)
    p["se_b1"] = 0.05 * jax.random.normal(ks[5], (1, reduced), jnp.float32)
    p["se_w2"] = 0.1 * jax.random.normal(ks[6], (reduced, mid), jnp.float32)
    p["se_b2"] = 0.05 * jax.random.normal(ks[7], (1, mid), jnp.float32)
    p["proj_w"] = 0.1 * jax.random.normal(ks[8], (mid, out_ch), jnp.float32)
    s, b = _fold_bn(ks[9], out_ch)
    p["proj_s"], p["proj_b"] = s.reshape(1, out_ch), b.reshape(1, out_ch)
    return p


if __name__ == "__main__":
    # MBConv(in_ch=8, out_ch=8, kernel_size=3, stride=1, expand_ratio=4)
    in_ch, out_ch = 8, 8
    kernel_size, stride, expand_ratio, se_ratio = 3, 1, 4, 0.25
    use_residual = (stride == 1) and (in_ch == out_ch)

    key = jax.random.PRNGKey(0)
    kx, kp = jax.random.split(key)
    x = jax.random.normal(kx, (2, in_ch, 16, 16), jnp.float32)   # NCHW like PyTorch
    params = make_params(kp, in_ch, out_ch, kernel_size, expand_ratio, se_ratio)

    out = mbconv_forward(x, params, kernel_size=kernel_size, stride=stride,
                         expand_ratio=expand_ratio, use_residual=use_residual)
    out = jax.block_until_ready(out)

    ref = reference_forward(x, params, kernel_size=kernel_size, stride=stride,
                            expand_ratio=expand_ratio, use_residual=use_residual)
    assert out.shape == (2, out_ch, 16, 16)
    err = float(jnp.max(jnp.abs(out - ref)))
    assert jnp.allclose(out, ref, atol=2e-4, rtol=2e-4), err
    print("KERNEL_OK")
</pallas_src>

<mosaic_0001>
module attributes {stable_mosaic.version = 11 : i64} {
  func.func @_mbconv_kernel(%arg0: i32, %arg1: memref<2x256x128xf32, #tpu.memory_space<vmem>>, %arg2: memref<128x128xf32, #tpu.memory_space<vmem>>, %arg3: memref<1x128xf32, #tpu.memory_space<vmem>>, %arg4: memref<9x128xf32, #tpu.memory_space<vmem>>, %arg5: memref<1x128xf32, #tpu.memory_space<vmem>>, %arg6: memref<128x8xf32, #tpu.memory_space<vmem>>, %arg7: memref<1x8xf32, #tpu.memory_space<vmem>>, %arg8: memref<8x128xf32, #tpu.memory_space<vmem>>, %arg9: memref<1x128xf32, #tpu.memory_space<vmem>>, %arg10: memref<128x128xf32, #tpu.memory_space<vmem>>, %arg11: memref<1x128xf32, #tpu.memory_space<vmem>>, %arg12: memref<2x256x128xf32, #tpu.memory_space<vmem>>, %arg13: memref<2x18x18x128xf32, #tpu.memory_space<vmem>>) attributes {dimension_semantics = [#tpu.dimension_semantics<parallel>], iteration_bounds = array<i64: 1>, scalar_prefetch = 0 : i64, scratch_operands = 1 : i64, tpu.core_type = #tpu.core_type<tc>, window_params = [{transform_indices = @transform_0, window_bounds = array<i64: 2, 256, 128>}, {pipeline_mode = #tpu.pipeline_mode<synchronous>, transform_indices = @transform_1, window_bounds = array<i64: 128, 128>}, {pipeline_mode = #tpu.pipeline_mode<synchronous>, transform_indices = @transform_2, window_bounds = array<i64: 1, 128>}, {pipeline_mode = #tpu.pipeline_mode<synchronous>, transform_indices = @transform_3, window_bounds = array<i64: 9, 128>}, {pipeline_mode = #tpu.pipeline_mode<synchronous>, transform_indices = @transform_4, window_bounds = array<i64: 1, 128>}, {pipeline_mode = #tpu.pipeline_mode<synchronous>, transform_indices = @transform_5, window_bounds = array<i64: 128, 8>}, {pipeline_mode = #tpu.pipeline_mode<synchronous>, transform_indices = @transform_6, window_bounds = array<i64: 1, 8>}, {pipeline_mode = #tpu.pipeline_mode<synchronous>, transform_indices = @transform_7, window_bounds = array<i64: 8, 128>}, {pipeline_mode = #tpu.pipeline_mode<synchronous>, transform_indices = @transform_8, window_bounds = array<i64: 1, 128>}, {pipeline_mode = #tpu.pipeline_mode<synchronous>, transform_indices = @transform_9, window_bounds = array<i64: 128, 128>}, {pipeline_mode = #tpu.pipeline_mode<synchronous>, transform_indices = @transform_10, window_bounds = array<i64: 1, 128>}, {transform_indices = @transform_11, window_bounds = array<i64: 2, 256, 128>}]} {
    %c0 = arith.constant 0 : index
    %c0_0 = arith.constant 0 : index
    %c0_1 = arith.constant 0 : index
    %0 = vector.load %arg1[%c0, %c0_0, %c0_1] : memref<2x256x128xf32, #tpu.memory_space<vmem>>, vector<2x256x128xf32>
    %1 = vector.shape_cast %0 : vector<2x256x128xf32> to vector<512x128xf32>
    %c0_2 = arith.constant 0 : index
    %c0_3 = arith.constant 0 : index
    %2 = vector.load %arg2[%c0_2, %c0_3] : memref<128x128xf32, #tpu.memory_space<vmem>>, vector<128x128xf32>
    %cst = arith.constant dense<0.000000e+00> : vector<512x128xf32>
    %3 = tpu.matmul %1, %2, %cst {dimension_numbers = #tpu.dot_dimension_numbers<[1], [0], [0], [1], [0, 0, 1, 1], [], []>} : vector<512x128xf32>, vector<128x128xf32>, vector<512x128xf32> -> vector<512x128xf32>
    %c0_4 = arith.constant 0 : index
    %c0_5 = arith.constant 0 : index
    %4 = vector.load %arg3[%c0_4, %c0_5] : memref<1x128xf32, #tpu.memory_space<vmem>>, vector<1x128xf32>
    %5 = vector.broadcast %4 : vector<1x128xf32> to vector<512x128xf32>
    %6 = arith.addf %3, %5 : vector<512x128xf32>
    %7 = arith.negf %6 : vector<512x128xf32>
    %8 = math.exp %7 : vector<512x128xf32>
    %cst_6 = arith.constant 1.000000e+00 : f32
    %9 = vector.broadcast %cst_6 : f32 to vector<512x128xf32>
    %10 = arith.addf %9, %8 : vector<512x128xf32>
    %11 = arith.divf %9, %10 : vector<512x128xf32>
    %12 = arith.mulf %6, %11 : vector<512x128xf32>
    %cst_7 = arith.constant 0.000000e+00 : f32
    %13 = vector.broadcast %cst_7 : f32 to vector<2x1x18x128xf32>
    %c0_8 = arith.constant 0 : index
    %c0_9 = arith.constant 0 : index
    %c0_10 = arith.constant 0 : index
    %c0_11 = arith.constant 0 : index
    %14 = vector.load %arg13[%c0_8, %c0_9, %c0_10, %c0_11] : memref<2x18x18x128xf32, #tpu.memory_space<vmem>>, vector<2x1x18x128xf32>
    tpu.vector_store %arg13[%c0_8, %c0_9, %c0_10, %c0_11], %13 {strides = array<i32>} : memref<2x18x18x128xf32, #tpu.memory_space<vmem>>, vector<2x1x18x128xf32>,
    %c0_12 = arith.constant 0 : index
    %c17 = arith.constant 17 : index
    %c0_13 = arith.constant 0 : index
    %c0_14 = arith.constant 0 : index
    %15 = vector.load %arg13[%c0_12, %c17, %c0_13, %c0_14] : memref<2x18x18x128xf32, #tpu.memory_space<vmem>>, vector<2x1x18x128xf32>
    tpu.vector_store %arg13[%c0_12, %c17, %c0_13, %c0_14], %13 {strides = array<i32>} : memref<2x18x18x128xf32, #tpu.memory_space<vmem>>, vector<2x1x18x128xf32>,
    %cst_15 = arith.constant 0.000000e+00 : f32
    %16 = vector.broadcast %cst_15 : f32 to vector<2x18x1x128xf32>
    %c0_16 = arith.constant 0 : index
    %c0_17 = arith.constant 0 : index
    %c0_18 = arith.constant 0 : index
    %c0_19 = arith.constant 0 : index
    %17 = vector.load %arg13[%c0_16, %c0_17, %c0_18, %c0_19] : memref<2x18x18x128xf32, #tpu.memory_space<vmem>>, vector<2x18x1x128xf32>
    tpu.vector_store %arg13[%c0_16, %c0_17, %c0_18, %c0_19], %16 {strides = array<i32>} : memref<2x18x18x128xf32, #tpu.memory_space<vmem>>, vector<2x18x1x128xf32>,
    %c0_20 = arith.constant 0 : index
    %c0_21 = arith.constant 0 : index
    %c17_22 = arith.constant 17 : index
    %c0_23 = arith.constant 0 : index
    %18 = vector.load %arg13[%c0_20, %c0_21, %c17_22, %c0_23] : memref<2x18x18x128xf32, #tpu.memory_space<vmem>>, vector<2x18x1x128xf32>
    tpu.vector_store %arg13[%c0_20, %c0_21, %c17_22, %c0_23], %16 {strides = array<i32>} : memref<2x18x18x128xf32, #tpu.memory_space<vmem>>, vector<2x18x1x128xf32>,
    %19 = vector.shape_cast %12 : vector<512x128xf32> to vector<2x16x16x128xf32>
    %c0_24 = arith.constant 0 : index
    %c1 = arith.constant 1 : index
    %c1_25 = arith.constant 1 : index
    %c0_26 = arith.constant 0 : index
    %20 = vector.load %arg13[%c0_24, %c1, %c1_25, %c0_26] : memref<2x18x18x128xf32, #tpu.memory_space<vmem>>, vector<2x16x16x128xf32>
    tpu.vector_store %arg13[%c0_24, %c1, %c1_25, %c0_26], %19 {strides = array<i32>} : memref<2x18x18x128xf32, #tpu.memory_space<vmem>>, vector<2x16x16x128xf32>,
    %cst_27 = arith.constant 0.000000e+00 : f32
    %21 = vector.broadcast %cst_27 : f32 to vector<2x16x16x128xf32>
    %c0_28 = arith.constant 0 : index
    %c0_29 = arith.constant 0 : index
    %c0_30 = arith.constant 0 : index
    %c0_31 = arith.constant 0 : index
    %22 = vector.load %arg13[%c0_28, %c0_29, %c0_30, %c0_31] : memref<2x18x18x128xf32, #tpu.memory_space<vmem>>, vector<2x16x16x128xf32>
    %c0_32 = arith.constant 0 : index
    %c0_33 = arith.constant 0 : index
    %23 = vector.load %arg4[%c0_32, %c0_33] : memref<9x128xf32, #tpu.memory_space<vmem>>, vector<1x128xf32>
    %24 = vector.shape_cast %23 : vector<1x128xf32> to vector<1x1x1x128xf32>
    %25 = vector.broadcast %24 : vector<1x1x1x128xf32> to vector<2x16x16x128xf32>
    %26 = arith.mulf %22, %25 : vector<2x16x16x128xf32>
    %27 = arith.addf %21, %26 : vector<2x16x16x128xf32>
    %c0_34 = arith.constant 0 : index
    %c0_35 = arith.constant 0 : index
    %c1_36 = arith.constant 1 : index
    %c0_37 = arith.constant 0 : index
    %28 = vector.load %arg13[%c0_34, %c0_35, %c1_36, %c0_37] : memref<2x18x18x128xf32, #tpu.memory_space<vmem>>, vector<2x16x16x128xf32>
    %c1_38 = arith.constant 1 : index
    %c0_39 = arith.constant 0 : index
    %29 = vector.load %arg4[%c1_38, %c0_39] : memref<9x128xf32, #tpu.memory_space<vmem>>, vector<1x128xf32>
    %30 = vector.shape_cast %29 : vector<1x128xf32> to vector<1x1x1x128xf32>
    %31 = vector.broadcast %30 : vector<1x1x1x128xf32> to vector<2x16x16x128xf32>
    %32 = arith.mulf %28, %31 : vector<2x16x16x128xf32>
    %33 = arith.addf %27, %32 : vector<2x16x16x128xf32>
    %c0_40 = arith.constant 0 : index
    %c0_41 = arith.constant 0 : index
    %c2 = arith.constant 2 : index
    %c0_42 = arith.constant 0 : index
    %34 = vector.load %arg13[%c0_40, %c0_41, %c2, %c0_42] : memref<2x18x18x128xf32, #tpu.memory_space<vmem>>, vector<2x16x16x128xf32>
    %c2_43 = arith.constant 2 : index
    %c0_44 = arith.constant 0 : index
    %35 = vector.load %arg4[%c2_43, %c0_44] : memref<9x128xf32, #tpu.memory_space<vmem>>, vector<1x128xf32>
    %36 = vector.shape_cast %35 : vector<1x128xf32> to vector<1x1x1x128xf32>
    %37 = vector.broadcast %36 : vector<1x1x1x128xf32> to vector<2x16x16x128xf32>
    %38 = arith.mulf %34, %37 : vector<2x16x16x128xf32>
    %39 = arith.addf %33, %38 : vector<2x16x16x128xf32>
    %c0_45 = arith.constant 0 : index
    %c1_46 = arith.constant 1 : index
    %c0_47 = arith.constant 0 : index
    %c0_48 = arith.constant 0 : index
    %40 = vector.load %arg13[%c0_45, %c1_46, %c0_47, %c0_48] : memref<2x18x18x128xf32, #tpu.memory_space<vmem>>, vector<2x16x16x128xf32>
    %c3 = arith.constant 3 : index
    %c0_49 = arith.constant 0 : index
    %41 = vector.load %arg4[%c3, %c0_49] : memref<9x128xf32, #tpu.memory_space<vmem>>, vector<1x128xf32>
    %42 = vector.shape_cast %41 : vector<1x128xf32> to vector<1x1x1x128xf32>
    %43 = vector.broadcast %42 : vector<1x1x1x128xf32> to vector<2x16x16x128xf32>
    %44 = arith.mulf %40, %43 : vector<2x16x16x128xf32>
    %45 = arith.addf %39, %44 : vector<2x16x16x128xf32>
    %c0_50 = arith.constant 0 : index
    %c1_51 = arith.constant 1 : index
    %c1_52 = arith.constant 1 : index
    %c0_53 = arith.constant 0 : index
    %46 = vector.load %arg13[%c0_50, %c1_51, %c1_52, %c0_53] : memref<2x18x18x128xf32, #tpu.memory_space<vmem>>, vector<2x16x16x128xf32>
    %c4 = arith.constant 4 : index
    %c0_54 = arith.constant 0 : index
    %47 = vector.load %arg4[%c4, %c0_54] : memref<9x128xf32, #tpu.memory_space<vmem>>, vector<1x128xf32>
    %48 = vector.shape_cast %47 : vector<1x128xf32> to vector<1x1x1x128xf32>
    %49 = vector.broadcast %48 : vector<1x1x1x128xf32> to vector<2x16x16x128xf32>
    %50 = arith.mulf %46, %49 : vector<2x16x16x128xf32>
    %51 = arith.addf %45, %50 : vector<2x16x16x128xf32>
    %c0_55 = arith.constant 0 : index
    %c1_56 = arith.constant 1 : index
    %c2_57 = arith.constant 2 : index
    %c0_58 = arith.constant 0 : index
    %52 = vector.load %arg13[%c0_55, %c1_56, %c2_57, %c0_58] : memref<2x18x18x128xf32, #tpu.memory_space<vmem>>, vector<2x16x16x128xf32>
    %c5 = arith.constant 5 : index
    %c0_59 = arith.constant 0 : index
    %53 = vector.load %arg4[%c5, %c0_59] : memref<9x128xf32, #tpu.memory_space<vmem>>, vector<1x128xf32>
    %54 = vector.shape_cast %53 : vector<1x128xf32> to vector<1x1x1x128xf32>
    %55 = vector.broadcast %54 : vector<1x1x1x128xf32> to vector<2x16x16x128xf32>
    %56 = arith.mulf %52, %55 : vector<2x16x16x128xf32>
    %57 = arith.addf %51, %56 : vector<2x16x16x128xf32>
    %c0_60 = arith.constant 0 : index
    %c2_61 = arith.constant 2 : index
    %c0_62 = arith.constant 0 : index
    %c0_63 = arith.constant 0 : index
    %58 = vector.load %arg13[%c0_60, %c2_61, %c0_62, %c0_63] : memref<2x18x18x128xf32, #tpu.memory_space<vmem>>, vector<2x16x16x128xf32>
    %c6 = arith.constant 6 : index
    %c0_64 = arith.constant 0 : index
    %59 = vector.load %arg4[%c6, %c0_64] : memref<9x128xf32, #tpu.memory_space<vmem>>, vector<1x128xf32>
    %60 = vector.shape_cast %59 : vector<1x128xf32> to vector<1x1x1x128xf32>
    %61 = vector.broadcast %60 : vector<1x1x1x128xf32> to vector<2x16x16x128xf32>
    %62 = arith.mulf %58, %61 : vector<2x16x16x128xf32>
    %63 = arith.addf %57, %62 : vector<2x16x16x128xf32>
    %c0_65 = arith.constant 0 : index
    %c2_66 = arith.constant 2 : index
    %c1_67 = arith.constant 1 : index
    %c0_68 = arith.constant 0 : index
    %64 = vector.load %arg13[%c0_65, %c2_66, %c1_67, %c0_68] : memref<2x18x18x128xf32, #tpu.memory_space<vmem>>, vector<2x16x16x128xf32>
    %c7 = arith.constant 7 : index
    %c0_69 = arith.constant 0 : index
    %65 = vector.load %arg4[%c7, %c0_69] : memref<9x128xf32, #tpu.memory_space<vmem>>, vector<1x128xf32>
    %66 = vector.shape_cast %65 : vector<1x128xf32> to vector<1x1x1x128xf32>
    %67 = vector.broadcast %66 : vector<1x1x1x128xf32> to vector<2x16x16x128xf32>
    %68 = arith.mulf %64, %67 : vector<2x16x16x128xf32>
    %69 = arith.addf %63, %68 : vector<2x16x16x128xf32>
    %c0_70 = arith.constant 0 : index
    %c2_71 = arith.constant 2 : index
    %c2_72 = arith.constant 2 : index
    %c0_73 = arith.constant 0 : index
    %70 = vector.load %arg13[%c0_70, %c2_71, %c2_72, %c0_73] : memref<2x18x18x128xf32, #tpu.memory_space<vmem>>, vector<2x16x16x128xf32>
    %c8 = arith.constant 8 : index
    %c0_74 = arith.constant 0 : index
    %71 = vector.load %arg4[%c8, %c0_74] : memref<9x128xf32, #tpu.memory_space<vmem>>, vector<1x128xf32>
    %72 = vector.shape_cast %71 : vector<1x128xf32> to vector<1x1x1x128xf32>
    %73 = vector.broadcast %72 : vector<1x1x1x128xf32> to vector<2x16x16x128xf32>
    %74 = arith.mulf %70, %73 : vector<2x16x16x128xf32>
    %75 = arith.addf %69, %74 : vector<2x16x16x128xf32>
    %c0_75 = arith.constant 0 : index
    %c0_76 = arith.constant 0 : index
    %76 = vector.load %arg5[%c0_75, %c0_76] : memref<1x128xf32, #tpu.memory_space<vmem>>, vector<1x128xf32>
    %77 = vector.shape_cast %76 : vector<1x128xf32> to vector<1x1x1x128xf32>
    %78 = vector.broadcast %77 : vector<1x1x1x128xf32> to vector<2x16x16x128xf32>
    %79 = arith.addf %75, %78 : vector<2x16x16x128xf32>
    %80 = arith.negf %79 : vector<2x16x16x128xf32>
    %81 = math.exp %80 : vector<2x16x16x128xf32>
    %cst_77 = arith.constant 1.000000e+00 : f32
    %82 = vector.broadcast %cst_77 : f32 to vector<2x16x16x128xf32>
    %83 = arith.addf %82, %81 : vector<2x16x16x128xf32>
    %84 = arith.divf %82, %83 : vector<2x16x16x128xf32>
    %85 = arith.mulf %79, %84 : vector<2x16x16x128xf32>
    %86 = vector.shape_cast %85 : vector<2x16x16x128xf32> to vector<2x256x128xf32>
    %cst_78 = arith.constant dense<0.000000e+00> : vector<2x128xf32>
    %87 = vector.multi_reduction <add>, %86, %cst_78 [1] : vector<2x256x128xf32> to vector<2x128xf32>
    %cst_79 = arith.constant 3.906250e-03 : f32
    %88 = vector.broadcast %cst_79 : f32 to vector<2x128xf32>
    %89 = arith.mulf %87, %88 : vector<2x128xf32>
    %c0_80 = arith.constant 0 : index
    %c0_81 = arith.constant 0 : index
    %90 = vector.load %arg6[%c0_80, %c0_81] : memref<128x8xf32, #tpu.memory_space<vmem>>, vector<128x8xf32>
    %cst_82 = arith.constant dense<0.000000e+00> : vector<2x8xf32>
    %91 = tpu.matmul %89, %90, %cst_82 {dimension_numbers = #tpu.dot_dimension_numbers<[1], [0], [0], [1], [0, 0, 1, 1], [], []>} : vector<2x128xf32>, vector<128x8xf32>, vector<2x8xf32> -> vector<2x8xf32>
    %c0_83 = arith.constant 0 : index
    %c0_84 = arith.constant 0 : index
    %92 = vector.load %arg7[%c0_83, %c0_84] : memref<1x8xf32, #tpu.memory_space<vmem>>, vector<1x8xf32>
    %93 = vector.broadcast %92 : vector<1x8xf32> to vector<2x8xf32>
    %94 = arith.addf %91, %93 : vector<2x8xf32>
    %95 = arith.negf %94 : vector<2x8xf32>
    %96 = math.exp %95 : vector<2x8xf32>
    %cst_85 = arith.constant 1.000000e+00 : f32
    %97 = vector.broadcast %cst_85 : f32 to vector<2x8xf32>
    %98 = arith.addf %97, %96 : vector<2x8xf32>
    %99 = arith.divf %97, %98 : vector<2x8xf32>
    %100 = arith.mulf %94, %99 : vector<2x8xf32>
    %c0_86 = arith.constant 0 : index
    %c0_87 = arith.constant 0 : index
    %101 = vector.load %arg8[%c0_86, %c0_87] : memref<8x128xf32, #tpu.memory_space<vmem>>, vector<8x128xf32>
    %cst_88 = arith.constant dense<0.000000e+00> : vector<2x128xf32>
    %102 = tpu.matmul %100, %101, %cst_88 {dimension_numbers = #tpu.dot_dimension_numbers<[1], [0], [0], [1], [0, 0, 1, 1], [], []>} : vector<2x8xf32>, vector<8x128xf32>, vector<2x128xf32> -> vector<2x128xf32>
    %c0_89 = arith.constant 0 : index
    %c0_90 = arith.constant 0 : index
    %103 = vector.load %arg9[%c0_89, %c0_90] : memref<1x128xf32, #tpu.memory_space<vmem>>, vector<1x128xf32>
    %104 = vector.broadcast %103 : vector<1x128xf32> to vector<2x128xf32>
    %105 = arith.addf %102, %104 : vector<2x128xf32>
    %106 = arith.negf %105 : vector<2x128xf32>
    %107 = math.exp %106 : vector<2x128xf32>
    %cst_91 = arith.constant 1.000000e+00 : f32
    %108 = vector.broadcast %cst_91 : f32 to vector<2x128xf32>
    %109 = arith.addf %108, %107 : vector<2x128xf32>
    %110 = arith.divf %108, %109 : vector<2x128xf32>
    %111 = vector.shape_cast %110 : vector<2x128xf32> to vector<2x1x1x128xf32>
    %112 = vector.broadcast %111 : vector<2x1x1x128xf32> to vector<2x16x16x128xf32>
    %113 = arith.mulf %85, %112 : vector<2x16x16x128xf32>
    %114 = vector.shape_cast %113 : vector<2x16x16x128xf32> to vector<512x128xf32>
    %c0_92 = arith.constant 0 : index
    %c0_93 = arith.constant 0 : index
    %115 = vector.load %arg10[%c0_92, %c0_93] : memref<128x128xf32, #tpu.memory_space<vmem>>, vector<128x128xf32>
    %cst_94 = arith.constant dense<0.000000e+00> : vector<512x128xf32>
    %116 = tpu.matmul %114, %115, %cst_94 {dimension_numbers = #tpu.dot_dimension_numbers<[1], [0], [0], [1], [0, 0, 1, 1], [], []>} : vector<512x128xf32>, vector<128x128xf32>, vector<512x128xf32> -> vector<512x128xf32>
    %c0_95 = arith.constant 0 : index
    %c0_96 = arith.constant 0 : index
    %117 = vector.load %arg11[%c0_95, %c0_96] : memref<1x128xf32, #tpu.memory_space<vmem>>, vector<1x128xf32>
    %118 = vector.broadcast %117 : vector<1x128xf32> to vector<512x128xf32>
    %119 = arith.addf %116, %118 : vector<512x128xf32>
    %120 = arith.addf %119, %1 : vector<512x128xf32>
    %121 = vector.shape_cast %120 : vector<512x128xf32> to vector<2x256x128xf32>
    %c0_97 = arith.constant 0 : index
    %c0_98 = arith.constant 0 : index
    %c0_99 = arith.constant 0 : index
    %122 = vector.load %arg12[%c0_97, %c0_98, %c0_99] : memref<2x256x128xf32, #tpu.memory_space<vmem>>, vector<2x256x128xf32>
    tpu.vector_store %arg12[%c0_97, %c0_98, %c0_99], %121 {strides = array<i32>} : memref<2x256x128xf32, #tpu.memory_space<vmem>>, vector<2x256x128xf32>,
    return
  }
  func.func @transform_0(%arg0: i32) -> (i32, i32, i32) {
    %c0_i32 = arith.constant 0 : i32
    %c0_i32_0 = arith.constant 0 : i32
    %c0_i32_1 = arith.constant 0 : i32
    return %arg0, %c0_i32, %c0_i32_0 : i32, i32, i32
  }
  func.func @transform_1(%arg0: i32) -> (i32, i32) {
    %c0_i32 = arith.constant 0 : i32
    %c0_i32_0 = arith.constant 0 : i32
    %c0_i32_1 = arith.constant 0 : i32
    return %c0_i32, %c0_i32_0 : i32, i32
  }
  func.func @transform_2(%arg0: i32) -> (i32, i32) {
    %c0_i32 = arith.constant 0 : i32
    %c0_i32_0 = arith.constant 0 : i32
    %c0_i32_1 = arith.constant 0 : i32
    return %c0_i32, %c0_i32_0 : i32, i32
  }
  func.func @transform_3(%arg0: i32) -> (i32, i32) {
    %c0_i32 = arith.constant 0 : i32
    %c0_i32_0 = arith.constant 0 : i32
    %c0_i32_1 = arith.constant 0 : i32
    return %c0_i32, %c0_i32_0 : i32, i32
  }
  func.func @transform_4(%arg0: i32) -> (i32, i32) {
    %c0_i32 = arith.constant 0 : i32
    %c0_i32_0 = arith.constant 0 : i32
    %c0_i32_1 = arith.constant 0 : i32
    return %c0_i32, %c0_i32_0 : i32, i32
  }
  func.func @transform_5(%arg0: i32) -> (i32, i32) {
    %c0_i32 = arith.constant 0 : i32
    %c0_i32_0 = arith.constant 0 : i32
    %c0_i32_1 = arith.constant 0 : i32
    return %c0_i32, %c0_i32_0 : i32, i32
  }
  func.func @transform_6(%arg0: i32) -> (i32, i32) {
    %c0_i32 = arith.constant 0 : i32
    %c0_i32_0 = arith.constant 0 : i32
    %c0_i32_1 = arith.constant 0 : i32
    return %c0_i32, %c0_i32_0 : i32, i32
  }
  func.func @transform_7(%arg0: i32) -> (i32, i32) {
    %c0_i32 = arith.constant 0 : i32
    %c0_i32_0 = arith.constant 0 : i32
    %c0_i32_1 = arith.constant 0 : i32
    return %c0_i32, %c0_i32_0 : i32, i32
  }
  func.func @transform_8(%arg0: i32) -> (i32, i32) {
    %c0_i32 = arith.constant 0 : i32
    %c0_i32_0 = arith.constant 0 : i32
    %c0_i32_1 = arith.constant 0 : i32
    return %c0_i32, %c0_i32_0 : i32, i32
  }
  func.func @transform_9(%arg0: i32) -> (i32, i32) {
    %c0_i32 = arith.constant 0 : i32
    %c0_i32_0 = arith.constant 0 : i32
    %c0_i32_1 = arith.constant 0 : i32
    return %c0_i32, %c0_i32_0 : i32, i32
  }
  func.func @transform_10(%arg0: i32) -> (i32, i32) {
    %c0_i32 = arith.constant 0 : i32
    %c0_i32_0 = arith.constant 0 : i32
    %c0_i32_1 = arith.constant 0 : i32
    return %c0_i32, %c0_i32_0 : i32, i32
  }
  func.func @transform_11(%arg0: i32) -> (i32, i32, i32) {
    %c0_i32 = arith.constant 0 : i32
    %c0_i32_0 = arith.constant 0 : i32
    %c0_i32_1 = arith.constant 0 : i32
    return %arg0, %c0_i32, %c0_i32_0 : i32, i32, i32
  }
}

</mosaic_0001>

<llo_original>
// kernel: tpu_custom_call.1
$region0: #{tpu_custom_call.1}
  #allocation0 [shape = 'u32[]', space=smem, size = 0x4, offset = 0x4, fixed_abs, tag = 'smem constant byte address 0x4 - core index']
  #allocation1 [shape = 'u32[144,128]{1,0:T(1,128)}', space=vmem, size = 0x12000, scoped, tag = 'internal scratch']
  #allocation2 [shape = 'f32[2,18,18,128]{3,2,1,0:T(8,128)}', space=vmem, size = 0x6c000, scoped, tag = 'scratch operand']
  %s0 = inlined_call_operand.hbm [shape: f32[2,256,128], index: 0, kind: input, shape index: {}]
  %s1 = inlined_call_operand.vmem [shape: f32[128,128], index: 1, kind: input, shape index: {}]
  %s2 = inlined_call_operand.vmem [shape: f32[1,128], index: 2, kind: input, shape index: {}]
  %s3 = inlined_call_operand.vmem [shape: f32[9,128], index: 3, kind: input, shape index: {}]
  %s4 = inlined_call_operand.vmem [shape: f32[1,128], index: 4, kind: input, shape index: {}]
  %s5 = inlined_call_operand.vmem [shape: f32[128,8], index: 5, kind: input, shape index: {}]
  %s6 = inlined_call_operand.vmem [shape: f32[1,8], index: 6, kind: input, shape index: {}]
  %s7 = inlined_call_operand.vmem [shape: f32[8,128], index: 7, kind: input, shape index: {}]
  %s8 = inlined_call_operand.vmem [shape: f32[1,128], index: 8, kind: input, shape index: {}]
  %s9 = inlined_call_operand.hbm [shape: f32[128,128], index: 9, kind: input, shape index: {}]
  %s10 = inlined_call_operand.vmem [shape: f32[1,128], index: 10, kind: input, shape index: {}]
  %s11 = inlined_call_operand.hbm [shape: f32[2,256,128], index: 11, kind: output, shape index: {}]
  %s12 = sld [smem:[#allocation0]]
  $region62: #{tpu_custom_call.1} parent=0
    _
  %s14 = ssub.s32 1, %s12
  %s15 = scalar_select 0, %s14, %s12
  $region1: #{tpu_custom_call.1} parent=0
    #allocation3 [shape = 'u8[262144]{0}', space=vmem, size = 0x40000, scoped, tag = 'input window, operand 0, single buffered']
    #allocation4 [shape = 's32[1]{0}', space=sflag, size = 0x4, scoped, tag = 'scoped memory for tpu_custom_call.1']
    #allocation5 [shape = 's32[1]{0}', space=sflag, size = 0x4, scoped, tag = 'scoped memory for tpu_custom_call.1']
    #allocation6 [shape = 'u8[65536]{0}', space=vmem, size = 0x10000, scoped, tag = 'input window, operand 9, single buffered']
    #allocation7 [shape = 's32[1]{0}', space=sflag, size = 0x4, scoped, tag = 'scoped memory for tpu_custom_call.1']
    #allocation8 [shape = 'u8[262144]{0}', space=vmem, size = 0x40000, scoped, tag = 'output window, operand 0, single buffered']
    %16 = vsyncpa [#allocation4], 0
    %17 = vsyncpa [#allocation7], 0
    %18 = vsyncpa [#allocation5], 0
    // Predicated region
    $region2: #{tpu_custom_call.1} parent=1 // pred_check
      _
    $region3: #{tpu_custom_call.1} parent=1 // pred_check_branch
      %20 = sbr.rel (0) target = $region5
    $region4: #{tpu_custom_call.1} parent=1 // pred_region
      %s22 = ssub.s32 8192, 8192
      %23 = vsyncadd [#allocation4], %s22
      %s24 = sshll.u32 [#allocation3], 4
      %s25 = int_to_ptr.vmem [resolvable:$true] %s24
      %30 = dma.hbm_to_vmem [thread:$0]  %s0, 8192, %s25, [#allocation4], 128, 128, 8
    $region5: #{tpu_custom_call.1} parent=1 // pred_fallthru
      _
    // Predicated region
    $region6: #{tpu_custom_call.1} parent=1 // pred_check
      _
    $region7: #{tpu_custom_call.1} parent=1 // pred_check_branch
      %32 = sbr.rel (0) target = $region9
    $region8: #{tpu_custom_call.1} parent=1 // pred_region
      _
    $region9: #{tpu_custom_call.1} parent=1 // pred_fallthru
      _
    // Predicated region
    $region10: #{tpu_custom_call.1} parent=1 // pred_check
      _
    $region11: #{tpu_custom_call.1} parent=1 // pred_check_branch
      %34 = sbr.rel (0) target = $region13
    $region12: #{tpu_custom_call.1} parent=1 // pred_region
      _
    $region13: #{tpu_custom_call.1} parent=1 // pred_fallthru
      _
    // Predicated region
    $region14: #{tpu_custom_call.1} parent=1 // pred_check
      _
    $region15: #{tpu_custom_call.1} parent=1 // pred_check_branch
      %36 = sbr.rel (0) target = $region17
    $region16: #{tpu_custom_call.1} parent=1 // pred_region
      _
    $region17: #{tpu_custom_call.1} parent=1 // pred_fallthru
      _
    // Predicated region
    $region18: #{tpu_custom_call.1} parent=1 // pred_check
      _
    $region19: #{tpu_custom_call.1} parent=1 // pred_check_branch
      %38 = sbr.rel (0) target = $region21
    $region20: #{tpu_custom_call.1} parent=1 // pred_region
      _
    $region21: #{tpu_custom_call.1} parent=1 // pred_fallthru
      _
    // Predicated region
    $region22: #{tpu_custom_call.1} parent=1 // pred_check
      _
    $region23: #{tpu_custom_call.1} parent=1 // pred_check_branch
      %40 = sbr.rel (0) target = $region25
    $region24: #{tpu_custom_call.1} parent=1 // pred_region
      _
    $region25: #{tpu_custom_call.1} parent=1 // pred_fallthru
      _
    // Predicated region
    $region26: #{tpu_custom_call.1} parent=1 // pred_check
      _
    $region27: #{tpu_custom_call.1} parent=1 // pred_check_branch
      %42 = sbr.rel (0) target = $region29
    $region28: #{tpu_custom_call.1} parent=1 // pred_region
      _
    $region29: #{tpu_custom_call.1} parent=1 // pred_fallthru
      _
    // Predicated region
    $region30: #{tpu_custom_call.1} parent=1 // pred_check
      _
    $region31: #{tpu_custom_call.1} parent=1 // pred_check_branch
      %44 = sbr.rel (0) target = $region33
    $region32: #{tpu_custom_call.1} parent=1 // pred_region
      _
    $region33: #{tpu_custom_call.1} parent=1 // pred_fallthru
      _
    // Predicated region
    $region34: #{tpu_custom_call.1} parent=1 // pred_check
      _
    $region35: #{tpu_custom_call.1} parent=1 // pred_check_branch
      %46 = sbr.rel (0) target = $region37
    $region36: #{tpu_custom_call.1} parent=1 // pred_region
      _
    $region37: #{tpu_custom_call.1} parent=1 // pred_fallthru
      _
    // Predicated region
    $region38: #{tpu_custom_call.1} parent=1 // pred_check
      _
    $region39: #{tpu_custom_call.1} parent=1 // pred_check_branch
      %48 = sbr.rel (0) target = $region41
    $region40: #{tpu_custom_call.1} parent=1 // pred_region
      %s50 = ssub.s32 2048, 2048
      %51 = vsyncadd [#allocation7], %s50
      %s52 = sshll.u32 [#allocation6], 4
      %s53 = int_to_ptr.vmem [resolvable:$true] %s52
      %58 = dma.hbm_to_vmem [thread:$0]  %s9, 2048, %s53, [#allocation7], 128, 128, 8
    $region41: #{tpu_custom_call.1} parent=1 // pred_fallthru
      _
    // Predicated region
    $region42: #{tpu_custom_call.1} parent=1 // pred_check
      _
    $region43: #{tpu_custom_call.1} parent=1 // pred_check_branch
      %60 = sbr.rel (0) target = $region45
    $region44: #{tpu_custom_call.1} parent=1 // pred_region
      _
    $region45: #{tpu_custom_call.1} parent=1 // pred_fallthru
      _
    // Predicated region
    $region46: #{tpu_custom_call.1} parent=1 // pred_check
      _
    $region47: #{tpu_custom_call.1} parent=1 // pred_check_branch
      %62 = sbr.rel (0) target = $region49
    $region48: #{tpu_custom_call.1} parent=1 // pred_region
      %63 = dma.done [#allocation4], 8192
    $region49: #{tpu_custom_call.1} parent=1 // pred_fallthru
      _
    // Predicated region
    $region50: #{tpu_custom_call.1} parent=1 // pred_check
      _
    $region51: #{tpu_custom_call.1} parent=1 // pred_check_branch
      %65 = sbr.rel (0) target = $region53
    $region52: #{tpu_custom_call.1} parent=1 // pred_region
      %66 = dma.done [#allocation7], 2048
    $region53: #{tpu_custom_call.1} parent=1 // pred_fallthru
      _
    %v67 = vld [vmem:[#allocation3] sm:$0xff]
    %v68 = vld [vmem:[#allocation3 + $0x8] sm:$0xff]
    %v69 = vld [vmem:[#allocation3 + $0x10] sm:$0xff]
    %v70 = vld [vmem:[#allocation3 + $0x18] sm:$0xff]
    %v71 = vld [vmem:[#allocation3 + $0x20] sm:$0xff]
    %v72 = vld [vmem:[#allocation3 + $0x28] sm:$0xff]
    %v73 = vld [vmem:[#allocation3 + $0x30] sm:$0xff]
    %v74 = vld [vmem:[#allocation3 + $0x38] sm:$0xff]
    %v75 = vld [vmem:[#allocation3 + $0x40] sm:$0xff]
    %v76 = vld [vmem:[#allocation3 + $0x48] sm:$0xff]
    %v77 = vld [vmem:[#allocation3 + $0x50] sm:$0xff]
    %v78 = vld [vmem:[#allocation3 + $0x58] sm:$0xff]
    %v79 = vld [vmem:[#allocation3 + $0x60] sm:$0xff]
    %v80 = vld [vmem:[#allocation3 + $0x68] sm:$0xff]
    %v81 = vld [vmem:[#allocation3 + $0x70] sm:$0xff]
    %v82 = vld [vmem:[#allocation3 + $0x78] sm:$0xff]
    %v83 = vld [vmem:[#allocation3 + $0x80] sm:$0xff]
    %v84 = vld [vmem:[#allocation3 + $0x88] sm:$0xff]
    %v85 = vld [vmem:[#allocation3 + $0x90] sm:$0xff]
    %v86 = vld [vmem:[#allocation3 + $0x98] sm:$0xff]
    %v87 = vld [vmem:[#allocation3 + $0xa0] sm:$0xff]
    %v88 = vld [vmem:[#allocation3 + $0xa8] sm:$0xff]
    %v89 = vld [vmem:[#allocation3 + $0xb0] sm:$0xff]
    %v90 = vld [vmem:[#allocation3 + $0xb8] sm:$0xff]
    %v91 = vld [vmem:[#allocation3 + $0xc0] sm:$0xff]
    %v92 = vld [vmem:[#allocation3 + $0xc8] sm:$0xff]
    %v93 = vld [vmem:[#allocation3 + $0xd0] sm:$0xff]
    %v94 = vld [vmem:[#allocation3 + $0xd8] sm:$0xff]
    %v95 = vld [vmem:[#allocation3 + $0xe0] sm:$0xff]
    %v96 = vld [vmem:[#allocation3 + $0xe8] sm:$0xff]
    %v97 = vld [vmem:[#allocation3 + $0xf0] sm:$0xff]
    %v98 = vld [vmem:[#allocation3 + $0xf8] sm:$0xff]
    %v99 = vld [vmem:[#allocation3 + $0x100] sm:$0xff]
    %v100 = vld [vmem:[#allocation3 + $0x108] sm:$0xff]
    %v101 = vld [vmem:[#allocation3 + $0x110] sm:$0xff]
    %v102 = vld [vmem:[#allocation3 + $0x118] sm:$0xff]
    %v103 = vld [vmem:[#allocation3 + $0x120] sm:$0xff]
    %v104 = vld [vmem:[#allocation3 + $0x128] sm:$0xff]
    %v105 = vld [vmem:[#allocation3 + $0x130] sm:$0xff]
    %v106 = vld [vmem:[#allocation3 + $0x138] sm:$0xff]
    %v107 = vld [vmem:[#allocation3 + $0x140] sm:$0xff]
    %v108 = vld [vmem:[#allocation3 + $0x148] sm:$0xff]
    %v109 = vld [vmem:[#allocation3 + $0x150] sm:$0xff]
    %v110 = vld [vmem:[#allocation3 + $0x158] sm:$0xff]
    %v111 = vld [vmem:[#allocation3 + $0x160] sm:$0xff]
    %v112 = vld [vmem:[#allocation3 + $0x168] sm:$0xff]
    %v113 = vld [vmem:[#allocation3 + $0x170] sm:$0xff]
    %v114 = vld [vmem:[#allocation3 + $0x178] sm:$0xff]
    %v115 = vld [vmem:[#allocation3 + $0x180] sm:$0xff]
    %v116 = vld [vmem:[#allocation3 + $0x188] sm:$0xff]
    %v117 = vld [vmem:[#allocation3 + $0x190] sm:$0xff]
    %v118 = vld [vmem:[#allocation3 + $0x198] sm:$0xff]
    %v119 = vld [vmem:[#allocation3 + $0x1a0] sm:$0xff]
    %v120 = vld [vmem:[#allocation3 + $0x1a8] sm:$0xff]
    %v121 = vld [vmem:[#allocation3 + $0x1b0] sm:$0xff]
    %v122 = vld [vmem:[#allocation3 + $0x1b8] sm:$0xff]
    %v123 = vld [vmem:[#allocation3 + $0x1c0] sm:$0xff]
    %v124 = vld [vmem:[#allocation3 + $0x1c8] sm:$0xff]
    %v125 = vld [vmem:[#allocation3 + $0x1d0] sm:$0xff]
    %v126 = vld [vmem:[#allocation3 + $0x1d8] sm:$0xff]
    %v127 = vld [vmem:[#allocation3 + $0x1e0] sm:$0xff]
    %v128 = vld [vmem:[#allocation3 + $0x1e8] sm:$0xff]
    %v129 = vld [vmem:[#allocation3 + $0x1f0] sm:$0xff]
    %v130 = vld [vmem:[#allocation3 + $0x1f8] sm:$0xff]
    %v131 = vld [vmem:[%s1] sm:$0xff]
    %v132 = vld [vmem:[%s1 + $0x8] sm:$0xff]
    %v133 = vld [vmem:[%s1 + $0x10] sm:$0xff]
    %v134 = vld [vmem:[%s1 + $0x18] sm:$0xff]
    %v135 = vld [vmem:[%s1 + $0x20] sm:$0xff]
    %v136 = vld [vmem:[%s1 + $0x28] sm:$0xff]
    %v137 = vld [vmem:[%s1 + $0x30] sm:$0xff]
    %v138 = vld [vmem:[%s1 + $0x38] sm:$0xff]
    %v139 = vld [vmem:[%s1 + $0x40] sm:$0xff]
    %v140 = vld [vmem:[%s1 + $0x48] sm:$0xff]
    %v141 = vld [vmem:[%s1 + $0x50] sm:$0xff]
    %v142 = vld [vmem:[%s1 + $0x58] sm:$0xff]
    %v143 = vld [vmem:[%s1 + $0x60] sm:$0xff]
    %v144 = vld [vmem:[%s1 + $0x68] sm:$0xff]
    %v145 = vld [vmem:[%s1 + $0x70] sm:$0xff]
    %v146 = vld [vmem:[%s1 + $0x78] sm:$0xff]
    %v147 = vld [vmem:[%s2] sm:$0x1]
    %v149 = vlaneseq
    %v150 = vshrl.u32 %v149, 7
    %v151 = vsub.s32 0, %v150
    %v152 = vrot.slane %v147, %v151
    %154 = vmatprep.subr.mxu0 0.0
    %155 = vmatpush1.msra.mxu0 %v131
    %156 = vmatprep.subr.mxu0 0.0
    %157 = vmatpush1.msra.mxu0 %v132
    %158 = vmatprep.subr.mxu0 0.0
    %159 = vmatpush1.msra.mxu0 %v133
    %160 = vmatprep.subr.mxu0 0.0
    %161 = vmatpush1.msra.mxu0 %v134
    %162 = vmatprep.subr.mxu0 0.0
    %163 = vmatpush1.msra.mxu0 %v135
    %164 = vmatprep.subr.mxu0 0.0
    %165 = vmatpush1.msra.mxu0 %v136
    %166 = vmatprep.subr.mxu0 0.0
    %167 = vmatpush1.msra.mxu0 %v137
    %168 = vmatprep.subr.mxu0 0.0
    %169 = vmatpush1.msra.mxu0 %v138
    %170 = vmatprep.subr.mxu0 0.0
    %171 = vmatpush1.msra.mxu0 %v139
    %172 = vmatprep.subr.mxu0 0.0
    %173 = vmatpush1.msra.mxu0 %v140
    %174 = vmatprep.subr.mxu0 0.0
    %175 = vmatpush1.msra.mxu0 %v141
    %176 = vmatprep.subr.mxu0 0.0
    %177 = vmatpush1.msra.mxu0 %v142
    %178 = vmatprep.subr.mxu0 0.0
    %179 = vmatpush1.msra.mxu0 %v143
    %180 = vmatprep.subr.mxu0 0.0
    %181 = vmatpush1.msra.mxu0 %v144
    %182 = vmatprep.subr.mxu0 0.0
    %183 = vmatpush1.msra.mxu0 %v145
    %184 = vmatprep.subr.mxu0 0.0
    %185 = vmatpush1.msra.mxu0 %v146
    %186 = vmatprep.subr.mxu0 0.0
    %187 = vmatpush1.msra.mxu0 0.0
    %188 = vmatprep.subr.mxu0 0.0
    %189 = vmatpush1.msra.mxu0 0.0
    %190 = vmatprep.subr.mxu0 0.0
    %191 = vmatpush1.msra.mxu0 0.0
    %192 = vmatprep.subr.mxu0 0.0
    %193 = vmatpush1.msra.mxu0 0.0
    %194 = vmatprep.subr.mxu0 0.0
    %195 = vmatpush1.msra.mxu0 0.0
    %196 = vmatprep.subr.mxu0 0.0
    %197 = vmatpush1.msra.mxu0 0.0
    %198 = vmatprep.subr.mxu0 0.0
    %199 = vmatpush1.msra.mxu0 0.0
    %200 = vmatprep.subr.mxu0 0.0
    %201 = vmatpush1.msra.mxu0 0.0
    %202 = vmatprep.subr.mxu0 0.0
    %203 = vmatpush1.msra.mxu0 0.0
    %204 = vmatprep.subr.mxu0 0.0
    %205 = vmatpush1.msra.mxu0 0.0
    %206 = vmatprep.subr.mxu0 0.0
    %207 = vmatpush1.msra.mxu0 0.0
    %208 = vmatprep.subr.mxu0 0.0
    %209 = vmatpush1.msra.mxu0 0.0
    %210 = vmatprep.subr.mxu0 0.0
    %211 = vmatpush1.msra.mxu0 0.0
    %212 = vmatprep.subr.mxu0 0.0
    %213 = vmatpush1.msra.mxu0 0.0
    %214 = vmatprep.subr.mxu0 0.0
    %215 = vmatpush1.msra.mxu0 0.0
    %216 = vmatprep.subr.mxu0 0.0
    %217 = vmatpush1.msra.mxu0 0.0
    %218 = vmatprep.mubr.f32.mxu0 0.0
    %219 = vmatmul.mubr.f32.gmra.mrb[0].mxu0 %v67
    %v220 = vpop.f32.mrb[0].mxu0
    %v221 = vadd.f32 %v152, %v220
    %v222 = vpop.f32.mrb[0].mxu0
    %223 = vmatprep.mubr.f32.mxu0 0.0
    %224 = vmatmul.mubr.f32.gmra.mrb[0].mxu0 %v68
    %v225 = vpop.f32.mrb[0].mxu0
    %v226 = vadd.f32 %v152, %v225
    %v227 = vpop.f32.mrb[0].mxu0
    %228 = vmatprep.mubr.f32.mxu0 0.0
    %229 = vmatmul.mubr.f32.gmra.mrb[0].mxu0 %v69
    %v230 = vpop.f32.mrb[0].mxu0
    %v231 = vadd.f32 %v152, %v230
    %v232 = vpop.f32.mrb[0].mxu0
    %233 = vmatprep.mubr.f32.mxu0 0.0
    %234 = vmatmul.mubr.f32.gmra.mrb[0].mxu0 %v70
    %v235 = vpop.f32.mrb[0].mxu0
    %v236 = vadd.f32 %v152, %v235
    %v237 = vpop.f32.mrb[0].mxu0
    %238 = vmatprep.mubr.f32.mxu0 0.0
    %239 = vmatmul.mubr.f32.gmra.mrb[0].mxu0 %v71
    %v240 = vpop.f32.mrb[0].mxu0
    %v241 = vadd.f32 %v152, %v240
    %v242 = vpop.f32.mrb[0].mxu0
    %243 = vmatprep.mubr.f32.mxu0 0.0
    %244 = vmatmul.mubr.f32.gmra.mrb[0].mxu0 %v72
    %v245 = vpop.f32.mrb[0].mxu0
    %v246 = vadd.f32 %v152, %v245
    %v247 = vpop.f32.mrb[0].mxu0
    %248 = vmatprep.mubr.f32.mxu0 0.0
    %249 = vmatmul.mubr.f32.gmra.mrb[0].mxu0 %v73
    %v250 = vpop.f32.mrb[0].mxu0
    %v251 = vadd.f32 %v152, %v250
    %v252 = vpop.f32.mrb[0].mxu0
    %253 = vmatprep.mubr.f32.mxu0 0.0
    %254 = vmatmul.mubr.f32.gmra.mrb[0].mxu0 %v74
    %v255 = vpop.f32.mrb[0].mxu0
    %v256 = vadd.f32 %v152, %v255
    %v257 = vpop.f32.mrb[0].mxu0
    %258 = vmatprep.mubr.f32.mxu0 0.0
    %259 = vmatmul.mubr.f32.gmra.mrb[0].mxu0 %v75
    %v260 = vpop.f32.mrb[0].mxu0
    %v261 = vadd.f32 %v152, %v260
    %v262 = vpop.f32.mrb[0].mxu0
    %263 = vmatprep.mubr.f32.mxu0 0.0
    %264 = vmatmul.mubr.f32.gmra.mrb[0].mxu0 %v76
    %v265 = vpop.f32.mrb[0].mxu0
    %v266 = vadd.f32 %v152, %v265
    %v267 = vpop.f32.mrb[0].mxu0
    %268 = vmatprep.mubr.f32.mxu0 0.0
    %269 = vmatmul.mubr.f32.gmra.mrb[0].mxu0 %v77
    %v270 = vpop.f32.mrb[0].mxu0
    %v271 = vadd.f32 %v152, %v270
    %v272 = vpop.f32.mrb[0].mxu0
    %273 = vmatprep.mubr.f32.mxu0 0.0
    %274 = vmatmul.mubr.f32.gmra.mrb[0].mxu0 %v78
    %v275 = vpop.f32.mrb[0].mxu0
    %v276 = vadd.f32 %v152, %v275
    %v277 = vpop.f32.mrb[0].mxu0
    %278 = vmatprep.mubr.f32.mxu0 0.0
    %279 = vmatmul.mubr.f32.gmra.mrb[0].mxu0 %v79
    %v280 = vpop.f32.mrb[0].mxu0
    %v281 = vadd.f32 %v152, %v280
    %v282 = vpop.f32.mrb[0].mxu0
    %283 = vmatprep.mubr.f32.mxu0 0.0
    %284 = vmatmul.mubr.f32.gmra.mrb[0].mxu0 %v80
    %v285 = vpop.f32.mrb[0].mxu0
    %v286 = vadd.f32 %v152, %v285
    %v287 = vpop.f32.mrb[0].mxu0
    %288 = vmatprep.mubr.f32.mxu0 0.0
    %289 = vmatmul.mubr.f32.gmra.mrb[0].mxu0 %v81
    %v290 = vpop.f32.mrb[0].mxu0
    %v291 = vadd.f32 %v152, %v290
    %v292 = vpop.f32.mrb[0].mxu0
    %293 = vmatprep.mubr.f32.mxu0 0.0
    %294 = vmatmul.mubr.f32.gmra.mrb[0].mxu0 %v82
    %v295 = vpop.f32.mrb[0].mxu0
    %v296 = vadd.f32 %v152, %v295
    %v297 = vpop.f32.mrb[0].mxu0
    %298 = vmatprep.mubr.f32.mxu0 0.0
    %299 = vmatmul.mubr.f32.gmra.mrb[0].mxu0 %v83
    %v300 = vpop.f32.mrb[0].mxu0
    %v301 = vadd.f32 %v152, %v300
    %v302 = vpop.f32.mrb[0].mxu0
    %303 = vmatprep.mubr.f32.mxu0 0.0
    %304 = vmatmul.mubr.f32.gmra.mrb[0].mxu0 %v84
    %v305 = vpop.f32.mrb[0].mxu0
    %v306 = vadd.f32 %v152, %v305
    %v307 = vpop.f32.mrb[0].mxu0
    %308 = vmatprep.mubr.f32.mxu0 0.0
    %309 = vmatmul.mubr.f32.gmra.mrb[0].mxu0 %v85
    %v310 = vpop.f32.mrb[0].mxu0
    %v311 = vadd.f32 %v152, %v310
    %v312 = vpop.f32.mrb[0].mxu0
    %313 = vmatprep.mubr.f32.mxu0 0.0
    %314 = vmatmul.mubr.f32.gmra.mrb[0].mxu0 %v86
    %v315 = vpop.f32.mrb[0].mxu0
    %v316 = vadd.f32 %v152, %v315
    %v317 = vpop.f32.mrb[0].mxu0
    %318 = vmatprep.mubr.f32.mxu0 0.0
    %319 = vmatmul.mubr.f32.gmra.mrb[0].mxu0 %v87
    %v320 = vpop.f32.mrb[0].mxu0
    %v321 = vadd.f32 %v152, %v320
    %v322 = vpop.f32.mrb[0].mxu0
    %323 = vmatprep.mubr.f32.mxu0 0.0
    %324 = vmatmul.mubr.f32.gmra.mrb[0].mxu0 %v88
    %v325 = vpop.f32.mrb[0].mxu0
    %v326 = vadd.f32 %v152, %v325
    %v327 = vpop.f32.mrb[0].mxu0
    %328 = vmatprep.mubr.f32.mxu0 0.0
    %329 = vmatmul.mubr.f32.gmra.mrb[0].mxu0 %v89
    %v330 = vpop.f32.mrb[0].mxu0
    %v331 = vadd.f32 %v152, %v330
    %v332 = vpop.f32.mrb[0].mxu0
    %333 = vmatprep.mubr.f32.mxu0 0.0
    %334 = vmatmul.mubr.f32.gmra.mrb[0].mxu0 %v90
    %v335 = vpop.f32.mrb[0].mxu0
    %v336 = vadd.f32 %v152, %v335
    %v337 = vpop.f32.mrb[0].mxu0
    %338 = vmatprep.mubr.f32.mxu0 0.0
    %339 = vmatmul.mubr.f32.gmra.mrb[0].mxu0 %v91
    %v340 = vpop.f32.mrb[0].mxu0
    %v341 = vadd.f32 %v152, %v340
    %v342 = vpop.f32.mrb[0].mxu0
    %343 = vmatprep.mubr.f32.mxu0 0.0
    %344 = vmatmul.mubr.f32.gmra.mrb[0].mxu0 %v92
    %v345 = vpop.f32.mrb[0].mxu0
    %v346 = vadd.f32 %v152, %v345
    %v347 = vpop.f32.mrb[0].mxu0
    %348 = vmatprep.mubr.f32.mxu0 0.0
    %349 = vmatmul.mubr.f32.gmra.mrb[0].mxu0 %v93
    %v350 = vpop.f32.mrb[0].mxu0
    %v351 = vadd.f32 %v152, %v350
    %v352 = vpop.f32.mrb[0].mxu0
    %353 = vmatprep.mubr.f32.mxu0 0.0
    %354 = vmatmul.mubr.f32.gmra.mrb[0].mxu0 %v94
    %v355 = vpop.f32.mrb[0].mxu0
    %v356 = vadd.f32 %v152, %v355
    %v357 = vpop.f32.mrb[0].mxu0
    %358 = vmatprep.mubr.f32.mxu0 0.0
    %359 = vmatmul.mubr.f32.gmra.mrb[0].mxu0 %v95
    %v360 = vpop.f32.mrb[0].mxu0
    %v361 = vadd.f32 %v152, %v360
    %v362 = vpop.f32.mrb[0].mxu0
    %363 = vmatprep.mubr.f32.mxu0 0.0
    %364 = vmatmul.mubr.f32.gmra.mrb[0].mxu0 %v96
    %v365 = vpop.f32.mrb[0].mxu0
    %v366 = vadd.f32 %v152, %v365
    %v367 = vpop.f32.mrb[0].mxu0
    %368 = vmatprep.mubr.f32.mxu0 0.0
    %369 = vmatmul.mubr.f32.gmra.mrb[0].mxu0 %v97
    %v370 = vpop.f32.mrb[0].mxu0
    %v371 = vadd.f32 %v152, %v370
    %v372 = vpop.f32.mrb[0].mxu0
    %373 = vmatprep.mubr.f32.mxu0 0.0
    %374 = vmatmul.mubr.f32.gmra.mrb[0].mxu0 %v98
    %v375 = vpop.f32.mrb[0].mxu0
    %v376 = vadd.f32 %v152, %v375
    %v377 = vpop.f32.mrb[0].mxu0
    %378 = vmatprep.mubr.f32.mxu0 0.0
    %379 = vmatmul.mubr.f32.gmra.mrb[0].mxu0 %v99
    %v380 = vpop.f32.mrb[0].mxu0
    %v381 = vadd.f32 %v152, %v380
    %v382 = vpop.f32.mrb[0].mxu0
    %383 = vmatprep.mubr.f32.mxu0 0.0
    %384 = vmatmul.mubr.f32.gmra.mrb[0].mxu0 %v100
    %v385 = vpop.f32.mrb[0].mxu0
    %v386 = vadd.f32 %v152, %v385
    %v387 = vpop.f32.mrb[0].mxu0
    %388 = vmatprep.mubr.f32.mxu0 0.0
    %389 = vmatmul.mubr.f32.gmra.mrb[0].mxu0 %v101
    %v390 = vpop.f32.mrb[0].mxu0
    %v391 = vadd.f32 %v152, %v390
    %v392 = vpop.f32.mrb[0].mxu0
    %393 = vmatprep.mubr.f32.mxu0 0.0
    %394 = vmatmul.mubr.f32.gmra.mrb[0].mxu0 %v102
    %v395 = vpop.f32.mrb[0].mxu0
    %v396 = vadd.f32 %v152, %v395
    %v397 = vpop.f32.mrb[0].mxu0
    %398 = vmatprep.mubr.f32.mxu0 0.0
    %399 = vmatmul.mubr.f32.gmra.mrb[0].mxu0 %v103
    %v400 = vpop.f32.mrb[0].mxu0
    %v401 = vadd.f32 %v152, %v400
    %v402 = vpop.f32.mrb[0].mxu0
    %403 = vmatprep.mubr.f32.mxu0 0.0
    %404 = vmatmul.mubr.f32.gmra.mrb[0].mxu0 %v104
    %v405 = vpop.f32.mrb[0].mxu0
    %v406 = vadd.f32 %v152, %v405
    %v407 = vpop.f32.mrb[0].mxu0
    %408 = vmatprep.mubr.f32.mxu0 0.0
    %409 = vmatmul.mubr.f32.gmra.mrb[0].mxu0 %v105
    %v410 = vpop.f32.mrb[0].mxu0
    %v411 = vadd.f32 %v152, %v410
    %v412 = vpop.f32.mrb[0].mxu0
    %413 = vmatprep.mubr.f32.mxu0 0.0
    %414 = vmatmul.mubr.f32.gmra.mrb[0].mxu0 %v106
    %v415 = vpop.f32.mrb[0].mxu0
    %v416 = vadd.f32 %v152, %v415
    %v417 = vpop.f32.mrb[0].mxu0
    %418 = vmatprep.mubr.f32.mxu0 0.0
    %419 = vmatmul.mubr.f32.gmra.mrb[0].mxu0 %v107
    %v420 = vpop.f32.mrb[0].mxu0
    %v421 = vadd.f32 %v152, %v420
    %v422 = vpop.f32.mrb[0].mxu0
    %423 = vmatprep.mubr.f32.mxu0 0.0
    %424 = vmatmul.mubr.f32.gmra.mrb[0].mxu0 %v108
    %v425 = vpop.f32.mrb[0].mxu0
    %v426 = vadd.f32 %v152, %v425
    %v427 = vpop.f32.mrb[0].mxu0
    %428 = vmatprep.mubr.f32.mxu0 0.0
    %429 = vmatmul.mubr.f32.gmra.mrb[0].mxu0 %v109
    %v430 = vpop.f32.mrb[0].mxu0
    %v431 = vadd.f32 %v152, %v430
    %v432 = vpop.f32.mrb[0].mxu0
    %433 = vmatprep.mubr.f32.mxu0 0.0
    %434 = vmatmul.mubr.f32.gmra.mrb[0].mxu0 %v110
    %v435 = vpop.f32.mrb[0].mxu0
    %v436 = vadd.f32 %v152, %v435
    %v437 = vpop.f32.mrb[0].mxu0
    %438 = vmatprep.mubr.f32.mxu0 0.0
    %439 = vmatmul.mubr.f32.gmra.mrb[0].mxu0 %v111
    %v440 = vpop.f32.mrb[0].mxu0
    %v441 = vadd.f32 %v152, %v440
    %v442 = vpop.f32.mrb[0].mxu0
    %443 = vmatprep.mubr.f32.mxu0 0.0
    %444 = vmatmul.mubr.f32.gmra.mrb[0].mxu0 %v112
    %v445 = vpop.f32.mrb[0].mxu0
    %v446 = vadd.f32 %v152, %v445
    %v447 = vpop.f32.mrb[0].mxu0
    %448 = vmatprep.mubr.f32.mxu0 0.0
    %449 = vmatmul.mubr.f32.gmra.mrb[0].mxu0 %v113
    %v450 = vpop.f32.mrb[0].mxu0
    %v451 = vadd.f32 %v152, %v450
    %v452 = vpop.f32.mrb[0].mxu0
    %453 = vmatprep.mubr.f32.mxu0 0.0
    %454 = vmatmul.mubr.f32.gmra.mrb[0].mxu0 %v114
    %v455 = vpop.f32.mrb[0].mxu0
    %v456 = vadd.f32 %v152, %v455
    %v457 = vpop.f32.mrb[0].mxu0
    %458 = vmatprep.mubr.f32.mxu0 0.0
    %459 = vmatmul.mubr.f32.gmra.mrb[0].mxu0 %v115
    %v460 = vpop.f32.mrb[0].mxu0
    %v461 = vadd.f32 %v152, %v460
    %v462 = vpop.f32.mrb[0].mxu0
    %463 = vmatprep.mubr.f32.mxu0 0.0
    %464 = vmatmul.mubr.f32.gmra.mrb[0].mxu0 %v116
    %v465 = vpop.f32.mrb[0].mxu0
    %v466 = vadd.f32 %v152, %v465
    %v467 = vpop.f32.mrb[0].mxu0
    %468 = vmatprep.mubr.f32.mxu0 0.0
    %469 = vmatmul.mubr.f32.gmra.mrb[0].mxu0 %v117
    %v470 = vpop.f32.mrb[0].mxu0
    %v471 = vadd.f32 %v152, %v470
    %v472 = vpop.f32.mrb[0].mxu0
    %473 = vmatprep.mubr.f32.mxu0 0.0
    %474 = vmatmul.mubr.f32.gmra.mrb[0].mxu0 %v118
    %v475 = vpop.f32.mrb[0].mxu0
    %v476 = vadd.f32 %v152, %v475
    %v477 = vpop.f32.mrb[0].mxu0
    %478 = vmatprep.mubr.f32.mxu0 0.0
    %479 = vmatmul.mubr.f32.gmra.mrb[0].mxu0 %v119
    %v480 = vpop.f32.mrb[0].mxu0
    %v481 = vadd.f32 %v152, %v480
    %v482 = vpop.f32.mrb[0].mxu0
    %483 = vmatprep.mubr.f32.mxu0 0.0
    %484 = vmatmul.mubr.f32.gmra.mrb[0].mxu0 %v120
    %v485 = vpop.f32.mrb[0].mxu0
    %v486 = vadd.f32 %v152, %v485
    %v487 = vpop.f32.mrb[0].mxu0
    %488 = vmatprep.mubr.f32.mxu0 0.0
    %489 = vmatmul.mubr.f32.gmra.mrb[0].mxu0 %v121
    %v490 = vpop.f32.mrb[0].mxu0
    %v491 = vadd.f32 %v152, %v490
    %v492 = vpop.f32.mrb[0].mxu0
    %493 = vmatprep.mubr.f32.mxu0 0.0
    %494 = vmatmul.mubr.f32.gmra.mrb[0].mxu0 %v122
    %v495 = vpop.f32.mrb[0].mxu0
    %v496 = vadd.f32 %v152, %v495
    %v497 = vpop.f32.mrb[0].mxu0
    %498 = vmatprep.mubr.f32.mxu0 0.0
    %499 = vmatmul.mubr.f32.gmra.mrb[0].mxu0 %v123
    %v500 = vpop.f32.mrb[0].mxu0
    %v501 = vadd.f32 %v152, %v500
    %v502 = vpop.f32.mrb[0].mxu0
    %503 = vmatprep.mubr.f32.mxu0 0.0
    %504 = vmatmul.mubr.f32.gmra.mrb[0].mxu0 %v124
    %v505 = vpop.f32.mrb[0].mxu0
    %v506 = vadd.f32 %v152, %v505
    %v507 = vpop.f32.mrb[0].mxu0
    %508 = vmatprep.mubr.f32.mxu0 0.0
    %509 = vmatmul.mubr.f32.gmra.mrb[0].mxu0 %v125
    %v510 = vpop.f32.mrb[0].mxu0
    %v511 = vadd.f32 %v152, %v510
    %v512 = vpop.f32.mrb[0].mxu0
    %513 = vmatprep.mubr.f32.mxu0 0.0
    %514 = vmatmul.mubr.f32.gmra.mrb[0].mxu0 %v126
    %v515 = vpop.f32.mrb[0].mxu0
    %v516 = vadd.f32 %v152, %v515
    %v517 = vpop.f32.mrb[0].mxu0
    %518 = vmatprep.mubr.f32.mxu0 0.0
    %519 = vmatmul.mubr.f32.gmra.mrb[0].mxu0 %v127
    %v520 = vpop.f32.mrb[0].mxu0
    %v521 = vadd.f32 %v152, %v520
    %v522 = vpop.f32.mrb[0].mxu0
    %523 = vmatprep.mubr.f32.mxu0 0.0
    %524 = vmatmul.mubr.f32.gmra.mrb[0].mxu0 %v128
    %v525 = vpop.f32.mrb[0].mxu0
    %v526 = vadd.f32 %v152, %v525
    %v527 = vpop.f32.mrb[0].mxu0
    %528 = vmatprep.mubr.f32.mxu0 0.0
    %529 = vmatmul.mubr.f32.gmra.mrb[0].mxu0 %v129
    %v530 = vpop.f32.mrb[0].mxu0
    %v531 = vadd.f32 %v152, %v530
    %v532 = vpop.f32.mrb[0].mxu0
    %533 = vmatprep.mubr.f32.mxu0 0.0
    %534 = vmatmul.mubr.f32.gmra.mrb[0].mxu0 %v130
    %v535 = vpop.f32.mrb[0].mxu0
    %v536 = vadd.f32 %v152, %v535
    %v537 = vpop.f32.mrb[0].mxu0
    %538 = vdwg.mxu0
    %v539 = vxor.u32 %v221, 2147483648
    %v540 = vxor.u32 %v226, 2147483648
    %v541 = vxor.u32 %v231, 2147483648
    %v542 = vxor.u32 %v236, 2147483648
    %v543 = vxor.u32 %v241, 2147483648
    %v544 = vxor.u32 %v246, 2147483648
    %v545 = vxor.u32 %v251, 2147483648
    %v546 = vxor.u32 %v256, 2147483648
    %v547 = vxor.u32 %v261, 2147483648
    %v548 = vxor.u32 %v266, 2147483648
    %v549 = vxor.u32 %v271, 2147483648
    %v550 = vxor.u32 %v276, 2147483648
    %v551 = vxor.u32 %v281, 2147483648
    %v552 = vxor.u32 %v286, 2147483648
    %v553 = vxor.u32 %v291, 2147483648
    %v554 = vxor.u32 %v296, 2147483648
    %v555 = vxor.u32 %v301, 2147483648
    %v556 = vxor.u32 %v306, 2147483648
    %v557 = vxor.u32 %v311, 2147483648
    %v558 = vxor.u32 %v316, 2147483648
    %v559 = vxor.u32 %v321, 2147483648
    %v560 = vxor.u32 %v326, 2147483648
    %v561 = vxor.u32 %v331, 2147483648
    %v562 = vxor.u32 %v336, 2147483648
    %v563 = vxor.u32 %v341, 2147483648
    %v564 = vxor.u32 %v346, 2147483648
    %v565 = vxor.u32 %v351, 2147483648
    %v566 = vxor.u32 %v356, 2147483648
    %v567 = vxor.u32 %v361, 2147483648
    %v568 = vxor.u32 %v366, 2147483648
    %v569 = vxor.u32 %v371, 2147483648
    %v570 = vxor.u32 %v376, 2147483648
    %v571 = vxor.u32 %v381, 2147483648
    %v572 = vxor.u32 %v386, 2147483648
    %v573 = vxor.u32 %v391, 2147483648
    %v574 = vxor.u32 %v396, 2147483648
    %v575 = vxor.u32 %v401, 2147483648
    %v576 = vxor.u32 %v406, 2147483648
    %v577 = vxor.u32 %v411, 2147483648
    %v578 = vxor.u32 %v416, 2147483648
    %v579 = vxor.u32 %v421, 2147483648
    %v580 = vxor.u32 %v426, 2147483648
    %v581 = vxor.u32 %v431, 2147483648
    %v582 = vxor.u32 %v436, 2147483648
    %v583 = vxor.u32 %v441, 2147483648
    %v584 = vxor.u32 %v446, 2147483648
    %v585 = vxor.u32 %v451, 2147483648
    %v586 = vxor.u32 %v456, 2147483648
    %v587 = vxor.u32 %v461, 2147483648
    %v588 = vxor.u32 %v466, 2147483648
    %v589 = vxor.u32 %v471, 2147483648
    %v590 = vxor.u32 %v476, 2147483648
    %v591 = vxor.u32 %v481, 2147483648
    %v592 = vxor.u32 %v486, 2147483648
    %v593 = vxor.u32 %v491, 2147483648
    %v594 = vxor.u32 %v496, 2147483648
    %v595 = vxor.u32 %v501, 2147483648
    %v596 = vxor.u32 %v506, 2147483648
    %v597 = vxor.u32 %v511, 2147483648
    %v598 = vxor.u32 %v516, 2147483648
    %v599 = vxor.u32 %v521, 2147483648
    %v600 = vxor.u32 %v526, 2147483648
    %v601 = vxor.u32 %v531, 2147483648
    %v602 = vxor.u32 %v536, 2147483648
    %v603 = vmul.f32 %v539, 1.442695
    %v604 = vpow.pop %v603
    %v605 = vmul.f32 %v540, 1.442695
    %v606 = vpow.pop %v605
    %v607 = vmul.f32 %v541, 1.442695
    %v608 = vpow.pop %v607
    %v609 = vmul.f32 %v542, 1.442695
    %v610 = vpow.pop %v609
    %v611 = vmul.f32 %v543, 1.442695
    %v612 = vpow.pop %v611
    %v613 = vmul.f32 %v544, 1.442695
    %v614 = vpow.pop %v613
    %v615 = vmul.f32 %v545, 1.442695
    %v616 = vpow.pop %v615
    %v617 = vmul.f32 %v546, 1.442695
    %v618 = vpow.pop %v617
    %v619 = vmul.f32 %v547, 1.442695
    %v620 = vpow.pop %v619
    %v621 = vmul.f32 %v548, 1.442695
    %v622 = vpow.pop %v621
    %v623 = vmul.f32 %v549, 1.442695
    %v624 = vpow.pop %v623
    %v625 = vmul.f32 %v550, 1.442695
    %v626 = vpow.pop %v625
    %v627 = vmul.f32 %v551, 1.442695
    %v628 = vpow.pop %v627
    %v629 = vmul.f32 %v552, 1.442695
    %v630 = vpow.pop %v629
    %v631 = vmul.f32 %v553, 1.442695
    %v632 = vpow.pop %v631
    %v633 = vmul.f32 %v554, 1.442695
    %v634 = vpow.pop %v633
    %v635 = vmul.f32 %v555, 1.442695
    %v636 = vpow.pop %v635
    %v637 = vmul.f32 %v556, 1.442695
    %v638 = vpow.pop %v637
    %v639 = vmul.f32 %v557, 1.442695
    %v640 = vpow.pop %v639
    %v641 = vmul.f32 %v558, 1.442695
    %v642 = vpow.pop %v641
    %v643 = vmul.f32 %v559, 1.442695
    %v644 = vpow.pop %v643
    %v645 = vmul.f32 %v560, 1.442695
    %v646 = vpow.pop %v645
    %v647 = vmul.f32 %v561, 1.442695
    %v648 = vpow.pop %v647
    %v649 = vmul.f32 %v562, 1.442695
    %v650 = vpow.pop %v649
    %v651 = vmul.f32 %v563, 1.442695
    %v652 = vpow.pop %v651
    %v653 = vmul.f32 %v564, 1.442695
    %v654 = vpow.pop %v653
    %v655 = vmul.f32 %v565, 1.442695
    %v656 = vpow.pop %v655
    %v657 = vmul.f32 %v566, 1.442695
    %v658 = vpow.pop %v657
    %v659 = vmul.f32 %v567, 1.442695
    %v660 = vpow.pop %v659
    %v661 = vmul.f32 %v568, 1.442695
    %v662 = vpow.pop %v661
    %v663 = vmul.f32 %v569, 1.442695
    %v664 = vpow.pop %v663
    %v665 = vmul.f32 %v570, 1.442695
    %v666 = vpow.pop %v665
    %v667 = vmul.f32 %v571, 1.442695
    %v668 = vpow.pop %v667
    %v669 = vmul.f32 %v572, 1.442695
    %v670 = vpow.pop %v669
    %v671 = vmul.f32 %v573, 1.442695
    %v672 = vpow.pop %v671
    %v673 = vmul.f32 %v574, 1.442695
    %v674 = vpow.pop %v673
    %v675 = vmul.f32 %v575, 1.442695
    %v676 = vpow.pop %v675
    %v677 = vmul.f32 %v576, 1.442695
    %v678 = vpow.pop %v677
    %v679 = vmul.f32 %v577, 1.442695
    %v680 = vpow.pop %v679
    %v681 = vmul.f32 %v578, 1.442695
    %v682 = vpow.pop %v681
    %v683 = vmul.f32 %v579, 1.442695
    %v684 = vpow.pop %v683
    %v685 = vmul.f32 %v580, 1.442695
    %v686 = vpow.pop %v685
    %v687 = vmul.f32 %v581, 1.442695
    %v688 = vpow.pop %v687
    %v689 = vmul.f32 %v582, 1.442695
    %v690 = vpow.pop %v689
    %v691 = vmul.f32 %v583, 1.442695
    %v692 = vpow.pop %v691
    %v693 = vmul.f32 %v584, 1.442695
    %v694 = vpow.pop %v693
    %v695 = vmul.f32 %v585, 1.442695
    %v696 = vpow.pop %v695
    %v697 = vmul.f32 %v586, 1.442695
    %v698 = vpow.pop %v697
    %v699 = vmul.f32 %v587, 1.442695
    %v700 = vpow.pop %v699
    %v701 = vmul.f32 %v588, 1.442695
    %v702 = vpow.pop %v701
    %v703 = vmul.f32 %v589, 1.442695
    %v704 = vpow.pop %v703
    %v705 = vmul.f32 %v590, 1.442695
    %v706 = vpow.pop %v705
    %v707 = vmul.f32 %v591, 1.442695
    %v708 = vpow.pop %v707
    %v709 = vmul.f32 %v592, 1.442695
    %v710 = vpow.pop %v709
    %v711 = vmul.f32 %v593, 1.442695
    %v712 = vpow.pop %v711
    %v713 = vmul.f32 %v594, 1.442695
    %v714 = vpow.pop %v713
    %v715 = vmul.f32 %v595, 1.442695
    %v716 = vpow.pop %v715
    %v717 = vmul.f32 %v596, 1.442695
    %v718 = vpow.pop %v717
    %v719 = vmul.f32 %v597, 1.442695
    %v720 = vpow.pop %v719
    %v721 = vmul.f32 %v598, 1.442695
    %v722 = vpow.pop %v721
    %v723 = vmul.f32 %v599, 1.442695
    %v724 = vpow.pop %v723
    %v725 = vmul.f32 %v600, 1.442695
    %v726 = vpow.pop %v725
    %v727 = vmul.f32 %v601, 1.442695
    %v728 = vpow.pop %v727
    %v729 = vmul.f32 %v602, 1.442695
    %v730 = vpow.pop %v729
    %v731 = vadd.f32 %v604, 1.0
    %v732 = vadd.f32 %v606, 1.0
    %v733 = vadd.f32 %v608, 1.0
    %v734 = vadd.f32 %v610, 1.0
    %v735 = vadd.f32 %v612, 1.0
    %v736 = vadd.f32 %v614, 1.0
    %v737 = vadd.f32 %v616, 1.0
    %v738 = vadd.f32 %v618, 1.0
    %v739 = vadd.f32 %v620, 1.0
    %v740 = vadd.f32 %v622, 1.0
    %v741 = vadd.f32 %v624, 1.0
    %v742 = vadd.f32 %v626, 1.0
    %v743 = vadd.f32 %v628, 1.0
    %v744 = vadd.f32 %v630, 1.0
    %v745 = vadd.f32 %v632, 1.0
    %v746 = vadd.f32 %v634, 1.0
    %v747 = vadd.f32 %v636, 1.0
    %v748 = vadd.f32 %v638, 1.0
    %v749 = vadd.f32 %v640, 1.0
    %v750 = vadd.f32 %v642, 1.0
    %v751 = vadd.f32 %v644, 1.0
    %v752 = vadd.f32 %v646, 1.0
    %v753 = vadd.f32 %v648, 1.0
    %v754 = vadd.f32 %v650, 1.0
    %v755 = vadd.f32 %v652, 1.0
    %v756 = vadd.f32 %v654, 1.0
    %v757 = vadd.f32 %v656, 1.0
    %v758 = vadd.f32 %v658, 1.0
    %v759 = vadd.f32 %v660, 1.0
    %v760 = vadd.f32 %v662, 1.0
    %v761 = vadd.f32 %v664, 1.0
    %v762 = vadd.f32 %v666, 1.0
    %v763 = vadd.f32 %v668, 1.0
    %v764 = vadd.f32 %v670, 1.0
    %v765 = vadd.f32 %v672, 1.0
    %v766 = vadd.f32 %v674, 1.0
    %v767 = vadd.f32 %v676, 1.0
    %v768 = vadd.f32 %v678, 1.0
    %v769 = vadd.f32 %v680, 1.0
    %v770 = vadd.f32 %v682, 1.0
    %v771 = vadd.f32 %v684, 1.0
    %v772 = vadd.f32 %v686, 1.0
    %v773 = vadd.f32 %v688, 1.0
    %v774 = vadd.f32 %v690, 1.0
    %v775 = vadd.f32 %v692, 1.0
    %v776 = vadd.f32 %v694, 1.0
    %v777 = vadd.f32 %v696, 1.0
    %v778 = vadd.f32 %v698, 1.0
    %v779 = vadd.f32 %v700, 1.0
    %v780 = vadd.f32 %v702, 1.0
    %v781 = vadd.f32 %v704, 1.0
    %v782 = vadd.f32 %v706, 1.0
    %v783 = vadd.f32 %v708, 1.0
    %v784 = vadd.f32 %v710, 1.0
    %v785 = vadd.f32 %v712, 1.0
    %v786 = vadd.f32 %v714, 1.0
    %v787 = vadd.f32 %v716, 1.0
    %v788 = vadd.f32 %v718, 1.0
    %v789 = vadd.f32 %v720, 1.0
    %v790 = vadd.f32 %v722, 1.0
    %v791 = vadd.f32 %v724, 1.0
    %v792 = vadd.f32 %v726, 1.0
    %v793 = vadd.f32 %v728, 1.0
    %v794 = vadd.f32 %v730, 1.0
    %v795 = vrcp.pop %v731
    %v796 = vmul.f32 1.0, %v795
    %v797 = vrcp.pop %v732
    %v798 = vmul.f32 1.0, %v797
    %v799 = vrcp.pop %v733
    %v800 = vmul.f32 1.0, %v799
    %v801 = vrcp.pop %v734
    %v802 = vmul.f32 1.0, %v801
    %v803 = vrcp.pop %v735
    %v804 = vmul.f32 1.0, %v803
    %v805 = vrcp.pop %v736
    %v806 = vmul.f32 1.0, %v805
    %v807 = vrcp.pop %v737
    %v808 = vmul.f32 1.0, %v807
    %v809 = vrcp.pop %v738
    %v810 = vmul.f32 1.0, %v809
    %v811 = vrcp.pop %v739
    %v812 = vmul.f32 1.0, %v811
    %v813 = vrcp.pop %v740
    %v814 = vmul.f32 1.0, %v813
    %v815 = vrcp.pop %v741
    %v816 = vmul.f32 1.0, %v815
    %v817 = vrcp.pop %v742
    %v818 = vmul.f32 1.0, %v817
    %v819 = vrcp.pop %v743
    %v820 = vmul.f32 1.0, %v819
    %v821 = vrcp.pop %v744
    %v822 = vmul.f32 1.0, %v821
    %v823 = vrcp.pop %v745
    %v824 = vmul.f32 1.0, %v823
    %v825 = vrcp.pop %v746
    %v826 = vmul.f32 1.0, %v825
    %v827 = vrcp.pop %v747
    %v828 = vmul.f32 1.0, %v827
    %v829 = vrcp.pop %v748
    %v830 = vmul.f32 1.0, %v829
    %v831 = vrcp.pop %v749
    %v832 = vmul.f32 1.0, %v831
    %v833 = vrcp.pop %v750
    %v834 = vmul.f32 1.0, %v833
    %v835 = vrcp.pop %v751
    %v836 = vmul.f32 1.0, %v835
    %v837 = vrcp.pop %v752
    %v838 = vmul.f32 1.0, %v837
    %v839 = vrcp.pop %v753
    %v840 = vmul.f32 1.0, %v839
    %v841 = vrcp.pop %v754
    %v842 = vmul.f32 1.0, %v841
    %v843 = vrcp.pop %v755
    %v844 = vmul.f32 1.0, %v843
    %v845 = vrcp.pop %v756
    %v846 = vmul.f32 1.0, %v845
    %v847 = vrcp.pop %v757
    %v848 = vmul.f32 1.0, %v847
    %v849 = vrcp.pop %v758
    %v850 = vmul.f32 1.0, %v849
    %v851 = vrcp.pop %v759
    %v852 = vmul.f32 1.0, %v851
    %v853 = vrcp.pop %v760
    %v854 = vmul.f32 1.0, %v853
    %v855 = vrcp.pop %v761
    %v856 = vmul.f32 1.0, %v855
    %v857 = vrcp.pop %v762
    %v858 = vmul.f32 1.0, %v857
    %v859 = vrcp.pop %v763
    %v860 = vmul.f32 1.0, %v859
    %v861 = vrcp.pop %v764
    %v862 = vmul.f32 1.0, %v861
    %v863 = vrcp.pop %v765
    %v864 = vmul.f32 1.0, %v863
    %v865 = vrcp.pop %v766
    %v866 = vmul.f32 1.0, %v865
    %v867 = vrcp.pop %v767
    %v868 = vmul.f32 1.0, %v867
    %v869 = vrcp.pop %v768
    %v870 = vmul.f32 1.0, %v869
    %v871 = vrcp.pop %v769
    %v872 = vmul.f32 1.0, %v871
    %v873 = vrcp.pop %v770
    %v874 = vmul.f32 1.0, %v873
    %v875 = vrcp.pop %v771
    %v876 = vmul.f32 1.0, %v875
    %v877 = vrcp.pop %v772
    %v878 = vmul.f32 1.0, %v877
    %v879 = vrcp.pop %v773
    %v880 = vmul.f32 1.0, %v879
    %v881 = vrcp.pop %v774
    %v882 = vmul.f32 1.0, %v881
    %v883 = vrcp.pop %v775
    %v884 = vmul.f32 1.0, %v883
    %v885 = vrcp.pop %v776
    %v886 = vmul.f32 1.0, %v885
    %v887 = vrcp.pop %v777
    %v888 = vmul.f32 1.0, %v887
    %v889 = vrcp.pop %v778
    %v890 = vmul.f32 1.0, %v889
    %v891 = vrcp.pop %v779
    %v892 = vmul.f32 1.0, %v891
    %v893 = vrcp.pop %v780
    %v894 = vmul.f32 1.0, %v893
    %v895 = vrcp.pop %v781
    %v896 = vmul.f32 1.0, %v895
    %v897 = vrcp.pop %v782
    %v898 = vmul.f32 1.0, %v897
    %v899 = vrcp.pop %v783
    %v900 = vmul.f32 1.0, %v899
    %v901 = vrcp.pop %v784
    %v902 = vmul.f32 1.0, %v901
    %v903 = vrcp.pop %v785
    %v904 = vmul.f32 1.0, %v903
    %v905 = vrcp.pop %v786
    %v906 = vmul.f32 1.0, %v905
    %v907 = vrcp.pop %v787
    %v908 = vmul.f32 1.0, %v907
    %v909 = vrcp.pop %v788
    %v910 = vmul.f32 1.0, %v909
    %v911 = vrcp.pop %v789
    %v912 = vmul.f32 1.0, %v911
    %v913 = vrcp.pop %v790
    %v914 = vmul.f32 1.0, %v913
    %v915 = vrcp.pop %v791
    %v916 = vmul.f32 1.0, %v915
    %v917 = vrcp.pop %v792
    %v918 = vmul.f32 1.0, %v917
    %v919 = vrcp.pop %v793
    %v920 = vmul.f32 1.0, %v919
    %v921 = vrcp.pop %v794
    %v922 = vmul.f32 1.0, %v921
    %v923 = vmul.f32 %v221, %v796
    %v924 = vmul.f32 %v226, %v798
    %v925 = vmul.f32 %v231, %v800
    %v926 = vmul.f32 %v236, %v802
    %v927 = vmul.f32 %v241, %v804
    %v928 = vmul.f32 %v246, %v806
    %v929 = vmul.f32 %v251, %v808
    %v930 = vmul.f32 %v256, %v810
    %v931 = vmul.f32 %v261, %v812
    %v932 = vmul.f32 %v266, %v814
    %v933 = vmul.f32 %v271, %v816
    %v934 = vmul.f32 %v276, %v818
    %v935 = vmul.f32 %v281, %v820
    %v936 = vmul.f32 %v286, %v822
    %v937 = vmul.f32 %v291, %v824
    %v938 = vmul.f32 %v296, %v826
    %v939 = vmul.f32 %v301, %v828
    %v940 = vmul.f32 %v306, %v830
    %v941 = vmul.f32 %v311, %v832
    %v942 = vmul.f32 %v316, %v834
    %v943 = vmul.f32 %v321, %v836
    %v944 = vmul.f32 %v326, %v838
    %v945 = vmul.f32 %v331, %v840
    %v946 = vmul.f32 %v336, %v842
    %v947 = vmul.f32 %v341, %v844
    %v948 = vmul.f32 %v346, %v846
    %v949 = vmul.f32 %v351, %v848
    %v950 = vmul.f32 %v356, %v850
    %v951 = vmul.f32 %v361, %v852
    %v952 = vmul.f32 %v366, %v854
    %v953 = vmul.f32 %v371, %v856
    %v954 = vmul.f32 %v376, %v858
    %v955 = vmul.f32 %v381, %v860
    %v956 = vmul.f32 %v386, %v862
    %v957 = vmul.f32 %v391, %v864
    %v958 = vmul.f32 %v396, %v866
    %v959 = vmul.f32 %v401, %v868
    %v960 = vmul.f32 %v406, %v870
    %v961 = vmul.f32 %v411, %v872
    %v962 = vmul.f32 %v416, %v874
    %v963 = vmul.f32 %v421, %v876
    %v964 = vmul.f32 %v426, %v878
    %v965 = vmul.f32 %v431, %v880
    %v966 = vmul.f32 %v436, %v882
    %v967 = vmul.f32 %v441, %v884
    %v968 = vmul.f32 %v446, %v886
    %v969 = vmul.f32 %v451, %v888
    %v970 = vmul.f32 %v456, %v890
    %v971 = vmul.f32 %v461, %v892
    %v972 = vmul.f32 %v466, %v894
    %v973 = vmul.f32 %v471, %v896
    %v974 = vmul.f32 %v476, %v898
    %v975 = vmul.f32 %v481, %v900
    %v976 = vmul.f32 %v486, %v902
    %v977 = vmul.f32 %v491, %v904
    %v978 = vmul.f32 %v496, %v906
    %v979 = vmul.f32 %v501, %v908
    %v980 = vmul.f32 %v506, %v910
    %v981 = vmul.f32 %v511, %v912
    %v982 = vmul.f32 %v516, %v914
    %v983 = vmul.f32 %v521, %v916
    %v984 = vmul.f32 %v526, %v918
    %v985 = vmul.f32 %v531, %v920
    %v986 = vmul.f32 %v536, %v922
    %987 = vst [vmem:[#allocation2] sm:$0xff] 0.0
    %988 = vst [vmem:[#allocation2 + $0x8] sm:$0xff] 0.0
    %989 = vst [vmem:[#allocation2 + $0x10] sm:$0x3] 0.0
    %990 = vst [vmem:[#allocation2 + $0x1b0] sm:$0xff] 0.0
    %991 = vst [vmem:[#allocation2 + $0x1b8] sm:$0xff] 0.0
    %992 = vst [vmem:[#allocation2 + $0x1c0] sm:$0x3] 0.0
    %s993 = scalar_lea.vmem [#allocation2], 408
    %994 = vst [vmem:[%s993] sm:$0xff] 0.0
    %995 = vst [vmem:[%s993 + $0x8] sm:$0xff] 0.0
    %996 = vst [vmem:[%s993 + $0x10] sm:$0x3] 0.0
    %997 = vst [vmem:[%s993 + $0x1b0] sm:$0xff] 0.0
    %998 = vst [vmem:[%s993 + $0x1b8] sm:$0xff] 0.0
    %999 = vst [vmem:[%s993 + $0x1c0] sm:$0x3] 0.0
    %1000 = vst [vmem:[#allocation2] sm:$0x1] 0.0
    %1001 = vst [vmem:[#allocation2 + $0x18] sm:$0x1] 0.0
    %1002 = vst [vmem:[#allocation2 + $0x30] sm:$0x1] 0.0
    %1003 = vst [vmem:[#allocation2 + $0x48] sm:$0x1] 0.0
    %1004 = vst [vmem:[#allocation2 + $0x60] sm:$0x1] 0.0
    %1005 = vst [vmem:[#allocation2 + $0x78] sm:$0x1] 0.0
    %1006 = vst [vmem:[#allocation2 + $0x90] sm:$0x1] 0.0
    %1007 = vst [vmem:[#allocation2 + $0xa8] sm:$0x1] 0.0
    %1008 = vst [vmem:[#allocation2 + $0xc0] sm:$0x1] 0.0
    %1009 = vst [vmem:[#allocation2 + $0xd8] sm:$0x1] 0.0
    %1010 = vst [vmem:[#allocation2 + $0xf0] sm:$0x1] 0.0
    %1011 = vst [vmem:[#allocation2 + $0x108] sm:$0x1] 0.0
    %1012 = vst [vmem:[#allocation2 + $0x120] sm:$0x1] 0.0
    %1013 = vst [vmem:[#allocation2 + $0x138] sm:$0x1] 0.0
    %1014 = vst [vmem:[#allocation2 + $0x150] sm:$0x1] 0.0
    %1015 = vst [vmem:[#allocation2 + $0x168] sm:$0x1] 0.0
    %1016 = vst [vmem:[#allocation2 + $0x180] sm:$0x1] 0.0
    %1017 = vst [vmem:[#allocation2 + $0x198] sm:$0x1] 0.0
    %1018 = vst [vmem:[#allocation2 + $0x1b0] sm:$0x1] 0.0
    %1019 = vst [vmem:[#allocation2 + $0x1c8] sm:$0x1] 0.0
    %1020 = vst [vmem:[#allocation2 + $0x1e0] sm:$0x1] 0.0
    %1021 = vst [vmem:[#allocation2 + $0x1f8] sm:$0x1] 0.0
    %1022 = vst [vmem:[#allocation2 + $0x210] sm:$0x1] 0.0
    %1023 = vst [vmem:[#allocation2 + $0x228] sm:$0x1] 0.0
    %1024 = vst [vmem:[#allocation2 + $0x240] sm:$0x1] 0.0
    %1025 = vst [vmem:[#allocation2 + $0x258] sm:$0x1] 0.0
    %1026 = vst [vmem:[#allocation2 + $0x270] sm:$0x1] 0.0
    %1027 = vst [vmem:[#allocation2 + $0x288] sm:$0x1] 0.0
    %1028 = vst [vmem:[#allocation2 + $0x2a0] sm:$0x1] 0.0
    %1029 = vst [vmem:[#allocation2 + $0x2b8] sm:$0x1] 0.0
    %1030 = vst [vmem:[#allocation2 + $0x2d0] sm:$0x1] 0.0
    %1031 = vst [vmem:[#allocation2 + $0x2e8] sm:$0x1] 0.0
    %1032 = vst [vmem:[#allocation2 + $0x300] sm:$0x1] 0.0
    %1033 = vst [vmem:[#allocation2 + $0x318] sm:$0x1] 0.0
    %1034 = vst [vmem:[#allocation2 + $0x330] sm:$0x1] 0.0
    %1035 = vst [vmem:[#allocation2 + $0x348] sm:$0x1] 0.0
    %1036 = vst [vmem:[#allocation2 + $0x11] sm:$0x1] 0.0
    %1037 = vst [vmem:[#allocation2 + $0x29] sm:$0x1] 0.0
    %1038 = vst [vmem:[#allocation2 + $0x41] sm:$0x1] 0.0
    %1039 = vst [vmem:[#allocation2 + $0x59] sm:$0x1] 0.0
    %1040 = vst [vmem:[#allocation2 + $0x71] sm:$0x1] 0.0
    %1041 = vst [vmem:[#allocation2 + $0x89] sm:$0x1] 0.0
    %1042 = vst [vmem:[#allocation2 + $0xa1] sm:$0x1] 0.0
    %1043 = vst [vmem:[#allocation2 + $0xb9] sm:$0x1] 0.0
    %1044 = vst [vmem:[#allocation2 + $0xd1] sm:$0x1] 0.0
    %1045 = vst [vmem:[#allocation2 + $0xe9] sm:$0x1] 0.0
    %1046 = vst [vmem:[#allocation2 + $0x101] sm:$0x1] 0.0
    %1047 = vst [vmem:[#allocation2 + $0x119] sm:$0x1] 0.0
    %1048 = vst [vmem:[#allocation2 + $0x131] sm:$0x1] 0.0
    %1049 = vst [vmem:[#allocation2 + $0x149] sm:$0x1] 0.0
    %1050 = vst [vmem:[#allocation2 + $0x161] sm:$0x1] 0.0
    %1051 = vst [vmem:[#allocation2 + $0x179] sm:$0x1] 0.0
    %1052 = vst [vmem:[#allocation2 + $0x191] sm:$0x1] 0.0
    %1053 = vst [vmem:[#allocation2 + $0x1a9] sm:$0x1] 0.0
    %1054 = vst [vmem:[#allocation2 + $0x1c1] sm:$0x1] 0.0
    %1055 = vst [vmem:[#allocation2 + $0x1d9] sm:$0x1] 0.0
    %1056 = vst [vmem:[#allocation2 + $0x1f1] sm:$0x1] 0.0
    %1057 = vst [vmem:[#allocation2 + $0x209] sm:$0x1] 0.0
    %1058 = vst [vmem:[#allocation2 + $0x221] sm:$0x1] 0.0
    %1059 = vst [vmem:[#allocation2 + $0x239] sm:$0x1] 0.0
    %1060 = vst [vmem:[#allocation2 + $0x251] sm:$0x1] 0.0
    %1061 = vst [vmem:[#allocation2 + $0x269] sm:$0x1] 0.0
    %1062 = vst [vmem:[#allocation2 + $0x281] sm:$0x1] 0.0
    %1063 = vst [vmem:[#allocation2 + $0x299] sm:$0x1] 0.0
    %1064 = vst [vmem:[#allocation2 + $0x2b1] sm:$0x1] 0.0
    %1065 = vst [vmem:[#allocation2 + $0x2c9] sm:$0x1] 0.0
    %1066 = vst [vmem:[#allocation2 + $0x2e1] sm:$0x1] 0.0
    %1067 = vst [vmem:[#allocation2 + $0x2f9] sm:$0x1] 0.0
    %1068 = vst [vmem:[#allocation2 + $0x311] sm:$0x1] 0.0
    %1069 = vst [vmem:[#allocation2 + $0x329] sm:$0x1] 0.0
    %1070 = vst [vmem:[#allocation2 + $0x341] sm:$0x1] 0.0
    %1071 = vst [vmem:[#allocation2 + $0x359] sm:$0x1] 0.0
    %s1072 = scalar_lea.vmem [#allocation2], 24
    %1073 = vst [vmem:[%s1072 + $0x1] sm:$0xff] %v923
    %1074 = vst [vmem:[%s1072 + $0x9] sm:$0xff] %v924
    %1075 = vst [vmem:[%s1072 + $0x19] sm:$0xff] %v925
    %1076 = vst [vmem:[%s1072 + $0x21] sm:$0xff] %v926
    %1077 = vst [vmem:[%s1072 + $0x31] sm:$0xff] %v927
    %1078 = vst [vmem:[%s1072 + $0x39] sm:$0xff] %v928
    %1079 = vst [vmem:[%s1072 + $0x49] sm:$0xff] %v929
    %1080 = vst [vmem:[%s1072 + $0x51] sm:$0xff] %v930
    %1081 = vst [vmem:[%s1072 + $0x61] sm:$0xff] %v931
    %1082 = vst [vmem:[%s1072 + $0x69] sm:$0xff] %v932
    %1083 = vst [vmem:[%s1072 + $0x79] sm:$0xff] %v933
    %1084 = vst [vmem:[%s1072 + $0x81] sm:$0xff] %v934
    %1085 = vst [vmem:[%s1072 + $0x91] sm:$0xff] %v935
    %1086 = vst [vmem:[%s1072 + $0x99] sm:$0xff] %v936
    %1087 = vst [vmem:[%s1072 + $0xa9] sm:$0xff] %v937
    %1088 = vst [vmem:[%s1072 + $0xb1] sm:$0xff] %v938
    %1089 = vst [vmem:[%s1072 + $0xc1] sm:$0xff] %v939
    %1090 = vst [vmem:[%s1072 + $0xc9] sm:$0xff] %v940
    %1091 = vst [vmem:[%s1072 + $0xd9] sm:$0xff] %v941
    %1092 = vst [vmem:[%s1072 + $0xe1] sm:$0xff] %v942
    %1093 = vst [vmem:[%s1072 + $0xf1] sm:$0xff] %v943
    %1094 = vst [vmem:[%s1072 + $0xf9] sm:$0xff] %v944
    %1095 = vst [vmem:[%s1072 + $0x109] sm:$0xff] %v945
    %1096 = vst [vmem:[%s1072 + $0x111] sm:$0xff] %v946
    %1097 = vst [vmem:[%s1072 + $0x121] sm:$0xff] %v947
    %1098 = vst [vmem:[%s1072 + $0x129] sm:$0xff] %v948
    %1099 = vst [vmem:[%s1072 + $0x139] sm:$0xff] %v949
    %1100 = vst [vmem:[%s1072 + $0x141] sm:$0xff] %v950
    %1101 = vst [vmem:[%s1072 + $0x151] sm:$0xff] %v951
    %1102 = vst [vmem:[%s1072 + $0x159] sm:$0xff] %v952
    %1103 = vst [vmem:[%s1072 + $0x169] sm:$0xff] %v953
    %1104 = vst [vmem:[%s1072 + $0x171] sm:$0xff] %v954
    %1105 = vst [vmem:[%s1072 + $0x1b1] sm:$0xff] %v955
    %1106 = vst [vmem:[%s1072 + $0x1b9] sm:$0xff] %v956
    %1107 = vst [vmem:[%s1072 + $0x1c9] sm:$0xff] %v957
    %1108 = vst [vmem:[%s1072 + $0x1d1] sm:$0xff] %v958
    %1109 = vst [vmem:[%s1072 + $0x1e1] sm:$0xff] %v959
    %1110 = vst [vmem:[%s1072 + $0x1e9] sm:$0xff] %v960
    %1111 = vst [vmem:[%s1072 + $0x1f9] sm:$0xff] %v961
    %1112 = vst [vmem:[%s1072 + $0x201] sm:$0xff] %v962
    %1113 = vst [vmem:[%s1072 + $0x211] sm:$0xff] %v963
    %1114 = vst [vmem:[%s1072 + $0x219] sm:$0xff] %v964
    %1115 = vst [vmem:[%s1072 + $0x229] sm:$0xff] %v965
    %1116 = vst [vmem:[%s1072 + $0x231] sm:$0xff] %v966
    %1117 = vst [vmem:[%s1072 + $0x241] sm:$0xff] %v967
    %1118 = vst [vmem:[%s1072 + $0x249] sm:$0xff] %v968
    %1119 = vst [vmem:[%s1072 + $0x259] sm:$0xff] %v969
    %1120 = vst [vmem:[%s1072 + $0x261] sm:$0xff] %v970
    %1121 = vst [vmem:[%s1072 + $0x271] sm:$0xff] %v971
    %1122 = vst [vmem:[%s1072 + $0x279] sm:$0xff] %v972
    %1123 = vst [vmem:[%s1072 + $0x289] sm:$0xff] %v973
    %1124 = vst [vmem:[%s1072 + $0x291] sm:$0xff] %v974
    %1125 = vst [vmem:[%s1072 + $0x2a1] sm:$0xff] %v975
    %1126 = vst [vmem:[%s1072 + $0x2a9] sm:$0xff] %v976
    %1127 = vst [vmem:[%s1072 + $0x2b9] sm:$0xff] %v977
    %1128 = vst [vmem:[%s1072 + $0x2c1] sm:$0xff] %v978
    %1129 = vst [vmem:[%s1072 + $0x2d1] sm:$0xff] %v979
    %1130 = vst [vmem:[%s1072 + $0x2d9] sm:$0xff] %v980
    %1131 = vst [vmem:[%s1072 + $0x2e9] sm:$0xff] %v981
    %1132 = vst [vmem:[%s1072 + $0x2f1] sm:$0xff] %v982
    %1133 = vst [vmem:[%s1072 + $0x301] sm:$0xff] %v983
    %1134 = vst [vmem:[%s1072 + $0x309] sm:$0xff] %v984
    %1135 = vst [vmem:[%s1072 + $0x319] sm:$0xff] %v985
    %1136 = vst [vmem:[%s1072 + $0x321] sm:$0xff] %v986
    %v1137 = vld [vmem:[#allocation2] sm:$0xff]
    %v1138 = vld [vmem:[#allocation2 + $0x8] sm:$0xff]
    %v1139 = vld [vmem:[#allocation2 + $0x18] sm:$0xff]
    %v1140 = vld [vmem:[#allocation2 + $0x20] sm:$0xff]
    %v1141 = vld [vmem:[#allocation2 + $0x30] sm:$0xff]
    %v1142 = vld [vmem:[#allocation2 + $0x38] sm:$0xff]
    %v1143 = vld [vmem:[#allocation2 + $0x48] sm:$0xff]
    %v1144 = vld [vmem:[#allocation2 + $0x50] sm:$0xff]
    %v1145 = vld [vmem:[#allocation2 + $0x60] sm:$0xff]
    %v1146 = vld [vmem:[#allocation2 + $0x68] sm:$0xff]
    %v1147 = vld [vmem:[#allocation2 + $0x78] sm:$0xff]
    %v1148 = vld [vmem:[#allocation2 + $0x80] sm:$0xff]
    %v1149 = vld [vmem:[#allocation2 + $0x90] sm:$0xff]
    %v1150 = vld [vmem:[#allocation2 + $0x98] sm:$0xff]
    %v1151 = vld [vmem:[#allocation2 + $0xa8] sm:$0xff]
    %v1152 = vld [vmem:[#allocation2 + $0xb0] sm:$0xff]
    %v1153 = vld [vmem:[#allocation2 + $0xc0] sm:$0xff]
    %v1154 = vld [vmem:[#allocation2 + $0xc8] sm:$0xff]
    %v1155 = vld [vmem:[#allocation2 + $0xd8] sm:$0xff]
    %v1156 = vld [vmem:[#allocation2 + $0xe0] sm:$0xff]
    %v1157 = vld [vmem:[#allocation2 + $0xf0] sm:$0xff]
    %v1158 = vld [vmem:[#allocation2 + $0xf8] sm:$0xff]
    %v1159 = vld [vmem:[#allocation2 + $0x108] sm:$0xff]
    %v1160 = vld [vmem:[#allocation2 + $0x110] sm:$0xff]
    %v1161 = vld [vmem:[#allocation2 + $0x120] sm:$0xff]
    %v1162 = vld [vmem:[#allocation2 + $0x128] sm:$0xff]
    %v1163 = vld [vmem:[#allocation2 + $0x138] sm:$0xff]
    %v1164 = vld [vmem:[#allocation2 + $0x140] sm:$0xff]
    %v1165 = vld [vmem:[#allocation2 + $0x150] sm:$0xff]
    %v1166 = vld [vmem:[#allocation2 + $0x158] sm:$0xff]
    %v1167 = vld [vmem:[#allocation2 + $0x168] sm:$0xff]
    %v1168 = vld [vmem:[#allocation2 + $0x170] sm:$0xff]
    %v1169 = vld [vmem:[#allocation2 + $0x1b0] sm:$0xff]
    %v1170 = vld [vmem:[#allocation2 + $0x1b8] sm:$0xff]
    %v1171 = vld [vmem:[#allocation2 + $0x1c8] sm:$0xff]
    %v1172 = vld [vmem:[#allocation2 + $0x1d0] sm:$0xff]
    %v1173 = vld [vmem:[#allocation2 + $0x1e0] sm:$0xff]
    %v1174 = vld [vmem:[#allocation2 + $0x1e8] sm:$0xff]
    %v1175 = vld [vmem:[#allocation2 + $0x1f8] sm:$0xff]
    %v1176 = vld [vmem:[#allocation2 + $0x200] sm:$0xff]
    %v1177 = vld [vmem:[#allocation2 + $0x210] sm:$0xff]
    %v1178 = vld [vmem:[#allocation2 + $0x218] sm:$0xff]
    %v1179 = vld [vmem:[#allocation2 + $0x228] sm:$0xff]
    %v1180 = vld [vmem:[#allocation2 + $0x230] sm:$0xff]
    %v1181 = vld [vmem:[#allocation2 + $0x240] sm:$0xff]
    %v1182 = vld [vmem:[#allocation2 + $0x248] sm:$0xff]
    %v1183 = vld [vmem:[#allocation2 + $0x258] sm:$0xff]
    %v1184 = vld [vmem:[#allocation2 + $0x260] sm:$0xff]
    %v1185 = vld [vmem:[#allocation2 + $0x270] sm:$0xff]
    %v1186 = vld [vmem:[#allocation2 + $0x278] sm:$0xff]
    %v1187 = vld [vmem:[#allocation2 + $0x288] sm:$0xff]
    %v1188 = vld [vmem:[#allocation2 + $0x290] sm:$0xff]
    %v1189 = vld [vmem:[#allocation2 + $0x2a0] sm:$0xff]
    %v1190 = vld [vmem:[#allocation2 + $0x2a8] sm:$0xff]
    %v1191 = vld [vmem:[#allocation2 + $0x2b8] sm:$0xff]
    %v1192 = vld [vmem:[#allocation2 + $0x2c0] sm:$0xff]
    %v1193 = vld [vmem:[#allocation2 + $0x2d0] sm:$0xff]
    %v1194 = vld [vmem:[#allocation2 + $0x2d8] sm:$0xff]
    %v1195 = vld [vmem:[#allocation2 + $0x2e8] sm:$0xff]
    %v1196 = vld [vmem:[#allocation2 + $0x2f0] sm:$0xff]
    %v1197 = vld [vmem:[#allocation2 + $0x300] sm:$0xff]
    %v1198 = vld [vmem:[#allocation2 + $0x308] sm:$0xff]
    %v1199 = vld [vmem:[#allocation2 + $0x318] sm:$0xff]
    %v1200 = vld [vmem:[#allocation2 + $0x320] sm:$0xff]
    %v1201 = vld [vmem:[%s3] sm:$0x1]
    %v1202 = vlaneseq
    %v1203 = vshrl.u32 %v1202, 7
    %v1204 = vsub.s32 0, %v1203
    %v1205 = vrot.slane %v1201, %v1204
    %v1206 = vmul.f32 %v1137, %v1205
    %v1207 = vmul.f32 %v1138, %v1205
    %v1208 = vmul.f32 %v1139, %v1205
    %v1209 = vmul.f32 %v1140, %v1205
    %v1210 = vmul.f32 %v1141, %v1205
    %v1211 = vmul.f32 %v1142, %v1205
    %v1212 = vmul.f32 %v1143, %v1205
    %v1213 = vmul.f32 %v1144, %v1205
    %v1214 = vmul.f32 %v1145, %v1205
    %v1215 = vmul.f32 %v1146, %v1205
    %v1216 = vmul.f32 %v1147, %v1205
    %v1217 = vmul.f32 %v1148, %v1205
    %v1218 = vmul.f32 %v1149, %v1205
    %v1219 = vmul.f32 %v1150, %v1205
    %v1220 = vmul.f32 %v1151, %v1205
    %v1221 = vmul.f32 %v1152, %v1205
    %v1222 = vmul.f32 %v1153, %v1205
    %v1223 = vmul.f32 %v1154, %v1205
    %v1224 = vmul.f32 %v1155, %v1205
    %v1225 = vmul.f32 %v1156, %v1205
    %v1226 = vmul.f32 %v1157, %v1205
    %v1227 = vmul.f32 %v1158, %v1205
    %v1228 = vmul.f32 %v1159, %v1205
    %v1229 = vmul.f32 %v1160, %v1205
    %v1230 = vmul.f32 %v1161, %v1205
    %v1231 = vmul.f32 %v1162, %v1205
    %v1232 = vmul.f32 %v1163, %v1205
    %v1233 = vmul.f32 %v1164, %v1205
    %v1234 = vmul.f32 %v1165, %v1205
    %v1235 = vmul.f32 %v1166, %v1205
    %v1236 = vmul.f32 %v1167, %v1205
    %v1237 = vmul.f32 %v1168, %v1205
    %v1238 = vmul.f32 %v1169, %v1205
    %v1239 = vmul.f32 %v1170, %v1205
    %v1240 = vmul.f32 %v1171, %v1205
    %v1241 = vmul.f32 %v1172, %v1205
    %v1242 = vmul.f32 %v1173, %v1205
    %v1243 = vmul.f32 %v1174, %v1205
    %v1244 = vmul.f32 %v1175, %v1205
    %v1245 = vmul.f32 %v1176, %v1205
    %v1246 = vmul.f32 %v1177, %v1205
    %v1247 = vmul.f32 %v1178, %v1205
    %v1248 = vmul.f32 %v1179, %v1205
    %v1249 = vmul.f32 %v1180, %v1205
    %v1250 = vmul.f32 %v1181, %v1205
    %v1251 = vmul.f32 %v1182, %v1205
    %v1252 = vmul.f32 %v1183, %v1205
    %v1253 = vmul.f32 %v1184, %v1205
    %v1254 = vmul.f32 %v1185, %v1205
    %v1255 = vmul.f32 %v1186, %v1205
    %v1256 = vmul.f32 %v1187, %v1205
    %v1257 = vmul.f32 %v1188, %v1205
    %v1258 = vmul.f32 %v1189, %v1205
    %v1259 = vmul.f32 %v1190, %v1205
    %v1260 = vmul.f32 %v1191, %v1205
    %v1261 = vmul.f32 %v1192, %v1205
    %v1262 = vmul.f32 %v1193, %v1205
    %v1263 = vmul.f32 %v1194, %v1205
    %v1264 = vmul.f32 %v1195, %v1205
    %v1265 = vmul.f32 %v1196, %v1205
    %v1266 = vmul.f32 %v1197, %v1205
    %v1267 = vmul.f32 %v1198, %v1205
    %v1268 = vmul.f32 %v1199, %v1205
    %v1269 = vmul.f32 %v1200, %v1205
    %v1270 = vadd.f32 %v1206, 0.0
    %v1271 = vadd.f32 %v1207, 0.0
    %v1272 = vadd.f32 %v1208, 0.0
    %v1273 = vadd.f32 %v1209, 0.0
    %v1274 = vadd.f32 %v1210, 0.0
    %v1275 = vadd.f32 %v1211, 0.0
    %v1276 = vadd.f32 %v1212, 0.0
    %v1277 = vadd.f32 %v1213, 0.0
    %v1278 = vadd.f32 %v1214, 0.0
    %v1279 = vadd.f32 %v1215, 0.0
    %v1280 = vadd.f32 %v1216, 0.0
    %v1281 = vadd.f32 %v1217, 0.0
    %v1282 = vadd.f32 %v1218, 0.0
    %v1283 = vadd.f32 %v1219, 0.0
    %v1284 = vadd.f32 %v1220, 0.0
    %v1285 = vadd.f32 %v1221, 0.0
    %v1286 = vadd.f32 %v1222, 0.0
    %v1287 = vadd.f32 %v1223, 0.0
    %v1288 = vadd.f32 %v1224, 0.0
    %v1289 = vadd.f32 %v1225, 0.0
    %v1290 = vadd.f32 %v1226, 0.0
    %v1291 = vadd.f32 %v1227, 0.0
    %v1292 = vadd.f32 %v1228, 0.0
    %v1293 = vadd.f32 %v1229, 0.0
    %v1294 = vadd.f32 %v1230, 0.0
    %v1295 = vadd.f32 %v1231, 0.0
    %v1296 = vadd.f32 %v1232, 0.0
    %v1297 = vadd.f32 %v1233, 0.0
    %v1298 = vadd.f32 %v1234, 0.0
    %v1299 = vadd.f32 %v1235, 0.0
    %v1300 = vadd.f32 %v1236, 0.0
    %v1301 = vadd.f32 %v1237, 0.0
    %v1302 = vadd.f32 %v1238, 0.0
    %v1303 = vadd.f32 %v1239, 0.0
    %v1304 = vadd.f32 %v1240, 0.0
    %v1305 = vadd.f32 %v1241, 0.0
    %v1306 = vadd.f32 %v1242, 0.0
    %v1307 = vadd.f32 %v1243, 0.0
    %v1308 = vadd.f32 %v1244, 0.0
    %v1309 = vadd.f32 %v1245, 0.0
    %v1310 = vadd.f32 %v1246, 0.0
    %v1311 = vadd.f32 %v1247, 0.0
    %v1312 = vadd.f32 %v1248, 0.0
    %v1313 = vadd.f32 %v1249, 0.0
    %v1314 = vadd.f32 %v1250, 0.0
    %v1315 = vadd.f32 %v1251, 0.0
    %v1316 = vadd.f32 %v1252, 0.0
    %v1317 = vadd.f32 %v1253, 0.0
    %v1318 = vadd.f32 %v1254, 0.0
    %v1319 = vadd.f32 %v1255, 0.0
    %v1320 = vadd.f32 %v1256, 0.0
    %v1321 = vadd.f32 %v1257, 0.0
    %v1322 = vadd.f32 %v1258, 0.0
    %v1323 = vadd.f32 %v1259, 0.0
    %v1324 = vadd.f32 %v1260, 0.0
    %v1325 = vadd.f32 %v1261, 0.0
    %v1326 = vadd.f32 %v1262, 0.0
    %v1327 = vadd.f32 %v1263, 0.0
    %v1328 = vadd.f32 %v1264, 0.0
    %v1329 = vadd.f32 %v1265, 0.0
    %v1330 = vadd.f32 %v1266, 0.0
    %v1331 = vadd.f32 %v1267, 0.0
    %v1332 = vadd.f32 %v1268, 0.0
    %v1333 = vadd.f32 %v1269, 0.0
    %v1334 = vld [vmem:[#allocation2 + $0x1] sm:$0xff]
    %v1335 = vld [vmem:[#allocation2 + $0x9] sm:$0xff]
    %v1336 = vld [vmem:[#allocation2 + $0x19] sm:$0xff]
    %v1337 = vld [vmem:[#allocation2 + $0x21] sm:$0xff]
    %v1338 = vld [vmem:[#allocation2 + $0x31] sm:$0xff]
    %v1339 = vld [vmem:[#allocation2 + $0x39] sm:$0xff]
    %v1340 = vld [vmem:[#allocation2 + $0x49] sm:$0xff]
    %v1341 = vld [vmem:[#allocation2 + $0x51] sm:$0xff]
    %v1342 = vld [vmem:[#allocation2 + $0x61] sm:$0xff]
    %v1343 = vld [vmem:[#allocation2 + $0x69] sm:$0xff]
    %v1344 = vld [vmem:[#allocation2 + $0x79] sm:$0xff]
    %v1345 = vld [vmem:[#allocation2 + $0x81] sm:$0xff]
    %v1346 = vld [vmem:[#allocation2 + $0x91] sm:$0xff]
    %v1347 = vld [vmem:[#allocation2 + $0x99] sm:$0xff]
    %v1348 = vld [vmem:[#allocation2 + $0xa9] sm:$0xff]
    %v1349 = vld [vmem:[#allocation2 + $0xb1] sm:$0xff]
    %v1350 = vld [vmem:[#allocation2 + $0xc1] sm:$0xff]
    %v1351 = vld [vmem:[#allocation2 + $0xc9] sm:$0xff]
    %v1352 = vld [vmem:[#allocation2 + $0xd9] sm:$0xff]
    %v1353 = vld [vmem:[#allocation2 + $0xe1] sm:$0xff]
    %v1354 = vld [vmem:[#allocation2 + $0xf1] sm:$0xff]
    %v1355 = vld [vmem:[#allocation2 + $0xf9] sm:$0xff]
    %v1356 = vld [vmem:[#allocation2 + $0x109] sm:$0xff]
    %v1357 = vld [vmem:[#allocation2 + $0x111] sm:$0xff]
    %v1358 = vld [vmem:[#allocation2 + $0x121] sm:$0xff]
    %v1359 = vld [vmem:[#allocation2 + $0x129] sm:$0xff]
    %v1360 = vld [vmem:[#allocation2 + $0x139] sm:$0xff]
    %v1361 = vld [vmem:[#allocation2 + $0x141] sm:$0xff]
    %v1362 = vld [vmem:[#allocation2 + $0x151] sm:$0xff]
    %v1363 = vld [vmem:[#allocation2 + $0x159] sm:$0xff]
    %v1364 = vld [vmem:[#allocation2 + $0x169] sm:$0xff]
    %v1365 = vld [vmem:[#allocation2 + $0x171] sm:$0xff]
    %v1366 = vld [vmem:[#allocation2 + $0x1b1] sm:$0xff]
    %v1367 = vld [vmem:[#allocation2 + $0x1b9] sm:$0xff]
    %v1368 = vld [vmem:[#allocation2 + $0x1c9] sm:$0xff]
    %v1369 = vld [vmem:[#allocation2 + $0x1d1] sm:$0xff]
    %v1370 = vld [vmem:[#allocation2 + $0x1e1] sm:$0xff]
    %v1371 = vld [vmem:[#allocation2 + $0x1e9] sm:$0xff]
    %v1372 = vld [vmem:[#allocation2 + $0x1f9] sm:$0xff]
    %v1373 = vld [vmem:[#allocation2 + $0x201] sm:$0xff]
    %v1374 = vld [vmem:[#allocation2 + $0x211] sm:$0xff]
    %v1375 = vld [vmem:[#allocation2 + $0x219] sm:$0xff]
    %v1376 = vld [vmem:[#allocation2 + $0x229] sm:$0xff]
    %v1377 = vld [vmem:[#allocation2 + $0x231] sm:$0xff]
    %v1378 = vld [vmem:[#allocation2 + $0x241] sm:$0xff]
    %v1379 = vld [vmem:[#allocation2 + $0x249] sm:$0xff]
    %v1380 = vld [vmem:[#allocation2 + $0x259] sm:$0xff]
    %v1381 = vld [vmem:[#allocation2 + $0x261] sm:$0xff]
    %v1382 = vld [vmem:[#allocation2 + $0x271] sm:$0xff]
    %v1383 = vld [vmem:[#allocation2 + $0x279] sm:$0xff]
    %v1384 = vld [vmem:[#allocation2 + $0x289] sm:$0xff]
    %v1385 = vld [vmem:[#allocation2 + $0x291] sm:$0xff]
    %v1386 = vld [vmem:[#allocation2 + $0x2a1] sm:$0xff]
    %v1387 = vld [vmem:[#allocation2 + $0x2a9] sm:$0xff]
    %v1388 = vld [vmem:[#allocation2 + $0x2b9] sm:$0xff]
    %v1389 = vld [vmem:[#allocation2 + $0x2c1] sm:$0xff]
    %v1390 = vld [vmem:[#allocation2 + $0x2d1] sm:$0xff]
    %v1391 = vld [vmem:[#allocation2 + $0x2d9] sm:$0xff]
    %v1392 = vld [vmem:[#allocation2 + $0x2e9] sm:$0xff]
    %v1393 = vld [vmem:[#allocation2 + $0x2f1] sm:$0xff]
    %v1394 = vld [vmem:[#allocation2 + $0x301] sm:$0xff]
    %v1395 = vld [vmem:[#allocation2 + $0x309] sm:$0xff]
    %v1396 = vld [vmem:[#allocation2 + $0x319] sm:$0xff]
    %v1397 = vld [vmem:[#allocation2 + $0x321] sm:$0xff]
    %v1398 = vld [vmem:[%s3 + $0x1] sm:$0x1]
    %v1399 = vlaneseq
    %v1400 = vshrl.u32 %v1399, 7
    %v1401 = vsub.s32 0, %v1400
    %v1402 = vrot.slane %v1398, %v1401
    %v1403 = vmul.f32 %v1334, %v1402
    %v1404 = vmul.f32 %v1335, %v1402
    %v1405 = vmul.f32 %v1336, %v1402
    %v1406 = vmul.f32 %v1337, %v1402
    %v1407 = vmul.f32 %v1338, %v1402
    %v1408 = vmul.f32 %v1339, %v1402
    %v1409 = vmul.f32 %v1340, %v1402
    %v1410 = vmul.f32 %v1341, %v1402
    %v1411 = vmul.f32 %v1342, %v1402
    %v1412 = vmul.f32 %v1343, %v1402
    %v1413 = vmul.f32 %v1344, %v1402
    %v1414 = vmul.f32 %v1345, %v1402
    %v1415 = vmul.f32 %v1346, %v1402
    %v1416 = vmul.f32 %v1347, %v1402
    %v1417 = vmul.f32 %v1348, %v1402
    %v1418 = vmul.f32 %v1349, %v1402
    %v1419 = vmul.f32 %v1350, %v1402
    %v1420 = vmul.f32 %v1351, %v1402
    %v1421 = vmul.f32 %v1352, %v1402
    %v1422 = vmul.f32 %v1353, %v1402
    %v1423 = vmul.f32 %v1354, %v1402
    %v1424 = vmul.f32 %v1355, %v1402
    %v1425 = vmul.f32 %v1356, %v1402
    %v1426 = vmul.f32 %v1357, %v1402
    %v1427 = vmul.f32 %v1358, %v1402
    %v1428 = vmul.f32 %v1359, %v1402
    %v1429 = vmul.f32 %v1360, %v1402
    %v1430 = vmul.f32 %v1361, %v1402
    %v1431 = vmul.f32 %v1362, %v1402
    %v1432 = vmul.f32 %v1363, %v1402
    %v1433 = vmul.f32 %v1364, %v1402
    %v1434 = vmul.f32 %v1365, %v1402
    %v1435 = vmul.f32 %v1366, %v1402
    %v1436 = vmul.f32 %v1367, %v1402
    %v1437 = vmul.f32 %v1368, %v1402
    %v1438 = vmul.f32 %v1369, %v1402
    %v1439 = vmul.f32 %v1370, %v1402
    %v1440 = vmul.f32 %v1371, %v1402
    %v1441 = vmul.f32 %v1372, %v1402
    %v1442 = vmul.f32 %v1373, %v1402
    %v1443 = vmul.f32 %v1374, %v1402
    %v1444 = vmul.f32 %v1375, %v1402
    %v1445 = vmul.f32 %v1376, %v1402
    %v1446 = vmul.f32 %v1377, %v1402
    %v1447 = vmul.f32 %v1378, %v1402
    %v1448 = vmul.f32 %v1379, %v1402
    %v1449 = vmul.f32 %v1380, %v1402
    %v1450 = vmul.f32 %v1381, %v1402
    %v1451 = vmul.f32 %v1382, %v1402
    %v1452 = vmul.f32 %v1383, %v1402
    %v1453 = vmul.f32 %v1384, %v1402
    %v1454 = vmul.f32 %v1385, %v1402
    %v1455 = vmul.f32 %v1386, %v1402
    %v1456 = vmul.f32 %v1387, %v1402
    %v1457 = vmul.f32 %v1388, %v1402
    %v1458 = vmul.f32 %v1389, %v1402
    %v1459 = vmul.f32 %v1390, %v1402
    %v1460 = vmul.f32 %v1391, %v1402
    %v1461 = vmul.f32 %v1392, %v1402
    %v1462 = vmul.f32 %v1393, %v1402
    %v1463 = vmul.f32 %v1394, %v1402
    %v1464 = vmul.f32 %v1395, %v1402
    %v1465 = vmul.f32 %v1396, %v1402
    %v1466 = vmul.f32 %v1397, %v1402
    %v1467 = vadd.f32 %v1270, %v1403
    %v1468 = vadd.f32 %v1271, %v1404
    %v1469 = vadd.f32 %v1272, %v1405
    %v1470 = vadd.f32 %v1273, %v1406
    %v1471 = vadd.f32 %v1274, %v1407
    %v1472 = vadd.f32 %v1275, %v1408
    %v1473 = vadd.f32 %v1276, %v1409
    %v1474 = vadd.f32 %v1277, %v1410
    %v1475 = vadd.f32 %v1278, %v1411
    %v1476 = vadd.f32 %v1279, %v1412
    %v1477 = vadd.f32 %v1280, %v1413
    %v1478 = vadd.f32 %v1281, %v1414
    %v1479 = vadd.f32 %v1282, %v1415
    %v1480 = vadd.f32 %v1283, %v1416
    %v1481 = vadd.f32 %v1284, %v1417
    %v1482 = vadd.f32 %v1285, %v1418
    %v1483 = vadd.f32 %v1286, %v1419
    %v1484 = vadd.f32 %v1287, %v1420
    %v1485 = vadd.f32 %v1288, %v1421
    %v1486 = vadd.f32 %v1289, %v1422
    %v1487 = vadd.f32 %v1290, %v1423
    %v1488 = vadd.f32 %v1291, %v1424
    %v1489 = vadd.f32 %v1292, %v1425
    %v1490 = vadd.f32 %v1293, %v1426
    %v1491 = vadd.f32 %v1294, %v1427
    %v1492 = vadd.f32 %v1295, %v1428
    %v1493 = vadd.f32 %v1296, %v1429
    %v1494 = vadd.f32 %v1297, %v1430
    %v1495 = vadd.f32 %v1298, %v1431
    %v1496 = vadd.f32 %v1299, %v1432
    %v1497 = vadd.f32 %v1300, %v1433
    %v1498 = vadd.f32 %v1301, %v1434
    %v1499 = vadd.f32 %v1302, %v1435
    %v1500 = vadd.f32 %v1303, %v1436
    %v1501 = vadd.f32 %v1304, %v1437
    %v1502 = vadd.f32 %v1305, %v1438
    %v1503 = vadd.f32 %v1306, %v1439
    %v1504 = vadd.f32 %v1307, %v1440
    %v1505 = vadd.f32 %v1308, %v1441
    %v1506 = vadd.f32 %v1309, %v1442
    %v1507 = vadd.f32 %v1310, %v1443
    %v1508 = vadd.f32 %v1311, %v1444
    %v1509 = vadd.f32 %v1312, %v1445
    %v1510 = vadd.f32 %v1313, %v1446
    %v1511 = vadd.f32 %v1314, %v1447
    %v1512 = vadd.f32 %v1315, %v1448
    %v1513 = vadd.f32 %v1316, %v1449
    %v1514 = vadd.f32 %v1317, %v1450
    %v1515 = vadd.f32 %v1318, %v1451
    %v1516 = vadd.f32 %v1319, %v1452
    %v1517 = vadd.f32 %v1320, %v1453
    %v1518 = vadd.f32 %v1321, %v1454
    %v1519 = vadd.f32 %v1322, %v1455
    %v1520 = vadd.f32 %v1323, %v1456
    %v1521 = vadd.f32 %v1324, %v1457
    %v1522 = vadd.f32 %v1325, %v1458
    %v1523 = vadd.f32 %v1326, %v1459
    %v1524 = vadd.f32 %v1327, %v1460
    %v1525 = vadd.f32 %v1328, %v1461
    %v1526 = vadd.f32 %v1329, %v1462
    %v1527 = vadd.f32 %v1330, %v1463
    %v1528 = vadd.f32 %v1331, %v1464
    %v1529 = vadd.f32 %v1332, %v1465
    %v1530 = vadd.f32 %v1333, %v1466
    %v1531 = vld [vmem:[#allocation2 + $0x2] sm:$0xff]
    %v1532 = vld [vmem:[#allocation2 + $0xa] sm:$0xff]
    %v1533 = vld [vmem:[#allocation2 + $0x1a] sm:$0xff]
    %v1534 = vld [vmem:[#allocation2 + $0x22] sm:$0xff]
    %v1535 = vld [vmem:[#allocation2 + $0x32] sm:$0xff]
    %v1536 = vld [vmem:[#allocation2 + $0x3a] sm:$0xff]
    %v1537 = vld [vmem:[#allocation2 + $0x4a] sm:$0xff]
    %v1538 = vld [vmem:[#allocation2 + $0x52] sm:$0xff]
    %v1539 = vld [vmem:[#allocation2 + $0x62] sm:$0xff]
    %v1540 = vld [vmem:[#allocation2 + $0x6a] sm:$0xff]
    %v1541 = vld [vmem:[#allocation2 + $0x7a] sm:$0xff]
    %v1542 = vld [vmem:[#allocation2 + $0x82] sm:$0xff]
    %v1543 = vld [vmem:[#allocation2 + $0x92] sm:$0xff]
    %v1544 = vld [vmem:[#allocation2 + $0x9a] sm:$0xff]
    %v1545 = vld [vmem:[#allocation2 + $0xaa] sm:$0xff]
    %v1546 = vld [vmem:[#allocation2 + $0xb2] sm:$0xff]
    %v1547 = vld [vmem:[#allocation2 + $0xc2] sm:$0xff]
    %v1548 = vld [vmem:[#allocation2 + $0xca] sm:$0xff]
    %v1549 = vld [vmem:[#allocation2 + $0xda] sm:$0xff]
    %v1550 = vld [vmem:[#allocation2 + $0xe2] sm:$0xff]
    %v1551 = vld [vmem:[#allocation2 + $0xf2] sm:$0xff]
    %v1552 = vld [vmem:[#allocation2 + $0xfa] sm:$0xff]
    %v1553 = vld [vmem:[#allocation2 + $0x10a] sm:$0xff]
    %v1554 = vld [vmem:[#allocation2 + $0x112] sm:$0xff]
    %v1555 = vld [vmem:[#allocation2 + $0x122] sm:$0xff]
    %v1556 = vld [vmem:[#allocation2 + $0x12a] sm:$0xff]
    %v1557 = vld [vmem:[#allocation2 + $0x13a] sm:$0xff]
    %v1558 = vld [vmem:[#allocation2 + $0x142] sm:$0xff]
    %v1559 = vld [vmem:[#allocation2 + $0x152] sm:$0xff]
    %v1560 = vld [vmem:[#allocation2 + $0x15a] sm:$0xff]
    %v1561 = vld [vmem:[#allocation2 + $0x16a] sm:$0xff]
    %v1562 = vld [vmem:[#allocation2 + $0x172] sm:$0xff]
    %v1563 = vld [vmem:[#allocation2 + $0x1b2] sm:$0xff]
    %v1564 = vld [vmem:[#allocation2 + $0x1ba] sm:$0xff]
    %v1565 = vld [vmem:[#allocation2 + $0x1ca] sm:$0xff]
    %v1566 = vld [vmem:[#allocation2 + $0x1d2] sm:$0xff]
    %v1567 = vld [vmem:[#allocation2 + $0x1e2] sm:$0xff]
    %v1568 = vld [vmem:[#allocation2 + $0x1ea] sm:$0xff]
    %v1569 = vld [vmem:[#allocation2 + $0x1fa] sm:$0xff]
    %v1570 = vld [vmem:[#allocation2 + $0x202] sm:$0xff]
    %v1571 = vld [vmem:[#allocation2 + $0x212] sm:$0xff]
    %v1572 = vld [vmem:[#allocation2 + $0x21a] sm:$0xff]
    %v1573 = vld [vmem:[#allocation2 + $0x22a] sm:$0xff]
    %v1574 = vld [vmem:[#allocation2 + $0x232] sm:$0xff]
    %v1575 = vld [vmem:[#allocation2 + $0x242] sm:$0xff]
    %v1576 = vld [vmem:[#allocation2 + $0x24a] sm:$0xff]
    %v1577 = vld [vmem:[#allocation2 + $0x25a] sm:$0xff]
    %v1578 = vld [vmem:[#allocation2 + $0x262] sm:$0xff]
    %v1579 = vld [vmem:[#allocation2 + $0x272] sm:$0xff]
    %v1580 = vld [vmem:[#allocation2 + $0x27a] sm:$0xff]
    %v1581 = vld [vmem:[#allocation2 + $0x28a] sm:$0xff]
    %v1582 = vld [vmem:[#allocation2 + $0x292] sm:$0xff]
    %v1583 = vld [vmem:[#allocation2 + $0x2a2] sm:$0xff]
    %v1584 = vld [vmem:[#allocation2 + $0x2aa] sm:$0xff]
    %v1585 = vld [vmem:[#allocation2 + $0x2ba] sm:$0xff]
    %v1586 = vld [vmem:[#allocation2 + $0x2c2] sm:$0xff]
    %v1587 = vld [vmem:[#allocation2 + $0x2d2] sm:$0xff]
    %v1588 = vld [vmem:[#allocation2 + $0x2da] sm:$0xff]
    %v1589 = vld [vmem:[#allocation2 + $0x2ea] sm:$0xff]
    %v1590 = vld [vmem:[#allocation2 + $0x2f2] sm:$0xff]
    %v1591 = vld [vmem:[#allocation2 + $0x302] sm:$0xff]
    %v1592 = vld [vmem:[#allocation2 + $0x30a] sm:$0xff]
    %v1593 = vld [vmem:[#allocation2 + $0x31a] sm:$0xff]
    %v1594 = vld [vmem:[#allocation2 + $0x322] sm:$0xff]
    %v1595 = vld [vmem:[%s3 + $0x2] sm:$0x1]
    %v1596 = vlaneseq
    %v1597 = vshrl.u32 %v1596, 7
    %v1598 = vsub.s32 0, %v1597
    %v1599 = vrot.slane %v1595, %v1598
    %v1600 = vmul.f32 %v1531, %v1599
    %v1601 = vmul.f32 %v1532, %v1599
    %v1602 = vmul.f32 %v1533, %v1599
    %v1603 = vmul.f32 %v1534, %v1599
    %v1604 = vmul.f32 %v1535, %v1599
    %v1605 = vmul.f32 %v1536, %v1599
    %v1606 = vmul.f32 %v1537, %v1599
    %v1607 = vmul.f32 %v1538, %v1599
    %v1608 = vmul.f32 %v1539, %v1599
    %v1609 = vmul.f32 %v1540, %v1599
    %v1610 = vmul.f32 %v1541, %v1599
    %v1611 = vmul.f32 %v1542, %v1599
    %v1612 = vmul.f32 %v1543, %v1599
    %v1613 = vmul.f32 %v1544, %v1599
    %v1614 = vmul.f32 %v1545, %v1599
    %v1615 = vmul.f32 %v1546, %v1599
    %v1616 = vmul.f32 %v1547, %v1599
    %v1617 = vmul.f32 %v1548, %v1599
    %v1618 = vmul.f32 %v1549, %v1599
    %v1619 = vmul.f32 %v1550, %v1599
    %v1620 = vmul.f32 %v1551, %v1599
    %v1621 = vmul.f32 %v1552, %v1599
    %v1622 = vmul.f32 %v1553, %v1599
    %v1623 = vmul.f32 %v1554, %v1599
    %v1624 = vmul.f32 %v1555, %v1599
    %v1625 = vmul.f32 %v1556, %v1599
    %v1626 = vmul.f32 %v1557, %v1599
    %v1627 = vmul.f32 %v1558, %v1599
    %v1628 = vmul.f32 %v1559, %v1599
    %v1629 = vmul.f32 %v1560, %v1599
    %v1630 = vmul.f32 %v1561, %v1599
    %v1631 = vmul.f32 %v1562, %v1599
    %v1632 = vmul.f32 %v1563, %v1599
    %v1633 = vmul.f32 %v1564, %v1599
    %v1634 = vmul.f32 %v1565, %v1599
    %v1635 = vmul.f32 %v1566, %v1599
    %v1636 = vmul.f32 %v1567, %v1599
    %v1637 = vmul.f32 %v1568, %v1599
    %v1638 = vmul.f32 %v1569, %v1599
    %v1639 = vmul.f32 %v1570, %v1599
    %v1640 = vmul.f32 %v1571, %v1599
    %v1641 = vmul.f32 %v1572, %v1599
    %v1642 = vmul.f32 %v1573, %v1599
    %v1643 = vmul.f32 %v1574, %v1599
    %v1644 = vmul.f32 %v1575, %v1599
    %v1645 = vmul.f32 %v1576, %v1599
    %v1646 = vmul.f32 %v1577, %v1599
    %v1647 = vmul.f32 %v1578, %v1599
    %v1648 = vmul.f32 %v1579, %v1599
    %v1649 = vmul.f32 %v1580, %v1599
    %v1650 = vmul.f32 %v1581, %v1599
    %v1651 = vmul.f32 %v1582, %v1599
    %v1652 = vmul.f32 %v1583, %v1599
    %v1653 = vmul.f32 %v1584, %v1599
    %v1654 = vmul.f32 %v1585, %v1599
    %v1655 = vmul.f32 %v1586, %v1599
    %v1656 = vmul.f32 %v1587, %v1599
    %v1657 = vmul.f32 %v1588, %v1599
    %v1658 = vmul.f32 %v1589, %v1599
    %v1659 = vmul.f32 %v1590, %v1599
    %v1660 = vmul.f32 %v1591, %v1599
    %v1661 = vmul.f32 %v1592, %v1599
    %v1662 = vmul.f32 %v1593, %v1599
    %v1663 = vmul.f32 %v1594, %v1599
    %v1664 = vadd.f32 %v1467, %v1600
    %v1665 = vadd.f32 %v1468, %v1601
    %v1666 = vadd.f32 %v1469, %v1602
    %v1667 = vadd.f32 %v1470, %v1603
    %v1668 = vadd.f32 %v1471, %v1604
    %v1669 = vadd.f32 %v1472, %v1605
    %v1670 = vadd.f32 %v1473, %v1606
    %v1671 = vadd.f32 %v1474, %v1607
    %v1672 = vadd.f32 %v1475, %v1608
    %v1673 = vadd.f32 %v1476, %v1609
    %v1674 = vadd.f32 %v1477, %v1610
    %v1675 = vadd.f32 %v1478, %v1611
    %v1676 = vadd.f32 %v1479, %v1612
    %v1677 = vadd.f32 %v1480, %v1613
    %v1678 = vadd.f32 %v1481, %v1614
    %v1679 = vadd.f32 %v1482, %v1615
    %v1680 = vadd.f32 %v1483, %v1616
    %v1681 = vadd.f32 %v1484, %v1617
    %v1682 = vadd.f32 %v1485, %v1618
    %v1683 = vadd.f32 %v1486, %v1619
    %v1684 = vadd.f32 %v1487, %v1620
    %v1685 = vadd.f32 %v1488, %v1621
    %v1686 = vadd.f32 %v1489, %v1622
    %v1687 = vadd.f32 %v1490, %v1623
    %v1688 = vadd.f32 %v1491, %v1624
    %v1689 = vadd.f32 %v1492, %v1625
    %v1690 = vadd.f32 %v1493, %v1626
    %v1691 = vadd.f32 %v1494, %v1627
    %v1692 = vadd.f32 %v1495, %v1628
    %v1693 = vadd.f32 %v1496, %v1629
    %v1694 = vadd.f32 %v1497, %v1630
    %v1695 = vadd.f32 %v1498, %v1631
    %v1696 = vadd.f32 %v1499, %v1632
    %v1697 = vadd.f32 %v1500, %v1633
    %v1698 = vadd.f32 %v1501, %v1634
    %v1699 = vadd.f32 %v1502, %v1635
    %v1700 = vadd.f32 %v1503, %v1636
    %v1701 = vadd.f32 %v1504, %v1637
    %v1702 = vadd.f32 %v1505, %v1638
    %v1703 = vadd.f32 %v1506, %v1639
    %v1704 = vadd.f32 %v1507, %v1640
    %v1705 = vadd.f32 %v1508, %v1641
    %v1706 = vadd.f32 %v1509, %v1642
    %v1707 = vadd.f32 %v1510, %v1643
    %v1708 = vadd.f32 %v1511, %v1644
    %v1709 = vadd.f32 %v1512, %v1645
    %v1710 = vadd.f32 %v1513, %v1646
    %v1711 = vadd.f32 %v1514, %v1647
    %v1712 = vadd.f32 %v1515, %v1648
    %v1713 = vadd.f32 %v1516, %v1649
    %v1714 = vadd.f32 %v1517, %v1650
    %v1715 = vadd.f32 %v1518, %v1651
    %v1716 = vadd.f32 %v1519, %v1652
    %v1717 = vadd.f32 %v1520, %v1653
    %v1718 = vadd.f32 %v1521, %v1654
    %v1719 = vadd.f32 %v1522, %v1655
    %v1720 = vadd.f32 %v1523, %v1656
    %v1721 = vadd.f32 %v1524, %v1657
    %v1722 = vadd.f32 %v1525, %v1658
    %v1723 = vadd.f32 %v1526, %v1659
    %v1724 = vadd.f32 %v1527, %v1660
    %v1725 = vadd.f32 %v1528, %v1661
    %v1726 = vadd.f32 %v1529, %v1662
    %v1727 = vadd.f32 %v1530, %v1663
    %v1728 = vld [vmem:[%s1072] sm:$0xff]
    %v1729 = vld [vmem:[%s1072 + $0x8] sm:$0xff]
    %v1730 = vld [vmem:[%s1072 + $0x18] sm:$0xff]
    %v1731 = vld [vmem:[%s1072 + $0x20] sm:$0xff]
    %v1732 = vld [vmem:[%s1072 + $0x30] sm:$0xff]
    %v1733 = vld [vmem:[%s1072 + $0x38] sm:$0xff]
    %v1734 = vld [vmem:[%s1072 + $0x48] sm:$0xff]
    %v1735 = vld [vmem:[%s1072 + $0x50] sm:$0xff]
    %v1736 = vld [vmem:[%s1072 + $0x60] sm:$0xff]
    %v1737 = vld [vmem:[%s1072 + $0x68] sm:$0xff]
    %v1738 = vld [vmem:[%s1072 + $0x78] sm:$0xff]
    %v1739 = vld [vmem:[%s1072 + $0x80] sm:$0xff]
    %v1740 = vld [vmem:[%s1072 + $0x90] sm:$0xff]
    %v1741 = vld [vmem:[%s1072 + $0x98] sm:$0xff]
    %v1742 = vld [vmem:[%s1072 + $0xa8] sm:$0xff]
    %v1743 = vld [vmem:[%s1072 + $0xb0] sm:$0xff]
    %v1744 = vld [vmem:[%s1072 + $0xc0] sm:$0xff]
    %v1745 = vld [vmem:[%s1072 + $0xc8] sm:$0xff]
    %v1746 = vld [vmem:[%s1072 + $0xd8] sm:$0xff]
    %v1747 = vld [vmem:[%s1072 + $0xe0] sm:$0xff]
    %v1748 = vld [vmem:[%s1072 + $0xf0] sm:$0xff]
    %v1749 = vld [vmem:[%s1072 + $0xf8] sm:$0xff]
    %v1750 = vld [vmem:[%s1072 + $0x108] sm:$0xff]
    %v1751 = vld [vmem:[%s1072 + $0x110] sm:$0xff]
    %v1752 = vld [vmem:[%s1072 + $0x120] sm:$0xff]
    %v1753 = vld [vmem:[%s1072 + $0x128] sm:$0xff]
    %v1754 = vld [vmem:[%s1072 + $0x138] sm:$0xff]
    %v1755 = vld [vmem:[%s1072 + $0x140] sm:$0xff]
    %v1756 = vld [vmem:[%s1072 + $0x150] sm:$0xff]
    %v1757 = vld [vmem:[%s1072 + $0x158] sm:$0xff]
    %v1758 = vld [vmem:[%s1072 + $0x168] sm:$0xff]
    %v1759 = vld [vmem:[%s1072 + $0x170] sm:$0xff]
    %v1760 = vld [vmem:[%s1072 + $0x1b0] sm:$0xff]
    %v1761 = vld [vmem:[%s1072 + $0x1b8] sm:$0xff]
    %v1762 = vld [vmem:[%s1072 + $0x1c8] sm:$0xff]
    %v1763 = vld [vmem:[%s1072 + $0x1d0] sm:$0xff]
    %v1764 = vld [vmem:[%s1072 + $0x1e0] sm:$0xff]
    %v1765 = vld [vmem:[%s1072 + $0x1e8] sm:$0xff]
    %v1766 = vld [vmem:[%s1072 + $0x1f8] sm:$0xff]
    %v1767 = vld [vmem:[%s1072 + $0x200] sm:$0xff]
    %v1768 = vld [vmem:[%s1072 + $0x210] sm:$0xff]
    %v1769 = vld [vmem:[%s1072 + $0x218] sm:$0xff]
    %v1770 = vld [vmem:[%s1072 + $0x228] sm:$0xff]
    %v1771 = vld [vmem:[%s1072 + $0x230] sm:$0xff]
    %v1772 = vld [vmem:[%s1072 + $0x240] sm:$0xff]
    %v1773 = vld [vmem:[%s1072 + $0x248] sm:$0xff]
    %v1774 = vld [vmem:[%s1072 + $0x258] sm:$0xff]
    %v1775 = vld [vmem:[%s1072 + $0x260] sm:$0xff]
    %v1776 = vld [vmem:[%s1072 + $0x270] sm:$0xff]
    %v1777 = vld [vmem:[%s1072 + $0x278] sm:$0xff]
    %v1778 = vld [vmem:[%s1072 + $0x288] sm:$0xff]
    %v1779 = vld [vmem:[%s1072 + $0x290] sm:$0xff]
    %v1780 = vld [vmem:[%s1072 + $0x2a0] sm:$0xff]
    %v1781 = vld [vmem:[%s1072 + $0x2a8] sm:$0xff]
    %v1782 = vld [vmem:[%s1072 + $0x2b8] sm:$0xff]
    %v1783 = vld [vmem:[%s1072 + $0x2c0] sm:$0xff]
    %v1784 = vld [vmem:[%s1072 + $0x2d0] sm:$0xff]
    %v1785 = vld [vmem:[%s1072 + $0x2d8] sm:$0xff]
    %v1786 = vld [vmem:[%s1072 + $0x2e8] sm:$0xff]
    %v1787 = vld [vmem:[%s1072 + $0x2f0] sm:$0xff]
    %v1788 = vld [vmem:[%s1072 + $0x300] sm:$0xff]
    %v1789 = vld [vmem:[%s1072 + $0x308] sm:$0xff]
    %v1790 = vld [vmem:[%s1072 + $0x318] sm:$0xff]
    %v1791 = vld [vmem:[%s1072 + $0x320] sm:$0xff]
    %v1792 = vld [vmem:[%s3 + $0x3] sm:$0x1]
    %v1793 = vlaneseq
    %v1794 = vshrl.u32 %v1793, 7
    %v1795 = vsub.s32 0, %v1794
    %v1796 = vrot.slane %v1792, %v1795
    %v1797 = vmul.f32 %v1728, %v1796
    %v1798 = vmul.f32 %v1729, %v1796
    %v1799 = vmul.f32 %v1730, %v1796
    %v1800 = vmul.f32 %v1731, %v1796
    %v1801 = vmul.f32 %v1732, %v1796
    %v1802 = vmul.f32 %v1733, %v1796
    %v1803 = vmul.f32 %v1734, %v1796
    %v1804 = vmul.f32 %v1735, %v1796
    %v1805 = vmul.f32 %v1736, %v1796
    %v1806 = vmul.f32 %v1737, %v1796
    %v1807 = vmul.f32 %v1738, %v1796
    %v1808 = vmul.f32 %v1739, %v1796
    %v1809 = vmul.f32 %v1740, %v1796
    %v1810 = vmul.f32 %v1741, %v1796
    %v1811 = vmul.f32 %v1742, %v1796
    %v1812 = vmul.f32 %v1743, %v1796
    %v1813 = vmul.f32 %v1744, %v1796
    %v1814 = vmul.f32 %v1745, %v1796
    %v1815 = vmul.f32 %v1746, %v1796
    %v1816 = vmul.f32 %v1747, %v1796
    %v1817 = vmul.f32 %v1748, %v1796
    %v1818 = vmul.f32 %v1749, %v1796
    %v1819 = vmul.f32 %v1750, %v1796
    %v1820 = vmul.f32 %v1751, %v1796
    %v1821 = vmul.f32 %v1752, %v1796
    %v1822 = vmul.f32 %v1753, %v1796
    %v1823 = vmul.f32 %v1754, %v1796
    %v1824 = vmul.f32 %v1755, %v1796
    %v1825 = vmul.f32 %v1756, %v1796
    %v1826 = vmul.f32 %v1757, %v1796
    %v1827 = vmul.f32 %v1758, %v1796
    %v1828 = vmul.f32 %v1759, %v1796
    %v1829 = vmul.f32 %v1760, %v1796
    %v1830 = vmul.f32 %v1761, %v1796
    %v1831 = vmul.f32 %v1762, %v1796
    %v1832 = vmul.f32 %v1763, %v1796
    %v1833 = vmul.f32 %v1764, %v1796
    %v1834 = vmul.f32 %v1765, %v1796
    %v1835 = vmul.f32 %v1766, %v1796
    %v1836 = vmul.f32 %v1767, %v1796
    %v1837 = vmul.f32 %v1768, %v1796
    %v1838 = vmul.f32 %v1769, %v1796
    %v1839 = vmul.f32 %v1770, %v1796
    %v1840 = vmul.f32 %v1771, %v1796
    %v1841 = vmul.f32 %v1772, %v1796
    %v1842 = vmul.f32 %v1773, %v1796
    %v1843 = vmul.f32 %v1774, %v1796
    %v1844 = vmul.f32 %v1775, %v1796
    %v1845 = vmul.f32 %v1776, %v1796
    %v1846 = vmul.f32 %v1777, %v1796
    %v1847 = vmul.f32 %v1778, %v1796
    %v1848 = vmul.f32 %v1779, %v1796
    %v1849 = vmul.f32 %v1780, %v1796
    %v1850 = vmul.f32 %v1781, %v1796
    %v1851 = vmul.f32 %v1782, %v1796
    %v1852 = vmul.f32 %v1783, %v1796
    %v1853 = vmul.f32 %v1784, %v1796
    %v1854 = vmul.f32 %v1785, %v1796
    %v1855 = vmul.f32 %v1786, %v1796
    %v1856 = vmul.f32 %v1787, %v1796
    %v1857 = vmul.f32 %v1788, %v1796
    %v1858 = vmul.f32 %v1789, %v1796
    %v1859 = vmul.f32 %v1790, %v1796
    %v1860 = vmul.f32 %v1791, %v1796
    %v1861 = vadd.f32 %v1664, %v1797
    %v1862 = vadd.f32 %v1665, %v1798
    %v1863 = vadd.f32 %v1666, %v1799
    %v1864 = vadd.f32 %v1667, %v1800
    %v1865 = vadd.f32 %v1668, %v1801
    %v1866 = vadd.f32 %v1669, %v1802
    %v1867 = vadd.f32 %v1670, %v1803
    %v1868 = vadd.f32 %v1671, %v1804
    %v1869 = vadd.f32 %v1672, %v1805
    %v1870 = vadd.f32 %v1673, %v1806
    %v1871 = vadd.f32 %v1674, %v1807
    %v1872 = vadd.f32 %v1675, %v1808
    %v1873 = vadd.f32 %v1676, %v1809
    %v1874 = vadd.f32 %v1677, %v1810
    %v1875 = vadd.f32 %v1678, %v1811
    %v1876 = vadd.f32 %v1679, %v1812
    %v1877 = vadd.f32 %v1680, %v1813
    %v1878 = vadd.f32 %v1681, %v1814
    %v1879 = vadd.f32 %v1682, %v1815
    %v1880 = vadd.f32 %v1683, %v1816
    %v1881 = vadd.f32 %v1684, %v1817
    %v1882 = vadd.f32 %v1685, %v1818
    %v1883 = vadd.f32 %v1686, %v1819
    %v1884 = vadd.f32 %v1687, %v1820
    %v1885 = vadd.f32 %v1688, %v1821
    %v1886 = vadd.f32 %v1689, %v1822
    %v1887 = vadd.f32 %v1690, %v1823
    %v1888 = vadd.f32 %v1691, %v1824
    %v1889 = vadd.f32 %v1692, %v1825
    %v1890 = vadd.f32 %v1693, %v1826
    %v1891 = vadd.f32 %v1694, %v1827
    %v1892 = vadd.f32 %v1695, %v1828
    %v1893 = vadd.f32 %v1696, %v1829
    %v1894 = vadd.f32 %v1697, %v1830
    %v1895 = vadd.f32 %v1698, %v1831
    %v1896 = vadd.f32 %v1699, %v1832
    %v1897 = vadd.f32 %v1700, %v1833
    %v1898 = vadd.f32 %v1701, %v1834
    %v1899 = vadd.f32 %v1702, %v1835
    %v1900 = vadd.f32 %v1703, %v1836
    %v1901 = vadd.f32 %v1704, %v1837
    %v1902 = vadd.f32 %v1705, %v1838
    %v1903 = vadd.f32 %v1706, %v1839
    %v1904 = vadd.f32 %v1707, %v1840
    %v1905 = vadd.f32 %v1708, %v1841
    %v1906 = vadd.f32 %v1709, %v1842
    %v1907 = vadd.f32 %v1710, %v1843
    %v1908 = vadd.f32 %v1711, %v1844
    %v1909 = vadd.f32 %v1712, %v1845
    %v1910 = vadd.f32 %v1713, %v1846
    %v1911 = vadd.f32 %v1714, %v1847
    %v1912 = vadd.f32 %v1715, %v1848
    %v1913 = vadd.f32 %v1716, %v1849
    %v1914 = vadd.f32 %v1717, %v1850
    %v1915 = vadd.f32 %v1718, %v1851
    %v1916 = vadd.f32 %v1719, %v1852
    %v1917 = vadd.f32 %v1720, %v1853
    %v1918 = vadd.f32 %v1721, %v1854
    %v1919 = vadd.f32 %v1722, %v1855
    %v1920 = vadd.f32 %v1723, %v1856
    %v1921 = vadd.f32 %v1724, %v1857
    %v1922 = vadd.f32 %v1725, %v1858
    %v1923 = vadd.f32 %v1726, %v1859
    %v1924 = vadd.f32 %v1727, %v1860
    %v1925 = vld [vmem:[%s1072 + $0x1] sm:$0xff]
    %v1926 = vld [vmem:[%s1072 + $0x9] sm:$0xff]
    %v1927 = vld [vmem:[%s1072 + $0x19] sm:$0xff]
    %v1928 = vld [vmem:[%s1072 + $0x21] sm:$0xff]
    %v1929 = vld [vmem:[%s1072 + $0x31] sm:$0xff]
    %v1930 = vld [vmem:[%s1072 + $0x39] sm:$0xff]
    %v1931 = vld [vmem:[%s1072 + $0x49] sm:$0xff]
    %v1932 = vld [vmem:[%s1072 + $0x51] sm:$0xff]
    %v1933 = vld [vmem:[%s1072 + $0x61] sm:$0xff]
    %v1934 = vld [vmem:[%s1072 + $0x69] sm:$0xff]
    %v1935 = vld [vmem:[%s1072 + $0x79] sm:$0xff]
    %v1936 = vld [vmem:[%s1072 + $0x81] sm:$0xff]
    %v1937 = vld [vmem:[%s1072 + $0x91] sm:$0xff]
    %v1938 = vld [vmem:[%s1072 + $0x99] sm:$0xff]
    %v1939 = vld [vmem:[%s1072 + $0xa9] sm:$0xff]
    %v1940 = vld [vmem:[%s1072 + $0xb1] sm:$0xff]
    %v1941 = vld [vmem:[%s1072 + $0xc1] sm:$0xff]
    %v1942 = vld [vmem:[%s1072 + $0xc9] sm:$0xff]
    %v1943 = vld [vmem:[%s1072 + $0xd9] sm:$0xff]
    %v1944 = vld [vmem:[%s1072 + $0xe1] sm:$0xff]
    %v1945 = vld [vmem:[%s1072 + $0xf1] sm:$0xff]
    %v1946 = vld [vmem:[%s1072 + $0xf9] sm:$0xff]
    %v1947 = vld [vmem:[%s1072 + $0x109] sm:$0xff]
    %v1948 = vld [vmem:[%s1072 + $0x111] sm:$0xff]
    %v1949 = vld [vmem:[%s1072 + $0x121] sm:$0xff]
    %v1950 = vld [vmem:[%s1072 + $0x129] sm:$0xff]
    %v1951 = vld [vmem:[%s1072 + $0x139] sm:$0xff]
    %v1952 = vld [vmem:[%s1072 + $0x141] sm:$0xff]
    %v1953 = vld [vmem:[%s1072 + $0x151] sm:$0xff]
    %v1954 = vld [vmem:[%s1072 + $0x159] sm:$0xff]
    %v1955 = vld [vmem:[%s1072 + $0x169] sm:$0xff]
    %v1956 = vld [vmem:[%s1072 + $0x171] sm:$0xff]
    %v1957 = vld [vmem:[%s1072 + $0x1b1] sm:$0xff]
    %v1958 = vld [vmem:[%s1072 + $0x1b9] sm:$0xff]
    %v1959 = vld [vmem:[%s1072 + $0x1c9] sm:$0xff]
    %v1960 = vld [vmem:[%s1072 + $0x1d1] sm:$0xff]
    %v1961 = vld [vmem:[%s1072 + $0x1e1] sm:$0xff]
    %v1962 = vld [vmem:[%s1072 + $0x1e9] sm:$0xff]
    %v1963 = vld [vmem:[%s1072 + $0x1f9] sm:$0xff]
    %v1964 = vld [vmem:[%s1072 + $0x201] sm:$0xff]
    %v1965 = vld [vmem:[%s1072 + $0x211] sm:$0xff]
    %v1966 = vld [vmem:[%s1072 + $0x219] sm:$0xff]
    %v1967 = vld [vmem:[%s1072 + $0x229] sm:$0xff]
    %v1968 = vld [vmem:[%s1072 + $0x231] sm:$0xff]
    %v1969 = vld [vmem:[%s1072 + $0x241] sm:$0xff]
    %v1970 = vld [vmem:[%s1072 + $0x249] sm:$0xff]
    %v1971 = vld [vmem:[%s1072 + $0x259] sm:$0xff]
    %v1972 = vld [vmem:[%s1072 + $0x261] sm:$0xff]
    %v1973 = vld [vmem:[%s1072 + $0x271] sm:$0xff]
    %v1974 = vld [vmem:[%s1072 + $0x279] sm:$0xff]
    %v1975 = vld [vmem:[%s1072 + $0x289] sm:$0xff]
    %v1976 = vld [vmem:[%s1072 + $0x291] sm:$0xff]
    %v1977 = vld [vmem:[%s1072 + $0x2a1] sm:$0xff]
    %v1978 = vld [vmem:[%s1072 + $0x2a9] sm:$0xff]
    %v1979 = vld [vmem:[%s1072 + $0x2b9] sm:$0xff]
    %v1980 = vld [vmem:[%s1072 + $0x2c1] sm:$0xff]
    %v1981 = vld [vmem:[%s1072 + $0x2d1] sm:$0xff]
    %v1982 = vld [vmem:[%s1072 + $0x2d9] sm:$0xff]
    %v1983 = vld [vmem:[%s1072 + $0x2e9] sm:$0xff]
    %v1984 = vld [vmem:[%s1072 + $0x2f1] sm:$0xff]
    %v1985 = vld [vmem:[%s1072 + $0x301] sm:$0xff]
    %v1986 = vld [vmem:[%s1072 + $0x309] sm:$0xff]
    %v1987 = vld [vmem:[%s1072 + $0x319] sm:$0xff]
    %v1988 = vld [vmem:[%s1072 + $0x321] sm:$0xff]
    %v1989 = vld [vmem:[%s3 + $0x4] sm:$0x1]
    %v1990 = vlaneseq
    %v1991 = vshrl.u32 %v1990, 7
    %v1992 = vsub.s32 0, %v1991
    %v1993 = vrot.slane %v1989, %v1992
    %v1994 = vmul.f32 %v1925, %v1993
    %v1995 = vmul.f32 %v1926, %v1993
    %v1996 = vmul.f32 %v1927, %v1993
    %v1997 = vmul.f32 %v1928, %v1993
    %v1998 = vmul.f32 %v1929, %v1993
    %v1999 = vmul.f32 %v1930, %v1993
    %v2000 = vmul.f32 %v1931, %v1993
    %v2001 = vmul.f32 %v1932, %v1993
    %v2002 = vmul.f32 %v1933, %v1993
    %v2003 = vmul.f32 %v1934, %v1993
    %v2004 = vmul.f32 %v1935, %v1993
    %v2005 = vmul.f32 %v1936, %v1993
    %v2006 = vmul.f32 %v1937, %v1993
    %v2007 = vmul.f32 %v1938, %v1993
    %v2008 = vmul.f32 %v1939, %v1993
    %v2009 = vmul.f32 %v1940, %v1993
    %v2010 = vmul.f32 %v1941, %v1993
    %v2011 = vmul.f32 %v1942, %v1993
    %v2012 = vmul.f32 %v1943, %v1993
    %v2013 = vmul.f32 %v1944, %v1993
    %v2014 = vmul.f32 %v1945, %v1993
    %v2015 = vmul.f32 %v1946, %v1993
    %v2016 = vmul.f32 %v1947, %v1993
    %v2017 = vmul.f32 %v1948, %v1993
    %v2018 = vmul.f32 %v1949, %v1993
    %v2019 = vmul.f32 %v1950, %v1993
    %v2020 = vmul.f32 %v1951, %v1993
    %v2021 = vmul.f32 %v1952, %v1993
    %v2022 = vmul.f32 %v1953, %v1993
    %v2023 = vmul.f32 %v1954, %v1993
    %v2024 = vmul.f32 %v1955, %v1993
    %v2025 = vmul.f32 %v1956, %v1993
    %v2026 = vmul.f32 %v1957, %v1993
    %v2027 = vmul.f32 %v1958, %v1993
    %v2028 = vmul.f32 %v1959, %v1993
    %v2029 = vmul.f32 %v1960, %v1993
    %v2030 = vmul.f32 %v1961, %v1993
    %v2031 = vmul.f32 %v1962, %v1993
    %v2032 = vmul.f32 %v1963, %v1993
    %v2033 = vmul.f32 %v1964, %v1993
    %v2034 = vmul.f32 %v1965, %v1993
    %v2035 = vmul.f32 %v1966, %v1993
    %v2036 = vmul.f32 %v1967, %v1993
    %v2037 = vmul.f32 %v1968, %v1993
    %v2038 = vmul.f32 %v1969, %v1993
    %v2039 = vmul.f32 %v1970, %v1993
    %v2040 = vmul.f32 %v1971, %v1993
    %v2041 = vmul.f32 %v1972, %v1993
    %v2042 = vmul.f32 %v1973, %v1993
    %v2043 = vmul.f32 %v1974, %v1993
    %v2044 = vmul.f32 %v1975, %v1993
    %v2045 = vmul.f32 %v1976, %v1993
    %v2046 = vmul.f32 %v1977, %v1993
    %v2047 = vmul.f32 %v1978, %v1993
    %v2048 = vmul.f32 %v1979, %v1993
    %v2049 = vmul.f32 %v1980, %v1993
    %v2050 = vmul.f32 %v1981, %v1993
    %v2051 = vmul.f32 %v1982, %v1993
    %v2052 = vmul.f32 %v1983, %v1993
    %v2053 = vmul.f32 %v1984, %v1993
    %v2054 = vmul.f32 %v1985, %v1993
    %v2055 = vmul.f32 %v1986, %v1993
    %v2056 = vmul.f32 %v1987, %v1993
    %v2057 = vmul.f32 %v1988, %v1993
    %v2058 = vadd.f32 %v1861, %v1994
    %v2059 = vadd.f32 %v1862, %v1995
    %v2060 = vadd.f32 %v1863, %v1996
    %v2061 = vadd.f32 %v1864, %v1997
    %v2062 = vadd.f32 %v1865, %v1998
    %v2063 = vadd.f32 %v1866, %v1999
    %v2064 = vadd.f32 %v1867, %v2000
    %v2065 = vadd.f32 %v1868, %v2001
    %v2066 = vadd.f32 %v1869, %v2002
    %v2067 = vadd.f32 %v1870, %v2003
    %v2068 = vadd.f32 %v1871, %v2004
    %v2069 = vadd.f32 %v1872, %v2005
    %v2070 = vadd.f32 %v1873, %v2006
    %v2071 = vadd.f32 %v1874, %v2007
    %v2072 = vadd.f32 %v1875, %v2008
    %v2073 = vadd.f32 %v1876, %v2009
    %v2074 = vadd.f32 %v1877, %v2010
    %v2075 = vadd.f32 %v1878, %v2011
    %v2076 = vadd.f32 %v1879, %v2012
    %v2077 = vadd.f32 %v1880, %v2013
    %v2078 = vadd.f32 %v1881, %v2014
    %v2079 = vadd.f32 %v1882, %v2015
    %v2080 = vadd.f32 %v1883, %v2016
    %v2081 = vadd.f32 %v1884, %v2017
    %v2082 = vadd.f32 %v1885, %v2018
    %v2083 = vadd.f32 %v1886, %v2019
    %v2084 = vadd.f32 %v1887, %v2020
    %v2085 = vadd.f32 %v1888, %v2021
    %v2086 = vadd.f32 %v1889, %v2022
    %v2087 = vadd.f32 %v1890, %v2023
    %v2088 = vadd.f32 %v1891, %v2024
    %v2089 = vadd.f32 %v1892, %v2025
    %v2090 = vadd.f32 %v1893, %v2026
    %v2091 = vadd.f32 %v1894, %v2027
    %v2092 = vadd.f32 %v1895, %v2028
    %v2093 = vadd.f32 %v1896, %v2029
    %v2094 = vadd.f32 %v1897, %v2030
    %v2095 = vadd.f32 %v1898, %v2031
    %v2096 = vadd.f32 %v1899, %v2032
    %v2097 = vadd.f32 %v1900, %v2033
    %v2098 = vadd.f32 %v1901, %v2034
    %v2099 = vadd.f32 %v1902, %v2035
    %v2100 = vadd.f32 %v1903, %v2036
    %v2101 = vadd.f32 %v1904, %v2037
    %v2102 = vadd.f32 %v1905, %v2038
    %v2103 = vadd.f32 %v1906, %v2039
    %v2104 = vadd.f32 %v1907, %v2040
    %v2105 = vadd.f32 %v1908, %v2041
    %v2106 = vadd.f32 %v1909, %v2042
    %v2107 = vadd.f32 %v1910, %v2043
    %v2108 = vadd.f32 %v1911, %v2044
    %v2109 = vadd.f32 %v1912, %v2045
    %v2110 = vadd.f32 %v1913, %v2046
    %v2111 = vadd.f32 %v1914, %v2047
    %v2112 = vadd.f32 %v1915, %v2048
    %v2113 = vadd.f32 %v1916, %v2049
    %v2114 = vadd.f32 %v1917, %v2050
    %v2115 = vadd.f32 %v1918, %v2051
    %v2116 = vadd.f32 %v1919, %v2052
    %v2117 = vadd.f32 %v1920, %v2053
    %v2118 = vadd.f32 %v1921, %v2054
    %v2119 = vadd.f32 %v1922, %v2055
    %v2120 = vadd.f32 %v1923, %v2056
    %v2121 = vadd.f32 %v1924, %v2057
    %v2122 = vld [vmem:[%s1072 + $0x2] sm:$0xff]
    %v2123 = vld [vmem:[%s1072 + $0xa] sm:$0xff]
    %v2124 = vld [vmem:[%s1072 + $0x1a] sm:$0xff]
    %v2125 = vld [vmem:[%s1072 + $0x22] sm:$0xff]
    %v2126 = vld [vmem:[%s1072 + $0x32] sm:$0xff]
    %v2127 = vld [vmem:[%s1072 + $0x3a] sm:$0xff]
    %v2128 = vld [vmem:[%s1072 + $0x4a] sm:$0xff]
    %v2129 = vld [vmem:[%s1072 + $0x52] sm:$0xff]
    %v2130 = vld [vmem:[%s1072 + $0x62] sm:$0xff]
    %v2131 = vld [vmem:[%s1072 + $0x6a] sm:$0xff]
    %v2132 = vld [vmem:[%s1072 + $0x7a] sm:$0xff]
    %v2133 = vld [vmem:[%s1072 + $0x82] sm:$0xff]
    %v2134 = vld [vmem:[%s1072 + $0x92] sm:$0xff]
    %v2135 = vld [vmem:[%s1072 + $0x9a] sm:$0xff]
    %v2136 = vld [vmem:[%s1072 + $0xaa] sm:$0xff]
    %v2137 = vld [vmem:[%s1072 + $0xb2] sm:$0xff]
    %v2138 = vld [vmem:[%s1072 + $0xc2] sm:$0xff]
    %v2139 = vld [vmem:[%s1072 + $0xca] sm:$0xff]
    %v2140 = vld [vmem:[%s1072 + $0xda] sm:$0xff]
    %v2141 = vld [vmem:[%s1072 + $0xe2] sm:$0xff]
    %v2142 = vld [vmem:[%s1072 + $0xf2] sm:$0xff]
    %v2143 = vld [vmem:[%s1072 + $0xfa] sm:$0xff]
    %v2144 = vld [vmem:[%s1072 + $0x10a] sm:$0xff]
    %v2145 = vld [vmem:[%s1072 + $0x112] sm:$0xff]
    %v2146 = vld [vmem:[%s1072 + $0x122] sm:$0xff]
    %v2147 = vld [vmem:[%s1072 + $0x12a] sm:$0xff]
    %v2148 = vld [vmem:[%s1072 + $0x13a] sm:$0xff]
    %v2149 = vld [vmem:[%s1072 + $0x142] sm:$0xff]
    %v2150 = vld [vmem:[%s1072 + $0x152] sm:$0xff]
    %v2151 = vld [vmem:[%s1072 + $0x15a] sm:$0xff]
    %v2152 = vld [vmem:[%s1072 + $0x16a] sm:$0xff]
    %v2153 = vld [vmem:[%s1072 + $0x172] sm:$0xff]
    %v2154 = vld [vmem:[%s1072 + $0x1b2] sm:$0xff]
    %v2155 = vld [vmem:[%s1072 + $0x1ba] sm:$0xff]
    %v2156 = vld [vmem:[%s1072 + $0x1ca] sm:$0xff]
    %v2157 = vld [vmem:[%s1072 + $0x1d2] sm:$0xff]
    %v2158 = vld [vmem:[%s1072 + $0x1e2] sm:$0xff]
    %v2159 = vld [vmem:[%s1072 + $0x1ea] sm:$0xff]
    %v2160 = vld [vmem:[%s1072 + $0x1fa] sm:$0xff]
    %v2161 = vld [vmem:[%s1072 + $0x202] sm:$0xff]
    %v2162 = vld [vmem:[%s1072 + $0x212] sm:$0xff]
    %v2163 = vld [vmem:[%s1072 + $0x21a] sm:$0xff]
    %v2164 = vld [vmem:[%s1072 + $0x22a] sm:$0xff]
    %v2165 = vld [vmem:[%s1072 + $0x232] sm:$0xff]
    %v2166 = vld [vmem:[%s1072 + $0x242] sm:$0xff]
    %v2167 = vld [vmem:[%s1072 + $0x24a] sm:$0xff]
    %v2168 = vld [vmem:[%s1072 + $0x25a] sm:$0xff]
    %v2169 = vld [vmem:[%s1072 + $0x262] sm:$0xff]
    %v2170 = vld [vmem:[%s1072 + $0x272] sm:$0xff]
    %v2171 = vld [vmem:[%s1072 + $0x27a] sm:$0xff]
    %v2172 = vld [vmem:[%s1072 + $0x28a] sm:$0xff]
    %v2173 = vld [vmem:[%s1072 + $0x292] sm:$0xff]
    %v2174 = vld [vmem:[%s1072 + $0x2a2] sm:$0xff]
    %v2175 = vld [vmem:[%s1072 + $0x2aa] sm:$0xff]
    %v2176 = vld [vmem:[%s1072 + $0x2ba] sm:$0xff]
    %v2177 = vld [vmem:[%s1072 + $0x2c2] sm:$0xff]
    %v2178 = vld [vmem:[%s1072 + $0x2d2] sm:$0xff]
    %v2179 = vld [vmem:[%s1072 + $0x2da] sm:$0xff]
    %v2180 = vld [vmem:[%s1072 + $0x2ea] sm:$0xff]
    %v2181 = vld [vmem:[%s1072 + $0x2f2] sm:$0xff]
    %v2182 = vld [vmem:[%s1072 + $0x302] sm:$0xff]
    %v2183 = vld [vmem:[%s1072 + $0x30a] sm:$0xff]
    %v2184 = vld [vmem:[%s1072 + $0x31a] sm:$0xff]
    %v2185 = vld [vmem:[%s1072 + $0x322] sm:$0xff]
    %v2186 = vld [vmem:[%s3 + $0x5] sm:$0x1]
    %v2187 = vlaneseq
    %v2188 = vshrl.u32 %v2187, 7
    %v2189 = vsub.s32 0, %v2188
    %v2190 = vrot.slane %v2186, %v2189
    %v2191 = vmul.f32 %v2122, %v2190
    %v2192 = vmul.f32 %v2123, %v2190
    %v2193 = vmul.f32 %v2124, %v2190
    %v2194 = vmul.f32 %v2125, %v2190
    %v2195 = vmul.f32 %v2126, %v2190
    %v2196 = vmul.f32 %v2127, %v2190
    %v2197 = vmul.f32 %v2128, %v2190
    %v2198 = vmul.f32 %v2129, %v2190
    %v2199 = vmul.f32 %v2130, %v2190
    %v2200 = vmul.f32 %v2131, %v2190
    %v2201 = vmul.f32 %v2132, %v2190
    %v2202 = vmul.f32 %v2133, %v2190
    %v2203 = vmul.f32 %v2134, %v2190
    %v2204 = vmul.f32 %v2135, %v2190
    %v2205 = vmul.f32 %v2136, %v2190
    %v2206 = vmul.f32 %v2137, %v2190
    %v2207 = vmul.f32 %v2138, %v2190
    %v2208 = vmul.f32 %v2139, %v2190
    %v2209 = vmul.f32 %v2140, %v2190
    %v2210 = vmul.f32 %v2141, %v2190
    %v2211 = vmul.f32 %v2142, %v2190
    %v2212 = vmul.f32 %v2143, %v2190
    %v2213 = vmul.f32 %v2144, %v2190
    %v2214 = vmul.f32 %v2145, %v2190
    %v2215 = vmul.f32 %v2146, %v2190
    %v2216 = vmul.f32 %v2147, %v2190
    %v2217 = vmul.f32 %v2148, %v2190
    %v2218 = vmul.f32 %v2149, %v2190
    %v2219 = vmul.f32 %v2150, %v2190
    %v2220 = vmul.f32 %v2151, %v2190
    %v2221 = vmul.f32 %v2152, %v2190
    %v2222 = vmul.f32 %v2153, %v2190
    %v2223 = vmul.f32 %v2154, %v2190
    %v2224 = vmul.f32 %v2155, %v2190
    %v2225 = vmul.f32 %v2156, %v2190
    %v2226 = vmul.f32 %v2157, %v2190
    %v2227 = vmul.f32 %v2158, %v2190
    %v2228 = vmul.f32 %v2159, %v2190
    %v2229 = vmul.f32 %v2160, %v2190
    %v2230 = vmul.f32 %v2161, %v2190
    %v2231 = vmul.f32 %v2162, %v2190
    %v2232 = vmul.f32 %v2163, %v2190
    %v2233 = vmul.f32 %v2164, %v2190
    %v2234 = vmul.f32 %v2165, %v2190
    %v2235 = vmul.f32 %v2166, %v2190
    %v2236 = vmul.f32 %v2167, %v2190
    %v2237 = vmul.f32 %v2168, %v2190
    %v2238 = vmul.f32 %v2169, %v2190
    %v2239 = vmul.f32 %v2170, %v2190
    %v2240 = vmul.f32 %v2171, %v2190
    %v2241 = vmul.f32 %v2172, %v2190
    %v2242 = vmul.f32 %v2173, %v2190
    %v2243 = vmul.f32 %v2174, %v2190
    %v2244 = vmul.f32 %v2175, %v2190
    %v2245 = vmul.f32 %v2176, %v2190
    %v2246 = vmul.f32 %v2177, %v2190
    %v2247 = vmul.f32 %v2178, %v2190
    %v2248 = vmul.f32 %v2179, %v2190
    %v2249 = vmul.f32 %v2180, %v2190
    %v2250 = vmul.f32 %v2181, %v2190
    %v2251 = vmul.f32 %v2182, %v2190
    %v2252 = vmul.f32 %v2183, %v2190
    %v2253 = vmul.f32 %v2184, %v2190
    %v2254 = vmul.f32 %v2185, %v2190
    %v2255 = vadd.f32 %v2058, %v2191
    %v2256 = vadd.f32 %v2059, %v2192
    %v2257 = vadd.f32 %v2060, %v2193
    %v2258 = vadd.f32 %v2061, %v2194
    %v2259 = vadd.f32 %v2062, %v2195
    %v2260 = vadd.f32 %v2063, %v2196
    %v2261 = vadd.f32 %v2064, %v2197
    %v2262 = vadd.f32 %v2065, %v2198
    %v2263 = vadd.f32 %v2066, %v2199
    %v2264 = vadd.f32 %v2067, %v2200
    %v2265 = vadd.f32 %v2068, %v2201
    %v2266 = vadd.f32 %v2069, %v2202
    %v2267 = vadd.f32 %v2070, %v2203
    %v2268 = vadd.f32 %v2071, %v2204
    %v2269 = vadd.f32 %v2072, %v2205
    %v2270 = vadd.f32 %v2073, %v2206
    %v2271 = vadd.f32 %v2074, %v2207
    %v2272 = vadd.f32 %v2075, %v2208
    %v2273 = vadd.f32 %v2076, %v2209
    %v2274 = vadd.f32 %v2077, %v2210
    %v2275 = vadd.f32 %v2078, %v2211
    %v2276 = vadd.f32 %v2079, %v2212
    %v2277 = vadd.f32 %v2080, %v2213
    %v2278 = vadd.f32 %v2081, %v2214
    %v2279 = vadd.f32 %v2082, %v2215
    %v2280 = vadd.f32 %v2083, %v2216
    %v2281 = vadd.f32 %v2084, %v2217
    %v2282 = vadd.f32 %v2085, %v2218
    %v2283 = vadd.f32 %v2086, %v2219
    %v2284 = vadd.f32 %v2087, %v2220
    %v2285 = vadd.f32 %v2088, %v2221
    %v2286 = vadd.f32 %v2089, %v2222
    %v2287 = vadd.f32 %v2090, %v2223
    %v2288 = vadd.f32 %v2091, %v2224
    %v2289 = vadd.f32 %v2092, %v2225
    %v2290 = vadd.f32 %v2093, %v2226
    %v2291 = vadd.f32 %v2094, %v2227
    %v2292 = vadd.f32 %v2095, %v2228
    %v2293 = vadd.f32 %v2096, %v2229
    %v2294 = vadd.f32 %v2097, %v2230
    %v2295 = vadd.f32 %v2098, %v2231
    %v2296 = vadd.f32 %v2099, %v2232
    %v2297 = vadd.f32 %v2100, %v2233
    %v2298 = vadd.f32 %v2101, %v2234
    %v2299 = vadd.f32 %v2102, %v2235
    %v2300 = vadd.f32 %v2103, %v2236
    %v2301 = vadd.f32 %v2104, %v2237
    %v2302 = vadd.f32 %v2105, %v2238
    %v2303 = vadd.f32 %v2106, %v2239
    %v2304 = vadd.f32 %v2107, %v2240
    %v2305 = vadd.f32 %v2108, %v2241
    %v2306 = vadd.f32 %v2109, %v2242
    %v2307 = vadd.f32 %v2110, %v2243
    %v2308 = vadd.f32 %v2111, %v2244
    %v2309 = vadd.f32 %v2112, %v2245
    %v2310 = vadd.f32 %v2113, %v2246
    %v2311 = vadd.f32 %v2114, %v2247
    %v2312 = vadd.f32 %v2115, %v2248
    %v2313 = vadd.f32 %v2116, %v2249
    %v2314 = vadd.f32 %v2117, %v2250
    %v2315 = vadd.f32 %v2118, %v2251
    %v2316 = vadd.f32 %v2119, %v2252
    %v2317 = vadd.f32 %v2120, %v2253
    %v2318 = vadd.f32 %v2121, %v2254
    %s2319 = scalar_lea.vmem [#allocation2], 48
    %v2320 = vld [vmem:[%s2319] sm:$0xff]
    %v2321 = vld [vmem:[%s2319 + $0x8] sm:$0xff]
    %v2322 = vld [vmem:[%s2319 + $0x18] sm:$0xff]
    %v2323 = vld [vmem:[%s2319 + $0x20] sm:$0xff]
    %v2324 = vld [vmem:[%s2319 + $0x30] sm:$0xff]
    %v2325 = vld [vmem:[%s2319 + $0x38] sm:$0xff]
    %v2326 = vld [vmem:[%s2319 + $0x48] sm:$0xff]
    %v2327 = vld [vmem:[%s2319 + $0x50] sm:$0xff]
    %v2328 = vld [vmem:[%s2319 + $0x60] sm:$0xff]
    %v2329 = vld [vmem:[%s2319 + $0x68] sm:$0xff]
    %v2330 = vld [vmem:[%s2319 + $0x78] sm:$0xff]
    %v2331 = vld [vmem:[%s2319 + $0x80] sm:$0xff]
    %v2332 = vld [vmem:[%s2319 + $0x90] sm:$0xff]
    %v2333 = vld [vmem:[%s2319 + $0x98] sm:$0xff]
    %v2334 = vld [vmem:[%s2319 + $0xa8] sm:$0xff]
    %v2335 = vld [vmem:[%s2319 + $0xb0] sm:$0xff]
    %v2336 = vld [vmem:[%s2319 + $0xc0] sm:$0xff]
    %v2337 = vld [vmem:[%s2319 + $0xc8] sm:$0xff]
    %v2338 = vld [vmem:[%s2319 + $0xd8] sm:$0xff]
    %v2339 = vld [vmem:[%s2319 + $0xe0] sm:$0xff]
    %v2340 = vld [vmem:[%s2319 + $0xf0] sm:$0xff]
    %v2341 = vld [vmem:[%s2319 + $0xf8] sm:$0xff]
    %v2342 = vld [vmem:[%s2319 + $0x108] sm:$0xff]
    %v2343 = vld [vmem:[%s2319 + $0x110] sm:$0xff]
    %v2344 = vld [vmem:[%s2319 + $0x120] sm:$0xff]
    %v2345 = vld [vmem:[%s2319 + $0x128] sm:$0xff]
    %v2346 = vld [vmem:[%s2319 + $0x138] sm:$0xff]
    %v2347 = vld [vmem:[%s2319 + $0x140] sm:$0xff]
    %v2348 = vld [vmem:[%s2319 + $0x150] sm:$0xff]
    %v2349 = vld [vmem:[%s2319 + $0x158] sm:$0xff]
    %v2350 = vld [vmem:[%s2319 + $0x168] sm:$0xff]
    %v2351 = vld [vmem:[%s2319 + $0x170] sm:$0xff]
    %v2352 = vld [vmem:[%s2319 + $0x1b0] sm:$0xff]
    %v2353 = vld [vmem:[%s2319 + $0x1b8] sm:$0xff]
    %v2354 = vld [vmem:[%s2319 + $0x1c8] sm:$0xff]
    %v2355 = vld [vmem:[%s2319 + $0x1d0] sm:$0xff]
    %v2356 = vld [vmem:[%s2319 + $0x1e0] sm:$0xff]
    %v2357 = vld [vmem:[%s2319 + $0x1e8] sm:$0xff]
    %v2358 = vld [vmem:[%s2319 + $0x1f8] sm:$0xff]
    %v2359 = vld [vmem:[%s2319 + $0x200] sm:$0xff]
    %v2360 = vld [vmem:[%s2319 + $0x210] sm:$0xff]
    %v2361 = vld [vmem:[%s2319 + $0x218] sm:$0xff]
    %v2362 = vld [vmem:[%s2319 + $0x228] sm:$0xff]
    %v2363 = vld [vmem:[%s2319 + $0x230] sm:$0xff]
    %v2364 = vld [vmem:[%s2319 + $0x240] sm:$0xff]
    %v2365 = vld [vmem:[%s2319 + $0x248] sm:$0xff]
    %v2366 = vld [vmem:[%s2319 + $0x258] sm:$0xff]
    %v2367 = vld [vmem:[%s2319 + $0x260] sm:$0xff]
    %v2368 = vld [vmem:[%s2319 + $0x270] sm:$0xff]
    %v2369 = vld [vmem:[%s2319 + $0x278] sm:$0xff]
    %v2370 = vld [vmem:[%s2319 + $0x288] sm:$0xff]
    %v2371 = vld [vmem:[%s2319 + $0x290] sm:$0xff]
    %v2372 = vld [vmem:[%s2319 + $0x2a0] sm:$0xff]
    %v2373 = vld [vmem:[%s2319 + $0x2a8] sm:$0xff]
    %v2374 = vld [vmem:[%s2319 + $0x2b8] sm:$0xff]
    %v2375 = vld [vmem:[%s2319 + $0x2c0] sm:$0xff]
    %v2376 = vld [vmem:[%s2319 + $0x2d0] sm:$0xff]
    %v2377 = vld [vmem:[%s2319 + $0x2d8] sm:$0xff]
    %v2378 = vld [vmem:[%s2319 + $0x2e8] sm:$0xff]
    %v2379 = vld [vmem:[%s2319 + $0x2f0] sm:$0xff]
    %v2380 = vld [vmem:[%s2319 + $0x300] sm:$0xff]
    %v2381 = vld [vmem:[%s2319 + $0x308] sm:$0xff]
    %v2382 = vld [vmem:[%s2319 + $0x318] sm:$0xff]
    %v2383 = vld [vmem:[%s2319 + $0x320] sm:$0xff]
    %v2384 = vld [vmem:[%s3 + $0x6] sm:$0x1]
    %v2385 = vlaneseq
    %v2386 = vshrl.u32 %v2385, 7
    %v2387 = vsub.s32 0, %v2386
    %v2388 = vrot.slane %v2384, %v2387
    %v2389 = vmul.f32 %v2320, %v2388
    %v2390 = vmul.f32 %v2321, %v2388
    %v2391 = vmul.f32 %v2322, %v2388
    %v2392 = vmul.f32 %v2323, %v2388
    %v2393 = vmul.f32 %v2324, %v2388
    %v2394 = vmul.f32 %v2325, %v2388
    %v2395 = vmul.f32 %v2326, %v2388
    %v2396 = vmul.f32 %v2327, %v2388
    %v2397 = vmul.f32 %v2328, %v2388
    %v2398 = vmul.f32 %v2329, %v2388
    %v2399 = vmul.f32 %v2330, %v2388
    %v2400 = vmul.f32 %v2331, %v2388
    %v2401 = vmul.f32 %v2332, %v2388
    %v2402 = vmul.f32 %v2333, %v2388
    %v2403 = vmul.f32 %v2334, %v2388
    %v2404 = vmul.f32 %v2335, %v2388
    %v2405 = vmul.f32 %v2336, %v2388
    %v2406 = vmul.f32 %v2337, %v2388
    %v2407 = vmul.f32 %v2338, %v2388
    %v2408 = vmul.f32 %v2339, %v2388
    %v2409 = vmul.f32 %v2340, %v2388
    %v2410 = vmul.f32 %v2341, %v2388
    %v2411 = vmul.f32 %v2342, %v2388
    %v2412 = vmul.f32 %v2343, %v2388
    %v2413 = vmul.f32 %v2344, %v2388
    %v2414 = vmul.f32 %v2345, %v2388
    %v2415 = vmul.f32 %v2346, %v2388
    %v2416 = vmul.f32 %v2347, %v2388
    %v2417 = vmul.f32 %v2348, %v2388
    %v2418 = vmul.f32 %v2349, %v2388
    %v2419 = vmul.f32 %v2350, %v2388
    %v2420 = vmul.f32 %v2351, %v2388
    %v2421 = vmul.f32 %v2352, %v2388
    %v2422 = vmul.f32 %v2353, %v2388
    %v2423 = vmul.f32 %v2354, %v2388
    %v2424 = vmul.f32 %v2355, %v2388
    %v2425 = vmul.f32 %v2356, %v2388
    %v2426 = vmul.f32 %v2357, %v2388
    %v2427 = vmul.f32 %v2358, %v2388
    %v2428 = vmul.f32 %v2359, %v2388
    %v2429 = vmul.f32 %v2360, %v2388
    %v2430 = vmul.f32 %v2361, %v2388
    %v2431 = vmul.f32 %v2362, %v2388
    %v2432 = vmul.f32 %v2363, %v2388
    %v2433 = vmul.f32 %v2364, %v2388
    %v2434 = vmul.f32 %v2365, %v2388
    %v2435 = vmul.f32 %v2366, %v2388
    %v2436 = vmul.f32 %v2367, %v2388
    %v2437 = vmul.f32 %v2368, %v2388
    %v2438 = vmul.f32 %v2369, %v2388
    %v2439 = vmul.f32 %v2370, %v2388
    %v2440 = vmul.f32 %v2371, %v2388
    %v2441 = vmul.f32 %v2372, %v2388
    %v2442 = vmul.f32 %v2373, %v2388
    %v2443 = vmul.f32 %v2374, %v2388
    %v2444 = vmul.f32 %v2375, %v2388
    %v2445 = vmul.f32 %v2376, %v2388
    %v2446 = vmul.f32 %v2377, %v2388
    %v2447 = vmul.f32 %v2378, %v2388
    %v2448 = vmul.f32 %v2379, %v2388
    %v2449 = vmul.f32 %v2380, %v2388
    %v2450 = vmul.f32 %v2381, %v2388
    %v2451 = vmul.f32 %v2382, %v2388
    %v2452 = vmul.f32 %v2383, %v2388
    %v2453 = vadd.f32 %v2255, %v2389
    %v2454 = vadd.f32 %v2256, %v2390
    %v2455 = vadd.f32 %v2257, %v2391
    %v2456 = vadd.f32 %v2258, %v2392
    %v2457 = vadd.f32 %v2259, %v2393
    %v2458 = vadd.f32 %v2260, %v2394
    %v2459 = vadd.f32 %v2261, %v2395
    %v2460 = vadd.f32 %v2262, %v2396
    %v2461 = vadd.f32 %v2263, %v2397
    %v2462 = vadd.f32 %v2264, %v2398
    %v2463 = vadd.f32 %v2265, %v2399
    %v2464 = vadd.f32 %v2266, %v2400
    %v2465 = vadd.f32 %v2267, %v2401
    %v2466 = vadd.f32 %v2268, %v2402
    %v2467 = vadd.f32 %v2269, %v2403
    %v2468 = vadd.f32 %v2270, %v2404
    %v2469 = vadd.f32 %v2271, %v2405
    %v2470 = vadd.f32 %v2272, %v2406
    %v2471 = vadd.f32 %v2273, %v2407
    %v2472 = vadd.f32 %v2274, %v2408
    %v2473 = vadd.f32 %v2275, %v2409
    %v2474 = vadd.f32 %v2276, %v2410
    %v2475 = vadd.f32 %v2277, %v2411
    %v2476 = vadd.f32 %v2278, %v2412
    %v2477 = vadd.f32 %v2279, %v2413
    %v2478 = vadd.f32 %v2280, %v2414
    %v2479 = vadd.f32 %v2281, %v2415
    %v2480 = vadd.f32 %v2282, %v2416
    %v2481 = vadd.f32 %v2283, %v2417
    %v2482 = vadd.f32 %v2284, %v2418
    %v2483 = vadd.f32 %v2285, %v2419
    %v2484 = vadd.f32 %v2286, %v2420
    %v2485 = vadd.f32 %v2287, %v2421
    %v2486 = vadd.f32 %v2288, %v2422
    %v2487 = vadd.f32 %v2289, %v2423
    %v2488 = vadd.f32 %v2290, %v2424
    %v2489 = vadd.f32 %v2291, %v2425
    %v2490 = vadd.f32 %v2292, %v2426
    %v2491 = vadd.f32 %v2293, %v2427
    %v2492 = vadd.f32 %v2294, %v2428
    %v2493 = vadd.f32 %v2295, %v2429
    %v2494 = vadd.f32 %v2296, %v2430
    %v2495 = vadd.f32 %v2297, %v2431
    %v2496 = vadd.f32 %v2298, %v2432
    %v2497 = vadd.f32 %v2299, %v2433
    %v2498 = vadd.f32 %v2300, %v2434
    %v2499 = vadd.f32 %v2301, %v2435
    %v2500 = vadd.f32 %v2302, %v2436
    %v2501 = vadd.f32 %v2303, %v2437
    %v2502 = vadd.f32 %v2304, %v2438
    %v2503 = vadd.f32 %v2305, %v2439
    %v2504 = vadd.f32 %v2306, %v2440
    %v2505 = vadd.f32 %v2307, %v2441
    %v2506 = vadd.f32 %v2308, %v2442
    %v2507 = vadd.f32 %v2309, %v2443
    %v2508 = vadd.f32 %v2310, %v2444
    %v2509 = vadd.f32 %v2311, %v2445
    %v2510 = vadd.f32 %v2312, %v2446
    %v2511 = vadd.f32 %v2313, %v2447
    %v2512 = vadd.f32 %v2314, %v2448
    %v2513 = vadd.f32 %v2315, %v2449
    %v2514 = vadd.f32 %v2316, %v2450
    %v2515 = vadd.f32 %v2317, %v2451
    %v2516 = vadd.f32 %v2318, %v2452
    %v2517 = vld [vmem:[%s2319 + $0x1] sm:$0xff]
    %v2518 = vld [vmem:[%s2319 + $0x9] sm:$0xff]
    %v2519 = vld [vmem:[%s2319 + $0x19] sm:$0xff]
    %v2520 = vld [vmem:[%s2319 + $0x21] sm:$0xff]
    %v2521 = vld [vmem:[%s2319 + $0x31] sm:$0xff]
    %v2522 = vld [vmem:[%s2319 + $0x39] sm:$0xff]
    %v2523 = vld [vmem:[%s2319 + $0x49] sm:$0xff]
    %v2524 = vld [vmem:[%s2319 + $0x51] sm:$0xff]
    %v2525 = vld [vmem:[%s2319 + $0x61] sm:$0xff]
    %v2526 = vld [vmem:[%s2319 + $0x69] sm:$0xff]
    %v2527 = vld [vmem:[%s2319 + $0x79] sm:$0xff]
    %v2528 = vld [vmem:[%s2319 + $0x81] sm:$0xff]
    %v2529 = vld [vmem:[%s2319 + $0x91] sm:$0xff]
    %v2530 = vld [vmem:[%s2319 + $0x99] sm:$0xff]
    %v2531 = vld [vmem:[%s2319 + $0xa9] sm:$0xff]
    %v2532 = vld [vmem:[%s2319 + $0xb1] sm:$0xff]
    %v2533 = vld [vmem:[%s2319 + $0xc1] sm:$0xff]
    %v2534 = vld [vmem:[%s2319 + $0xc9] sm:$0xff]
    %v2535 = vld [vmem:[%s2319 + $0xd9] sm:$0xff]
    %v2536 = vld [vmem:[%s2319 + $0xe1] sm:$0xff]
    %v2537 = vld [vmem:[%s2319 + $0xf1] sm:$0xff]
    %v2538 = vld [vmem:[%s2319 + $0xf9] sm:$0xff]
    %v2539 = vld [vmem:[%s2319 + $0x109] sm:$0xff]
    %v2540 = vld [vmem:[%s2319 + $0x111] sm:$0xff]
    %v2541 = vld [vmem:[%s2319 + $0x121] sm:$0xff]
    %v2542 = vld [vmem:[%s2319 + $0x129] sm:$0xff]
    %v2543 = vld [vmem:[%s2319 + $0x139] sm:$0xff]
    %v2544 = vld [vmem:[%s2319 + $0x141] sm:$0xff]
    %v2545 = vld [vmem:[%s2319 + $0x151] sm:$0xff]
    %v2546 = vld [vmem:[%s2319 + $0x159] sm:$0xff]
    %v2547 = vld [vmem:[%s2319 + $0x169] sm:$0xff]
    %v2548 = vld [vmem:[%s2319 + $0x171] sm:$0xff]
    %v2549 = vld [vmem:[%s2319 + $0x1b1] sm:$0xff]
    %v2550 = vld [vmem:[%s2319 + $0x1b9] sm:$0xff]
    %v2551 = vld [vmem:[%s2319 + $0x1c9] sm:$0xff]
    %v2552 = vld [vmem:[%s2319 + $0x1d1] sm:$0xff]
    %v2553 = vld [vmem:[%s2319 + $0x1e1] sm:$0xff]
    %v2554 = vld [vmem:[%s2319 + $0x1e9] sm:$0xff]
    %v2555 = vld [vmem:[%s2319 + $0x1f9] sm:$0xff]
    %v2556 = vld [vmem:[%s2319 + $0x201] sm:$0xff]
    %v2557 = vld [vmem:[%s2319 + $0x211] sm:$0xff]
    %v2558 = vld [vmem:[%s2319 + $0x219] sm:$0xff]
    %v2559 = vld [vmem:[%s2319 + $0x229] sm:$0xff]
    %v2560 = vld [vmem:[%s2319 + $0x231] sm:$0xff]
    %v2561 = vld [vmem:[%s2319 + $0x241] sm:$0xff]
    %v2562 = vld [vmem:[%s2319 + $0x249] sm:$0xff]
    %v2563 = vld [vmem:[%s2319 + $0x259] sm:$0xff]
    %v2564 = vld [vmem:[%s2319 + $0x261] sm:$0xff]
    %v2565 = vld [vmem:[%s2319 + $0x271] sm:$0xff]
    %v2566 = vld [vmem:[%s2319 + $0x279] sm:$0xff]
    %v2567 = vld [vmem:[%s2319 + $0x289] sm:$0xff]
    %v2568 = vld [vmem:[%s2319 + $0x291] sm:$0xff]
    %v2569 = vld [vmem:[%s2319 + $0x2a1] sm:$0xff]
    %v2570 = vld [vmem:[%s2319 + $0x2a9] sm:$0xff]
    %v2571 = vld [vmem:[%s2319 + $0x2b9] sm:$0xff]
    %v2572 = vld [vmem:[%s2319 + $0x2c1] sm:$0xff]
    %v2573 = vld [vmem:[%s2319 + $0x2d1] sm:$0xff]
    %v2574 = vld [vmem:[%s2319 + $0x2d9] sm:$0xff]
    %v2575 = vld [vmem:[%s2319 + $0x2e9] sm:$0xff]
    %v2576 = vld [vmem:[%s2319 + $0x2f1] sm:$0xff]
    %v2577 = vld [vmem:[%s2319 + $0x301] sm:$0xff]
    %v2578 = vld [vmem:[%s2319 + $0x309] sm:$0xff]
    %v2579 = vld [vmem:[%s2319 + $0x319] sm:$0xff]
    %v2580 = vld [vmem:[%s2319 + $0x321] sm:$0xff]
    %v2581 = vld [vmem:[%s3 + $0x7] sm:$0x1]
    %v2582 = vlaneseq
    %v2583 = vshrl.u32 %v2582, 7
    %v2584 = vsub.s32 0, %v2583
    %v2585 = vrot.slane %v2581, %v2584
    %v2586 = vmul.f32 %v2517, %v2585
    %v2587 = vmul.f32 %v2518, %v2585
    %v2588 = vmul.f32 %v2519, %v2585
    %v2589 = vmul.f32 %v2520, %v2585
    %v2590 = vmul.f32 %v2521, %v2585
    %v2591 = vmul.f32 %v2522, %v2585
    %v2592 = vmul.f32 %v2523, %v2585
    %v2593 = vmul.f32 %v2524, %v2585
    %v2594 = vmul.f32 %v2525, %v2585
    %v2595 = vmul.f32 %v2526, %v2585
    %v2596 = vmul.f32 %v2527, %v2585
    %v2597 = vmul.f32 %v2528, %v2585
    %v2598 = vmul.f32 %v2529, %v2585
    %v2599 = vmul.f32 %v2530, %v2585
    %v2600 = vmul.f32 %v2531, %v2585
    %v2601 = vmul.f32 %v2532, %v2585
    %v2602 = vmul.f32 %v2533, %v2585
    %v2603 = vmul.f32 %v2534, %v2585
    %v2604 = vmul.f32 %v2535, %v2585
    %v2605 = vmul.f32 %v2536, %v2585
    %v2606 = vmul.f32 %v2537, %v2585
    %v2607 = vmul.f32 %v2538, %v2585
    %v2608 = vmul.f32 %v2539, %v2585
    %v2609 = vmul.f32 %v2540, %v2585
    %v2610 = vmul.f32 %v2541, %v2585
    %v2611 = vmul.f32 %v2542, %v2585
    %v2612 = vmul.f32 %v2543, %v2585
    %v2613 = vmul.f32 %v2544, %v2585
    %v2614 = vmul.f32 %v2545, %v2585
    %v2615 = vmul.f32 %v2546, %v2585
    %v2616 = vmul.f32 %v2547, %v2585
    %v2617 = vmul.f32 %v2548, %v2585
    %v2618 = vmul.f32 %v2549, %v2585
    %v2619 = vmul.f32 %v2550, %v2585
    %v2620 = vmul.f32 %v2551, %v2585
    %v2621 = vmul.f32 %v2552, %v2585
    %v2622 = vmul.f32 %v2553, %v2585
    %v2623 = vmul.f32 %v2554, %v2585
    %v2624 = vmul.f32 %v2555, %v2585
    %v2625 = vmul.f32 %v2556, %v2585
    %v2626 = vmul.f32 %v2557, %v2585
    %v2627 = vmul.f32 %v2558, %v2585
    %v2628 = vmul.f32 %v2559, %v2585
    %v2629 = vmul.f32 %v2560, %v2585
    %v2630 = vmul.f32 %v2561, %v2585
    %v2631 = vmul.f32 %v2562, %v2585
    %v2632 = vmul.f32 %v2563, %v2585
    %v2633 = vmul.f32 %v2564, %v2585
    %v2634 = vmul.f32 %v2565, %v2585
    %v2635 = vmul.f32 %v2566, %v2585
    %v2636 = vmul.f32 %v2567, %v2585
    %v2637 = vmul.f32 %v2568, %v2585
    %v2638 = vmul.f32 %v2569, %v2585
    %v2639 = vmul.f32 %v2570, %v2585
    %v2640 = vmul.f32 %v2571, %v2585
    %v2641 = vmul.f32 %v2572, %v2585
    %v2642 = vmul.f32 %v2573, %v2585
    %v2643 = vmul.f32 %v2574, %v2585
    %v2644 = vmul.f32 %v2575, %v2585
    %v2645 = vmul.f32 %v2576, %v2585
    %v2646 = vmul.f32 %v2577, %v2585
    %v2647 = vmul.f32 %v2578, %v2585
    %v2648 = vmul.f32 %v2579, %v2585
    %v2649 = vmul.f32 %v2580, %v2585
    %v2650 = vadd.f32 %v2453, %v2586
    %v2651 = vadd.f32 %v2454, %v2587
    %v2652 = vadd.f32 %v2455, %v2588
    %v2653 = vadd.f32 %v2456, %v2589
    %v2654 = vadd.f32 %v2457, %v2590
    %v2655 = vadd.f32 %v2458, %v2591
    %v2656 = vadd.f32 %v2459, %v2592
    %v2657 = vadd.f32 %v2460, %v2593
    %v2658 = vadd.f32 %v2461, %v2594
    %v2659 = vadd.f32 %v2462, %v2595
    %v2660 = vadd.f32 %v2463, %v2596
    %v2661 = vadd.f32 %v2464, %v2597
    %v2662 = vadd.f32 %v2465, %v2598
    %v2663 = vadd.f32 %v2466, %v2599
    %v2664 = vadd.f32 %v2467, %v2600
    %v2665 = vadd.f32 %v2468, %v2601
    %v2666 = vadd.f32 %v2469, %v2602
    %v2667 = vadd.f32 %v2470, %v2603
    %v2668 = vadd.f32 %v2471, %v2604
    %v2669 = vadd.f32 %v2472, %v2605
    %v2670 = vadd.f32 %v2473, %v2606
    %v2671 = vadd.f32 %v2474, %v2607
    %v2672 = vadd.f32 %v2475, %v2608
    %v2673 = vadd.f32 %v2476, %v2609
    %v2674 = vadd.f32 %v2477, %v2610
    %v2675 = vadd.f32 %v2478, %v2611
    %v2676 = vadd.f32 %v2479, %v2612
    %v2677 = vadd.f32 %v2480, %v2613
    %v2678 = vadd.f32 %v2481, %v2614
    %v2679 = vadd.f32 %v2482, %v2615
    %v2680 = vadd.f32 %v2483, %v2616
    %v2681 = vadd.f32 %v2484, %v2617
    %v2682 = vadd.f32 %v2485, %v2618
    %v2683 = vadd.f32 %v2486, %v2619
    %v2684 = vadd.f32 %v2487, %v2620
    %v2685 = vadd.f32 %v2488, %v2621
    %v2686 = vadd.f32 %v2489, %v2622
    %v2687 = vadd.f32 %v2490, %v2623
    %v2688 = vadd.f32 %v2491, %v2624
    %v2689 = vadd.f32 %v2492, %v2625
    %v2690 = vadd.f32 %v2493, %v2626
    %v2691 = vadd.f32 %v2494, %v2627
    %v2692 = vadd.f32 %v2495, %v2628
    %v2693 = vadd.f32 %v2496, %v2629
    %v2694 = vadd.f32 %v2497, %v2630
    %v2695 = vadd.f32 %v2498, %v2631
    %v2696 = vadd.f32 %v2499, %v2632
    %v2697 = vadd.f32 %v2500, %v2633
    %v2698 = vadd.f32 %v2501, %v2634
    %v2699 = vadd.f32 %v2502, %v2635
    %v2700 = vadd.f32 %v2503, %v2636
    %v2701 = vadd.f32 %v2504, %v2637
    %v2702 = vadd.f32 %v2505, %v2638
    %v2703 = vadd.f32 %v2506, %v2639
    %v2704 = vadd.f32 %v2507, %v2640
    %v2705 = vadd.f32 %v2508, %v2641
    %v2706 = vadd.f32 %v2509, %v2642
    %v2707 = vadd.f32 %v2510, %v2643
    %v2708 = vadd.f32 %v2511, %v2644
    %v2709 = vadd.f32 %v2512, %v2645
    %v2710 = vadd.f32 %v2513, %v2646
    %v2711 = vadd.f32 %v2514, %v2647
    %v2712 = vadd.f32 %v2515, %v2648
    %v2713 = vadd.f32 %v2516, %v2649
    %v2714 = vld [vmem:[%s2319 + $0x2] sm:$0xff]
    %v2715 = vld [vmem:[%s2319 + $0xa] sm:$0xff]
    %v2716 = vld [vmem:[%s2319 + $0x1a] sm:$0xff]
    %v2717 = vld [vmem:[%s2319 + $0x22] sm:$0xff]
    %v2718 = vld [vmem:[%s2319 + $0x32] sm:$0xff]
    %v2719 = vld [vmem:[%s2319 + $0x3a] sm:$0xff]
    %v2720 = vld [vmem:[%s2319 + $0x4a] sm:$0xff]
    %v2721 = vld [vmem:[%s2319 + $0x52] sm:$0xff]
    %v2722 = vld [vmem:[%s2319 + $0x62] sm:$0xff]
    %v2723 = vld [vmem:[%s2319 + $0x6a] sm:$0xff]
    %v2724 = vld [vmem:[%s2319 + $0x7a] sm:$0xff]
    %v2725 = vld [vmem:[%s2319 + $0x82] sm:$0xff]
    %v2726 = vld [vmem:[%s2319 + $0x92] sm:$0xff]
    %v2727 = vld [vmem:[%s2319 + $0x9a] sm:$0xff]
    %v2728 = vld [vmem:[%s2319 + $0xaa] sm:$0xff]
    %v2729 = vld [vmem:[%s2319 + $0xb2] sm:$0xff]
    %v2730 = vld [vmem:[%s2319 + $0xc2] sm:$0xff]
    %v2731 = vld [vmem:[%s2319 + $0xca] sm:$0xff]
    %v2732 = vld [vmem:[%s2319 + $0xda] sm:$0xff]
    %v2733 = vld [vmem:[%s2319 + $0xe2] sm:$0xff]
    %v2734 = vld [vmem:[%s2319 + $0xf2] sm:$0xff]
    %v2735 = vld [vmem:[%s2319 + $0xfa] sm:$0xff]
    %v2736 = vld [vmem:[%s2319 + $0x10a] sm:$0xff]
    %v2737 = vld [vmem:[%s2319 + $0x112] sm:$0xff]
    %v2738 = vld [vmem:[%s2319 + $0x122] sm:$0xff]
    %v2739 = vld [vmem:[%s2319 + $0x12a] sm:$0xff]
    %v2740 = vld [vmem:[%s2319 + $0x13a] sm:$0xff]
    %v2741 = vld [vmem:[%s2319 + $0x142] sm:$0xff]
    %v2742 = vld [vmem:[%s2319 + $0x152] sm:$0xff]
    %v2743 = vld [vmem:[%s2319 + $0x15a] sm:$0xff]
    %v2744 = vld [vmem:[%s2319 + $0x16a] sm:$0xff]
    %v2745 = vld [vmem:[%s2319 + $0x172] sm:$0xff]
    %v2746 = vld [vmem:[%s2319 + $0x1b2] sm:$0xff]
    %v2747 = vld [vmem:[%s2319 + $0x1ba] sm:$0xff]
    %v2748 = vld [vmem:[%s2319 + $0x1ca] sm:$0xff]
    %v2749 = vld [vmem:[%s2319 + $0x1d2] sm:$0xff]
    %v2750 = vld [vmem:[%s2319 + $0x1e2] sm:$0xff]
    %v2751 = vld [vmem:[%s2319 + $0x1ea] sm:$0xff]
    %v2752 = vld [vmem:[%s2319 + $0x1fa] sm:$0xff]
    %v2753 = vld [vmem:[%s2319 + $0x202] sm:$0xff]
    %v2754 = vld [vmem:[%s2319 + $0x212] sm:$0xff]
    %v2755 = vld [vmem:[%s2319 + $0x21a] sm:$0xff]
    %v2756 = vld [vmem:[%s2319 + $0x22a] sm:$0xff]
    %v2757 = vld [vmem:[%s2319 + $0x232] sm:$0xff]
    %v2758 = vld [vmem:[%s2319 + $0x242] sm:$0xff]
    %v2759 = vld [vmem:[%s2319 + $0x24a] sm:$0xff]
    %v2760 = vld [vmem:[%s2319 + $0x25a] sm:$0xff]
    %v2761 = vld [vmem:[%s2319 + $0x262] sm:$0xff]
    %v2762 = vld [vmem:[%s2319 + $0x272] sm:$0xff]
    %v2763 = vld [vmem:[%s2319 + $0x27a] sm:$0xff]
    %v2764 = vld [vmem:[%s2319 + $0x28a] sm:$0xff]
    %v2765 = vld [vmem:[%s2319 + $0x292] sm:$0xff]
    %v2766 = vld [vmem:[%s2319 + $0x2a2] sm:$0xff]
    %v2767 = vld [vmem:[%s2319 + $0x2aa] sm:$0xff]
    %v2768 = vld [vmem:[%s2319 + $0x2ba] sm:$0xff]
    %v2769 = vld [vmem:[%s2319 + $0x2c2] sm:$0xff]
    %v2770 = vld [vmem:[%s2319 + $0x2d2] sm:$0xff]
    %v2771 = vld [vmem:[%s2319 + $0x2da] sm:$0xff]
    %v2772 = vld [vmem:[%s2319 + $0x2ea] sm:$0xff]
    %v2773 = vld [vmem:[%s2319 + $0x2f2] sm:$0xff]
    %v2774 = vld [vmem:[%s2319 + $0x302] sm:$0xff]
    %v2775 = vld [vmem:[%s2319 + $0x30a] sm:$0xff]
    %v2776 = vld [vmem:[%s2319 + $0x31a] sm:$0xff]
    %v2777 = vld [vmem:[%s2319 + $0x322] sm:$0xff]
    %v2778 = vld [vmem:[%s3 + $0x8] sm:$0x1]
    %v2779 = vlaneseq
    %v2780 = vshrl.u32 %v2779, 7
    %v2781 = vsub.s32 0, %v2780
    %v2782 = vrot.slane %v2778, %v2781
    %v2783 = vmul.f32 %v2714, %v2782
    %v2784 = vmul.f32 %v2715, %v2782
    %v2785 = vmul.f32 %v2716, %v2782
    %v2786 = vmul.f32 %v2717, %v2782
    %v2787 = vmul.f32 %v2718, %v2782
    %v2788 = vmul.f32 %v2719, %v2782
    %v2789 = vmul.f32 %v2720, %v2782
    %v2790 = vmul.f32 %v2721, %v2782
    %v2791 = vmul.f32 %v2722, %v2782
    %v2792 = vmul.f32 %v2723, %v2782
    %v2793 = vmul.f32 %v2724, %v2782
    %v2794 = vmul.f32 %v2725, %v2782
    %v2795 = vmul.f32 %v2726, %v2782
    %v2796 = vmul.f32 %v2727, %v2782
    %v2797 = vmul.f32 %v2728, %v2782
    %v2798 = vmul.f32 %v2729, %v2782
    %v2799 = vmul.f32 %v2730, %v2782
    %v2800 = vmul.f32 %v2731, %v2782
    %v2801 = vmul.f32 %v2732, %v2782
    %v2802 = vmul.f32 %v2733, %v2782
    %v2803 = vmul.f32 %v2734, %v2782
    %v2804 = vmul.f32 %v2735, %v2782
    %v2805 = vmul.f32 %v2736, %v2782
    %v2806 = vmul.f32 %v2737, %v2782
    %v2807 = vmul.f32 %v2738, %v2782
    %v2808 = vmul.f32 %v2739, %v2782
    %v2809 = vmul.f32 %v2740, %v2782
    %v2810 = vmul.f32 %v2741, %v2782
    %v2811 = vmul.f32 %v2742, %v2782
    %v2812 = vmul.f32 %v2743, %v2782
    %v2813 = vmul.f32 %v2744, %v2782
    %v2814 = vmul.f32 %v2745, %v2782
    %v2815 = vmul.f32 %v2746, %v2782
    %v2816 = vmul.f32 %v2747, %v2782
    %v2817 = vmul.f32 %v2748, %v2782
    %v2818 = vmul.f32 %v2749, %v2782
    %v2819 = vmul.f32 %v2750, %v2782
    %v2820 = vmul.f32 %v2751, %v2782
    %v2821 = vmul.f32 %v2752, %v2782
    %v2822 = vmul.f32 %v2753, %v2782
    %v2823 = vmul.f32 %v2754, %v2782
    %v2824 = vmul.f32 %v2755, %v2782
    %v2825 = vmul.f32 %v2756, %v2782
    %v2826 = vmul.f32 %v2757, %v2782
    %v2827 = vmul.f32 %v2758, %v2782
    %v2828 = vmul.f32 %v2759, %v2782
    %v2829 = vmul.f32 %v2760, %v2782
    %v2830 = vmul.f32 %v2761, %v2782
    %v2831 = vmul.f32 %v2762, %v2782
    %v2832 = vmul.f32 %v2763, %v2782
    %v2833 = vmul.f32 %v2764, %v2782
    %v2834 = vmul.f32 %v2765, %v2782
    %v2835 = vmul.f32 %v2766, %v2782
    %v2836 = vmul.f32 %v2767, %v2782
    %v2837 = vmul.f32 %v2768, %v2782
    %v2838 = vmul.f32 %v2769, %v2782
    %v2839 = vmul.f32 %v2770, %v2782
    %v2840 = vmul.f32 %v2771, %v2782
    %v2841 = vmul.f32 %v2772, %v2782
    %v2842 = vmul.f32 %v2773, %v2782
    %v2843 = vmul.f32 %v2774, %v2782
    %v2844 = vmul.f32 %v2775, %v2782
    %v2845 = vmul.f32 %v2776, %v2782
    %v2846 = vmul.f32 %v2777, %v2782
    %v2847 = vadd.f32 %v2650, %v2783
    %v2848 = vadd.f32 %v2651, %v2784
    %v2849 = vadd.f32 %v2652, %v2785
    %v2850 = vadd.f32 %v2653, %v2786
    %v2851 = vadd.f32 %v2654, %v2787
    %v2852 = vadd.f32 %v2655, %v2788
    %v2853 = vadd.f32 %v2656, %v2789
    %v2854 = vadd.f32 %v2657, %v2790
    %v2855 = vadd.f32 %v2658, %v2791
    %v2856 = vadd.f32 %v2659, %v2792
    %v2857 = vadd.f32 %v2660, %v2793
    %v2858 = vadd.f32 %v2661, %v2794
    %v2859 = vadd.f32 %v2662, %v2795
    %v2860 = vadd.f32 %v2663, %v2796
    %v2861 = vadd.f32 %v2664, %v2797
    %v2862 = vadd.f32 %v2665, %v2798
    %v2863 = vadd.f32 %v2666, %v2799
    %v2864 = vadd.f32 %v2667, %v2800
    %v2865 = vadd.f32 %v2668, %v2801
    %v2866 = vadd.f32 %v2669, %v2802
    %v2867 = vadd.f32 %v2670, %v2803
    %v2868 = vadd.f32 %v2671, %v2804
    %v2869 = vadd.f32 %v2672, %v2805
    %v2870 = vadd.f32 %v2673, %v2806
    %v2871 = vadd.f32 %v2674, %v2807
    %v2872 = vadd.f32 %v2675, %v2808
    %v2873 = vadd.f32 %v2676, %v2809
    %v2874 = vadd.f32 %v2677, %v2810
    %v2875 = vadd.f32 %v2678, %v2811
    %v2876 = vadd.f32 %v2679, %v2812
    %v2877 = vadd.f32 %v2680, %v2813
    %v2878 = vadd.f32 %v2681, %v2814
    %v2879 = vadd.f32 %v2682, %v2815
    %v2880 = vadd.f32 %v2683, %v2816
    %v2881 = vadd.f32 %v2684, %v2817
    %v2882 = vadd.f32 %v2685, %v2818
    %v2883 = vadd.f32 %v2686, %v2819
    %v2884 = vadd.f32 %v2687, %v2820
    %v2885 = vadd.f32 %v2688, %v2821
    %v2886 = vadd.f32 %v2689, %v2822
    %v2887 = vadd.f32 %v2690, %v2823
    %v2888 = vadd.f32 %v2691, %v2824
    %v2889 = vadd.f32 %v2692, %v2825
    %v2890 = vadd.f32 %v2693, %v2826
    %v2891 = vadd.f32 %v2694, %v2827
    %v2892 = vadd.f32 %v2695, %v2828
    %v2893 = vadd.f32 %v2696, %v2829
    %v2894 = vadd.f32 %v2697, %v2830
    %v2895 = vadd.f32 %v2698, %v2831
    %v2896 = vadd.f32 %v2699, %v2832
    %v2897 = vadd.f32 %v2700, %v2833
    %v2898 = vadd.f32 %v2701, %v2834
    %v2899 = vadd.f32 %v2702, %v2835
    %v2900 = vadd.f32 %v2703, %v2836
    %v2901 = vadd.f32 %v2704, %v2837
    %v2902 = vadd.f32 %v2705, %v2838
    %v2903 = vadd.f32 %v2706, %v2839
    %v2904 = vadd.f32 %v2707, %v2840
    %v2905 = vadd.f32 %v2708, %v2841
    %v2906 = vadd.f32 %v2709, %v2842
    %v2907 = vadd.f32 %v2710, %v2843
    %v2908 = vadd.f32 %v2711, %v2844
    %v2909 = vadd.f32 %v2712, %v2845
    %v2910 = vadd.f32 %v2713, %v2846
    %v2911 = vld [vmem:[%s4] sm:$0x1]
    %v2913 = vlaneseq
    %v2914 = vshrl.u32 %v2913, 7
    %v2915 = vsub.s32 0, %v2914
    %v2916 = vrot.slane %v2911, %v2915
    %v2918 = vadd.f32 %v2847, %v2916
    %v2919 = vadd.f32 %v2848, %v2916
    %v2920 = vadd.f32 %v2849, %v2916
    %v2921 = vadd.f32 %v2850, %v2916
    %v2922 = vadd.f32 %v2851, %v2916
    %v2923 = vadd.f32 %v2852, %v2916
    %v2924 = vadd.f32 %v2853, %v2916
    %v2925 = vadd.f32 %v2854, %v2916
    %v2926 = vadd.f32 %v2855, %v2916
    %v2927 = vadd.f32 %v2856, %v2916
    %v2928 = vadd.f32 %v2857, %v2916
    %v2929 = vadd.f32 %v2858, %v2916
    %v2930 = vadd.f32 %v2859, %v2916
    %v2931 = vadd.f32 %v2860, %v2916
    %v2932 = vadd.f32 %v2861, %v2916
    %v2933 = vadd.f32 %v2862, %v2916
    %v2934 = vadd.f32 %v2863, %v2916
    %v2935 = vadd.f32 %v2864, %v2916
    %v2936 = vadd.f32 %v2865, %v2916
    %v2937 = vadd.f32 %v2866, %v2916
    %v2938 = vadd.f32 %v2867, %v2916
    %v2939 = vadd.f32 %v2868, %v2916
    %v2940 = vadd.f32 %v2869, %v2916
    %v2941 = vadd.f32 %v2870, %v2916
    %v2942 = vadd.f32 %v2871, %v2916
    %v2943 = vadd.f32 %v2872, %v2916
    %v2944 = vadd.f32 %v2873, %v2916
    %v2945 = vadd.f32 %v2874, %v2916
    %v2946 = vadd.f32 %v2875, %v2916
    %v2947 = vadd.f32 %v2876, %v2916
    %v2948 = vadd.f32 %v2877, %v2916
    %v2949 = vadd.f32 %v2878, %v2916
    %v2950 = vadd.f32 %v2879, %v2916
    %v2951 = vadd.f32 %v2880, %v2916
    %v2952 = vadd.f32 %v2881, %v2916
    %v2953 = vadd.f32 %v2882, %v2916
    %v2954 = vadd.f32 %v2883, %v2916
    %v2955 = vadd.f32 %v2884, %v2916
    %v2956 = vadd.f32 %v2885, %v2916
    %v2957 = vadd.f32 %v2886, %v2916
    %v2958 = vadd.f32 %v2887, %v2916
    %v2959 = vadd.f32 %v2888, %v2916
    %v2960 = vadd.f32 %v2889, %v2916
    %v2961 = vadd.f32 %v2890, %v2916
    %v2962 = vadd.f32 %v2891, %v2916
    %v2963 = vadd.f32 %v2892, %v2916
    %v2964 = vadd.f32 %v2893, %v2916
    %v2965 = vadd.f32 %v2894, %v2916
    %v2966 = vadd.f32 %v2895, %v2916
    %v2967 = vadd.f32 %v2896, %v2916
    %v2968 = vadd.f32 %v2897, %v2916
    %v2969 = vadd.f32 %v2898, %v2916
    %v2970 = vadd.f32 %v2899, %v2916
    %v2971 = vadd.f32 %v2900, %v2916
    %v2972 = vadd.f32 %v2901, %v2916
    %v2973 = vadd.f32 %v2902, %v2916
    %v2974 = vadd.f32 %v2903, %v2916
    %v2975 = vadd.f32 %v2904, %v2916
    %v2976 = vadd.f32 %v2905, %v2916
    %v2977 = vadd.f32 %v2906, %v2916
    %v2978 = vadd.f32 %v2907, %v2916
    %v2979 = vadd.f32 %v2908, %v2916
    %v2980 = vadd.f32 %v2909, %v2916
    %v2981 = vadd.f32 %v2910, %v2916
    %v2982 = vxor.u32 %v2918, 2147483648
    %v2983 = vxor.u32 %v2919, 2147483648
    %v2984 = vxor.u32 %v2920, 2147483648
    %v2985 = vxor.u32 %v2921, 2147483648
    %v2986 = vxor.u32 %v2922, 2147483648
    %v2987 = vxor.u32 %v2923, 2147483648
    %v2988 = vxor.u32 %v2924, 2147483648
    %v2989 = vxor.u32 %v2925, 2147483648
    %v2990 = vxor.u32 %v2926, 2147483648
    %v2991 = vxor.u32 %v2927, 2147483648
    %v2992 = vxor.u32 %v2928, 2147483648
    %v2993 = vxor.u32 %v2929, 2147483648
    %v2994 = vxor.u32 %v2930, 2147483648
    %v2995 = vxor.u32 %v2931, 2147483648
    %v2996 = vxor.u32 %v2932, 2147483648
    %v2997 = vxor.u32 %v2933, 2147483648
    %v2998 = vxor.u32 %v2934, 2147483648
    %v2999 = vxor.u32 %v2935, 2147483648
    %v3000 = vxor.u32 %v2936, 2147483648
    %v3001 = vxor.u32 %v2937, 2147483648
    %v3002 = vxor.u32 %v2938, 2147483648
    %v3003 = vxor.u32 %v2939, 2147483648
    %v3004 = vxor.u32 %v2940, 2147483648
    %v3005 = vxor.u32 %v2941, 2147483648
    %v3006 = vxor.u32 %v2942, 2147483648
    %v3007 = vxor.u32 %v2943, 2147483648
    %v3008 = vxor.u32 %v2944, 2147483648
    %v3009 = vxor.u32 %v2945, 2147483648
    %v3010 = vxor.u32 %v2946, 2147483648
    %v3011 = vxor.u32 %v2947, 2147483648
    %v3012 = vxor.u32 %v2948, 2147483648
    %v3013 = vxor.u32 %v2949, 2147483648
    %v3014 = vxor.u32 %v2950, 2147483648
    %v3015 = vxor.u32 %v2951, 2147483648
    %v3016 = vxor.u32 %v2952, 2147483648
    %v3017 = vxor.u32 %v2953, 2147483648
    %v3018 = vxor.u32 %v2954, 2147483648
    %v3019 = vxor.u32 %v2955, 2147483648
    %v3020 = vxor.u32 %v2956, 2147483648
    %v3021 = vxor.u32 %v2957, 2147483648
    %v3022 = vxor.u32 %v2958, 2147483648
    %v3023 = vxor.u32 %v2959, 2147483648
    %v3024 = vxor.u32 %v2960, 2147483648
    %v3025 = vxor.u32 %v2961, 2147483648
    %v3026 = vxor.u32 %v2962, 2147483648
    %v3027 = vxor.u32 %v2963, 2147483648
    %v3028 = vxor.u32 %v2964, 2147483648
    %v3029 = vxor.u32 %v2965, 2147483648
    %v3030 = vxor.u32 %v2966, 2147483648
    %v3031 = vxor.u32 %v2967, 2147483648
    %v3032 = vxor.u32 %v2968, 2147483648
    %v3033 = vxor.u32 %v2969, 2147483648
    %v3034 = vxor.u32 %v2970, 2147483648
    %v3035 = vxor.u32 %v2971, 2147483648
    %v3036 = vxor.u32 %v2972, 2147483648
    %v3037 = vxor.u32 %v2973, 2147483648
    %v3038 = vxor.u32 %v2974, 2147483648
    %v3039 = vxor.u32 %v2975, 2147483648
    %v3040 = vxor.u32 %v2976, 2147483648
    %v3041 = vxor.u32 %v2977, 2147483648
    %v3042 = vxor.u32 %v2978, 2147483648
    %v3043 = vxor.u32 %v2979, 2147483648
    %v3044 = vxor.u32 %v2980, 2147483648
    %v3045 = vxor.u32 %v2981, 2147483648
    %v3046 = vmul.f32 %v2982, 1.442695
    %v3047 = vpow.pop %v3046
    %v3048 = vmul.f32 %v2983, 1.442695
    %v3049 = vpow.pop %v3048
    %v3050 = vmul.f32 %v2984, 1.442695
    %v3051 = vpow.pop %v3050
    %v3052 = vmul.f32 %v2985, 1.442695
    %v3053 = vpow.pop %v3052
    %v3054 = vmul.f32 %v2986, 1.442695
    %v3055 = vpow.pop %v3054
    %v3056 = vmul.f32 %v2987, 1.442695
    %v3057 = vpow.pop %v3056
    %v3058 = vmul.f32 %v2988, 1.442695
    %v3059 = vpow.pop %v3058
    %v3060 = vmul.f32 %v2989, 1.442695
    %v3061 = vpow.pop %v3060
    %v3062 = vmul.f32 %v2990, 1.442695
    %v3063 = vpow.pop %v3062
    %v3064 = vmul.f32 %v2991, 1.442695
    %v3065 = vpow.pop %v3064
    %v3066 = vmul.f32 %v2992, 1.442695
    %v3067 = vpow.pop %v3066
    %v3068 = vmul.f32 %v2993, 1.442695
    %v3069 = vpow.pop %v3068
    %v3070 = vmul.f32 %v2994, 1.442695
    %v3071 = vpow.pop %v3070
    %v3072 = vmul.f32 %v2995, 1.442695
    %v3073 = vpow.pop %v3072
    %v3074 = vmul.f32 %v2996, 1.442695
    %v3075 = vpow.pop %v3074
    %v3076 = vmul.f32 %v2997, 1.442695
    %v3077 = vpow.pop %v3076
    %v3078 = vmul.f32 %v2998, 1.442695
    %v3079 = vpow.pop %v3078
    %v3080 = vmul.f32 %v2999, 1.442695
    %v3081 = vpow.pop %v3080
    %v3082 = vmul.f32 %v3000, 1.442695
    %v3083 = vpow.pop %v3082
    %v3084 = vmul.f32 %v3001, 1.442695
    %v3085 = vpow.pop %v3084
    %v3086 = vmul.f32 %v3002, 1.442695
    %v3087 = vpow.pop %v3086
    %v3088 = vmul.f32 %v3003, 1.442695
    %v3089 = vpow.pop %v3088
    %v3090 = vmul.f32 %v3004, 1.442695
    %v3091 = vpow.pop %v3090
    %v3092 = vmul.f32 %v3005, 1.442695
    %v3093 = vpow.pop %v3092
    %v3094 = vmul.f32 %v3006, 1.442695
    %v3095 = vpow.pop %v3094
    %v3096 = vmul.f32 %v3007, 1.442695
    %v3097 = vpow.pop %v3096
    %v3098 = vmul.f32 %v3008, 1.442695
    %v3099 = vpow.pop %v3098
    %v3100 = vmul.f32 %v3009, 1.442695
    %v3101 = vpow.pop %v3100
    %v3102 = vmul.f32 %v3010, 1.442695
    %v3103 = vpow.pop %v3102
    %v3104 = vmul.f32 %v3011, 1.442695
    %v3105 = vpow.pop %v3104
    %v3106 = vmul.f32 %v3012, 1.442695
    %v3107 = vpow.pop %v3106
    %v3108 = vmul.f32 %v3013, 1.442695
    %v3109 = vpow.pop %v3108
    %v3110 = vmul.f32 %v3014, 1.442695
    %v3111 = vpow.pop %v3110
    %v3112 = vmul.f32 %v3015, 1.442695
    %v3113 = vpow.pop %v3112
    %v3114 = vmul.f32 %v3016, 1.442695
    %v3115 = vpow.pop %v3114
    %v3116 = vmul.f32 %v3017, 1.442695
    %v3117 = vpow.pop %v3116
    %v3118 = vmul.f32 %v3018, 1.442695
    %v3119 = vpow.pop %v3118
    %v3120 = vmul.f32 %v3019, 1.442695
    %v3121 = vpow.pop %v3120
    %v3122 = vmul.f32 %v3020, 1.442695
    %v3123 = vpow.pop %v3122
    %v3124 = vmul.f32 %v3021, 1.442695
    %v3125 = vpow.pop %v3124
    %v3126 = vmul.f32 %v3022, 1.442695
    %v3127 = vpow.pop %v3126
    %v3128 = vmul.f32 %v3023, 1.442695
    %v3129 = vpow.pop %v3128
    %v3130 = vmul.f32 %v3024, 1.442695
    %v3131 = vpow.pop %v3130
    %v3132 = vmul.f32 %v3025, 1.442695
    %v3133 = vpow.pop %v3132
    %v3134 = vmul.f32 %v3026, 1.442695
    %v3135 = vpow.pop %v3134
    %v3136 = vmul.f32 %v3027, 1.442695
    %v3137 = vpow.pop %v3136
    %v3138 = vmul.f32 %v3028, 1.442695
    %v3139 = vpow.pop %v3138
    %v3140 = vmul.f32 %v3029, 1.442695
    %v3141 = vpow.pop %v3140
    %v3142 = vmul.f32 %v3030, 1.442695
    %v3143 = vpow.pop %v3142
    %v3144 = vmul.f32 %v3031, 1.442695
    %v3145 = vpow.pop %v3144
    %v3146 = vmul.f32 %v3032, 1.442695
    %v3147 = vpow.pop %v3146
    %v3148 = vmul.f32 %v3033, 1.442695
    %v3149 = vpow.pop %v3148
    %v3150 = vmul.f32 %v3034, 1.442695
    %v3151 = vpow.pop %v3150
    %v3152 = vmul.f32 %v3035, 1.442695
    %v3153 = vpow.pop %v3152
    %v3154 = vmul.f32 %v3036, 1.442695
    %v3155 = vpow.pop %v3154
    %v3156 = vmul.f32 %v3037, 1.442695
    %v3157 = vpow.pop %v3156
    %v3158 = vmul.f32 %v3038, 1.442695
    %v3159 = vpow.pop %v3158
    %v3160 = vmul.f32 %v3039, 1.442695
    %v3161 = vpow.pop %v3160
    %v3162 = vmul.f32 %v3040, 1.442695
    %v3163 = vpow.pop %v3162
    %v3164 = vmul.f32 %v3041, 1.442695
    %v3165 = vpow.pop %v3164
    %v3166 = vmul.f32 %v3042, 1.442695
    %v3167 = vpow.pop %v3166
    %v3168 = vmul.f32 %v3043, 1.442695
    %v3169 = vpow.pop %v3168
    %v3170 = vmul.f32 %v3044, 1.442695
    %v3171 = vpow.pop %v3170
    %v3172 = vmul.f32 %v3045, 1.442695
    %v3173 = vpow.pop %v3172
    %v3174 = vadd.f32 %v3047, 1.0
    %v3175 = vadd.f32 %v3049, 1.0
    %v3176 = vadd.f32 %v3051, 1.0
    %v3177 = vadd.f32 %v3053, 1.0
    %v3178 = vadd.f32 %v3055, 1.0
    %v3179 = vadd.f32 %v3057, 1.0
    %v3180 = vadd.f32 %v3059, 1.0
    %v3181 = vadd.f32 %v3061, 1.0
    %v3182 = vadd.f32 %v3063, 1.0
    %v3183 = vadd.f32 %v3065, 1.0
    %v3184 = vadd.f32 %v3067, 1.0
    %v3185 = vadd.f32 %v3069, 1.0
    %v3186 = vadd.f32 %v3071, 1.0
    %v3187 = vadd.f32 %v3073, 1.0
    %v3188 = vadd.f32 %v3075, 1.0
    %v3189 = vadd.f32 %v3077, 1.0
    %v3190 = vadd.f32 %v3079, 1.0
    %v3191 = vadd.f32 %v3081, 1.0
    %v3192 = vadd.f32 %v3083, 1.0
    %v3193 = vadd.f32 %v3085, 1.0
    %v3194 = vadd.f32 %v3087, 1.0
    %v3195 = vadd.f32 %v3089, 1.0
    %v3196 = vadd.f32 %v3091, 1.0
    %v3197 = vadd.f32 %v3093, 1.0
    %v3198 = vadd.f32 %v3095, 1.0
    %v3199 = vadd.f32 %v3097, 1.0
    %v3200 = vadd.f32 %v3099, 1.0
    %v3201 = vadd.f32 %v3101, 1.0
    %v3202 = vadd.f32 %v3103, 1.0
    %v3203 = vadd.f32 %v3105, 1.0
    %v3204 = vadd.f32 %v3107, 1.0
    %v3205 = vadd.f32 %v3109, 1.0
    %v3206 = vadd.f32 %v3111, 1.0
    %v3207 = vadd.f32 %v3113, 1.0
    %v3208 = vadd.f32 %v3115, 1.0
    %v3209 = vadd.f32 %v3117, 1.0
    %v3210 = vadd.f32 %v3119, 1.0
    %v3211 = vadd.f32 %v3121, 1.0
    %v3212 = vadd.f32 %v3123, 1.0
    %v3213 = vadd.f32 %v3125, 1.0
    %v3214 = vadd.f32 %v3127, 1.0
    %v3215 = vadd.f32 %v3129, 1.0
    %v3216 = vadd.f32 %v3131, 1.0
    %v3217 = vadd.f32 %v3133, 1.0
    %v3218 = vadd.f32 %v3135, 1.0
    %v3219 = vadd.f32 %v3137, 1.0
    %v3220 = vadd.f32 %v3139, 1.0
    %v3221 = vadd.f32 %v3141, 1.0
    %v3222 = vadd.f32 %v3143, 1.0
    %v3223 = vadd.f32 %v3145, 1.0
    %v3224 = vadd.f32 %v3147, 1.0
    %v3225 = vadd.f32 %v3149, 1.0
    %v3226 = vadd.f32 %v3151, 1.0
    %v3227 = vadd.f32 %v3153, 1.0
    %v3228 = vadd.f32 %v3155, 1.0
    %v3229 = vadd.f32 %v3157, 1.0
    %v3230 = vadd.f32 %v3159, 1.0
    %v3231 = vadd.f32 %v3161, 1.0
    %v3232 = vadd.f32 %v3163, 1.0
    %v3233 = vadd.f32 %v3165, 1.0
    %v3234 = vadd.f32 %v3167, 1.0
    %v3235 = vadd.f32 %v3169, 1.0
    %v3236 = vadd.f32 %v3171, 1.0
    %v3237 = vadd.f32 %v3173, 1.0
    %v3238 = vrcp.pop %v3174
    %v3239 = vmul.f32 1.0, %v3238
    %v3240 = vrcp.pop %v3175
    %v3241 = vmul.f32 1.0, %v3240
    %v3242 = vrcp.pop %v3176
    %v3243 = vmul.f32 1.0, %v3242
    %v3244 = vrcp.pop %v3177
    %v3245 = vmul.f32 1.0, %v3244
    %v3246 = vrcp.pop %v3178
    %v3247 = vmul.f32 1.0, %v3246
    %v3248 = vrcp.pop %v3179
    %v3249 = vmul.f32 1.0, %v3248
    %v3250 = vrcp.pop %v3180
    %v3251 = vmul.f32 1.0, %v3250
    %v3252 = vrcp.pop %v3181
    %v3253 = vmul.f32 1.0, %v3252
    %v3254 = vrcp.pop %v3182
    %v3255 = vmul.f32 1.0, %v3254
    %v3256 = vrcp.pop %v3183
    %v3257 = vmul.f32 1.0, %v3256
    %v3258 = vrcp.pop %v3184
    %v3259 = vmul.f32 1.0, %v3258
    %v3260 = vrcp.pop %v3185
    %v3261 = vmul.f32 1.0, %v3260
    %v3262 = vrcp.pop %v3186
    %v3263 = vmul.f32 1.0, %v3262
    %v3264 = vrcp.pop %v3187
    %v3265 = vmul.f32 1.0, %v3264
    %v3266 = vrcp.pop %v3188
    %v3267 = vmul.f32 1.0, %v3266
    %v3268 = vrcp.pop %v3189
    %v3269 = vmul.f32 1.0, %v3268
    %v3270 = vrcp.pop %v3190
    %v3271 = vmul.f32 1.0, %v3270
    %v3272 = vrcp.pop %v3191
    %v3273 = vmul.f32 1.0, %v3272
    %v3274 = vrcp.pop %v3192
    %v3275 = vmul.f32 1.0, %v3274
    %v3276 = vrcp.pop %v3193
    %v3277 = vmul.f32 1.0, %v3276
    %v3278 = vrcp.pop %v3194
    %v3279 = vmul.f32 1.0, %v3278
    %v3280 = vrcp.pop %v3195
    %v3281 = vmul.f32 1.0, %v3280
    %v3282 = vrcp.pop %v3196
    %v3283 = vmul.f32 1.0, %v3282
    %v3284 = vrcp.pop %v3197
    %v3285 = vmul.f32 1.0, %v3284
    %v3286 = vrcp.pop %v3198
    %v3287 = vmul.f32 1.0, %v3286
    %v3288 = vrcp.pop %v3199
    %v3289 = vmul.f32 1.0, %v3288
    %v3290 = vrcp.pop %v3200
    %v3291 = vmul.f32 1.0, %v3290
    %v3292 = vrcp.pop %v3201
    %v3293 = vmul.f32 1.0, %v3292
    %v3294 = vrcp.pop %v3202
    %v3295 = vmul.f32 1.0, %v3294
    %v3296 = vrcp.pop %v3203
    %v3297 = vmul.f32 1.0, %v3296
    %v3298 = vrcp.pop %v3204
    %v3299 = vmul.f32 1.0, %v3298
    %v3300 = vrcp.pop %v3205
    %v3301 = vmul.f32 1.0, %v3300
    %v3302 = vrcp.pop %v3206
    %v3303 = vmul.f32 1.0, %v3302
    %v3304 = vrcp.pop %v3207
    %v3305 = vmul.f32 1.0, %v3304
    %v3306 = vrcp.pop %v3208
    %v3307 = vmul.f32 1.0, %v3306
    %v3308 = vrcp.pop %v3209
    %v3309 = vmul.f32 1.0, %v3308
    %v3310 = vrcp.pop %v3210
    %v3311 = vmul.f32 1.0, %v3310
    %v3312 = vrcp.pop %v3211
    %v3313 = vmul.f32 1.0, %v3312
    %v3314 = vrcp.pop %v3212
    %v3315 = vmul.f32 1.0, %v3314
    %v3316 = vrcp.pop %v3213
    %v3317 = vmul.f32 1.0, %v3316
    %v3318 = vrcp.pop %v3214
    %v3319 = vmul.f32 1.0, %v3318
    %v3320 = vrcp.pop %v3215
    %v3321 = vmul.f32 1.0, %v3320
    %v3322 = vrcp.pop %v3216
    %v3323 = vmul.f32 1.0, %v3322
    %v3324 = vrcp.pop %v3217
    %v3325 = vmul.f32 1.0, %v3324
    %v3326 = vrcp.pop %v3218
    %v3327 = vmul.f32 1.0, %v3326
    %v3328 = vrcp.pop %v3219
    %v3329 = vmul.f32 1.0, %v3328
    %v3330 = vrcp.pop %v3220
    %v3331 = vmul.f32 1.0, %v3330
    %v3332 = vrcp.pop %v3221
    %v3333 = vmul.f32 1.0, %v3332
    %v3334 = vrcp.pop %v3222
    %v3335 = vmul.f32 1.0, %v3334
    %v3336 = vrcp.pop %v3223
    %v3337 = vmul.f32 1.0, %v3336
    %v3338 = vrcp.pop %v3224
    %v3339 = vmul.f32 1.0, %v3338
    %v3340 = vrcp.pop %v3225
    %v3341 = vmul.f32 1.0, %v3340
    %v3342 = vrcp.pop %v3226
    %v3343 = vmul.f32 1.0, %v3342
    %v3344 = vrcp.pop %v3227
    %v3345 = vmul.f32 1.0, %v3344
    %v3346 = vrcp.pop %v3228
    %v3347 = vmul.f32 1.0, %v3346
    %v3348 = vrcp.pop %v3229
    %v3349 = vmul.f32 1.0, %v3348
    %v3350 = vrcp.pop %v3230
    %v3351 = vmul.f32 1.0, %v3350
    %v3352 = vrcp.pop %v3231
    %v3353 = vmul.f32 1.0, %v3352
    %v3354 = vrcp.pop %v3232
    %v3355 = vmul.f32 1.0, %v3354
    %v3356 = vrcp.pop %v3233
    %v3357 = vmul.f32 1.0, %v3356
    %v3358 = vrcp.pop %v3234
    %v3359 = vmul.f32 1.0, %v3358
    %v3360 = vrcp.pop %v3235
    %v3361 = vmul.f32 1.0, %v3360
    %v3362 = vrcp.pop %v3236
    %v3363 = vmul.f32 1.0, %v3362
    %v3364 = vrcp.pop %v3237
    %v3365 = vmul.f32 1.0, %v3364
    %v3366 = vmul.f32 %v2918, %v3239
    %v3367 = vmul.f32 %v2919, %v3241
    %v3368 = vmul.f32 %v2920, %v3243
    %v3369 = vmul.f32 %v2921, %v3245
    %v3370 = vmul.f32 %v2922, %v3247
    %v3371 = vmul.f32 %v2923, %v3249
    %v3372 = vmul.f32 %v2924, %v3251
    %v3373 = vmul.f32 %v2925, %v3253
    %v3374 = vmul.f32 %v2926, %v3255
    %v3375 = vmul.f32 %v2927, %v3257
    %v3376 = vmul.f32 %v2928, %v3259
    %v3377 = vmul.f32 %v2929, %v3261
    %v3378 = vmul.f32 %v2930, %v3263
    %v3379 = vmul.f32 %v2931, %v3265
    %v3380 = vmul.f32 %v2932, %v3267
    %v3381 = vmul.f32 %v2933, %v3269
    %v3382 = vmul.f32 %v2934, %v3271
    %v3383 = vmul.f32 %v2935, %v3273
    %v3384 = vmul.f32 %v2936, %v3275
    %v3385 = vmul.f32 %v2937, %v3277
    %v3386 = vmul.f32 %v2938, %v3279
    %v3387 = vmul.f32 %v2939, %v3281
    %v3388 = vmul.f32 %v2940, %v3283
    %v3389 = vmul.f32 %v2941, %v3285
    %v3390 = vmul.f32 %v2942, %v3287
    %v3391 = vmul.f32 %v2943, %v3289
    %v3392 = vmul.f32 %v2944, %v3291
    %v3393 = vmul.f32 %v2945, %v3293
    %v3394 = vmul.f32 %v2946, %v3295
    %v3395 = vmul.f32 %v2947, %v3297
    %v3396 = vmul.f32 %v2948, %v3299
    %v3397 = vmul.f32 %v2949, %v3301
    %v3398 = vmul.f32 %v2950, %v3303
    %v3399 = vmul.f32 %v2951, %v3305
    %v3400 = vmul.f32 %v2952, %v3307
    %v3401 = vmul.f32 %v2953, %v3309
    %v3402 = vmul.f32 %v2954, %v3311
    %v3403 = vmul.f32 %v2955, %v3313
    %v3404 = vmul.f32 %v2956, %v3315
    %v3405 = vmul.f32 %v2957, %v3317
    %v3406 = vmul.f32 %v2958, %v3319
    %v3407 = vmul.f32 %v2959, %v3321
    %v3408 = vmul.f32 %v2960, %v3323
    %v3409 = vmul.f32 %v2961, %v3325
    %v3410 = vmul.f32 %v2962, %v3327
    %v3411 = vmul.f32 %v2963, %v3329
    %v3412 = vmul.f32 %v2964, %v3331
    %v3413 = vmul.f32 %v2965, %v3333
    %v3414 = vmul.f32 %v2966, %v3335
    %v3415 = vmul.f32 %v2967, %v3337
    %v3416 = vmul.f32 %v2968, %v3339
    %v3417 = vmul.f32 %v2969, %v3341
    %v3418 = vmul.f32 %v2970, %v3343
    %v3419 = vmul.f32 %v2971, %v3345
    %v3420 = vmul.f32 %v2972, %v3347
    %v3421 = vmul.f32 %v2973, %v3349
    %v3422 = vmul.f32 %v2974, %v3351
    %v3423 = vmul.f32 %v2975, %v3353
    %v3424 = vmul.f32 %v2976, %v3355
    %v3425 = vmul.f32 %v2977, %v3357
    %v3426 = vmul.f32 %v2978, %v3359
    %v3427 = vmul.f32 %v2979, %v3361
    %v3428 = vmul.f32 %v2980, %v3363
    %v3429 = vmul.f32 %v2981, %v3365
    %v3430 = vadd.f32 %v3366, %v3367
    %v3431 = vadd.f32 %v3430, %v3368
    %v3432 = vadd.f32 %v3431, %v3369
    %v3433 = vadd.f32 %v3432, %v3370
    %v3434 = vadd.f32 %v3433, %v3371
    %v3435 = vadd.f32 %v3434, %v3372
    %v3436 = vadd.f32 %v3435, %v3373
    %v3437 = vadd.f32 %v3436, %v3374
    %v3438 = vadd.f32 %v3437, %v3375
    %v3439 = vadd.f32 %v3438, %v3376
    %v3440 = vadd.f32 %v3439, %v3377
    %v3441 = vadd.f32 %v3440, %v3378
    %v3442 = vadd.f32 %v3441, %v3379
    %v3443 = vadd.f32 %v3442, %v3380
    %v3444 = vadd.f32 %v3443, %v3381
    %v3445 = vadd.f32 %v3444, %v3382
    %v3446 = vadd.f32 %v3445, %v3383
    %v3447 = vadd.f32 %v3446, %v3384
    %v3448 = vadd.f32 %v3447, %v3385
    %v3449 = vadd.f32 %v3448, %v3386
    %v3450 = vadd.f32 %v3449, %v3387
    %v3451 = vadd.f32 %v3450, %v3388
    %v3452 = vadd.f32 %v3451, %v3389
    %v3453 = vadd.f32 %v3452, %v3390
    %v3454 = vadd.f32 %v3453, %v3391
    %v3455 = vadd.f32 %v3454, %v3392
    %v3456 = vadd.f32 %v3455, %v3393
    %v3457 = vadd.f32 %v3456, %v3394
    %v3458 = vadd.f32 %v3457, %v3395
    %v3459 = vadd.f32 %v3458, %v3396
    %v3460 = vadd.f32 %v3459, %v3397
    %v3461 = vrot.slane %v3460, 4
    %v3462 = vadd.f32 %v3460, %v3461
    %v3463 = vrot.slane %v3462, 2
    %v3464 = vadd.f32 %v3462, %v3463
    %v3465 = vrot.slane %v3464, 1
    %v3466 = vadd.f32 %v3464, %v3465
    %v3467 = vadd.f32 %v3398, %v3399
    %v3468 = vadd.f32 %v3467, %v3400
    %v3469 = vadd.f32 %v3468, %v3401
    %v3470 = vadd.f32 %v3469, %v3402
    %v3471 = vadd.f32 %v3470, %v3403
    %v3472 = vadd.f32 %v3471, %v3404
    %v3473 = vadd.f32 %v3472, %v3405
    %v3474 = vadd.f32 %v3473, %v3406
    %v3475 = vadd.f32 %v3474, %v3407
    %v3476 = vadd.f32 %v3475, %v3408
    %v3477 = vadd.f32 %v3476, %v3409
    %v3478 = vadd.f32 %v3477, %v3410
    %v3479 = vadd.f32 %v3478, %v3411
    %v3480 = vadd.f32 %v3479, %v3412
    %v3481 = vadd.f32 %v3480, %v3413
    %v3482 = vadd.f32 %v3481, %v3414
    %v3483 = vadd.f32 %v3482, %v3415
    %v3484 = vadd.f32 %v3483, %v3416
    %v3485 = vadd.f32 %v3484, %v3417
    %v3486 = vadd.f32 %v3485, %v3418
    %v3487 = vadd.f32 %v3486, %v3419
    %v3488 = vadd.f32 %v3487, %v3420
    %v3489 = vadd.f32 %v3488, %v3421
    %v3490 = vadd.f32 %v3489, %v3422
    %v3491 = vadd.f32 %v3490, %v3423
    %v3492 = vadd.f32 %v3491, %v3424
    %v3493 = vadd.f32 %v3492, %v3425
    %v3494 = vadd.f32 %v3493, %v3426
    %v3495 = vadd.f32 %v3494, %v3427
    %v3496 = vadd.f32 %v3495, %v3428
    %v3497 = vadd.f32 %v3496, %v3429
    %v3498 = vrot.slane %v3497, 4
    %v3499 = vadd.f32 %v3497, %v3498
    %v3500 = vrot.slane %v3499, 2
    %v3501 = vadd.f32 %v3499, %v3500
    %v3502 = vrot.slane %v3501, 1
    %v3503 = vadd.f32 %v3501, %v3502
    %v3504 = vmul.f32 %v3466, 0.00390625
    %v3505 = vmul.f32 %v3503, 0.00390625
    %v3506 = vld [vmem:[%s5] sm:$0xff]
    %v3507 = vld [vmem:[%s5 + $0x8] sm:$0xff]
    %v3508 = vld [vmem:[%s5 + $0x10] sm:$0xff]
    %v3509 = vld [vmem:[%s5 + $0x18] sm:$0xff]
    %v3510 = vld [vmem:[%s5 + $0x20] sm:$0xff]
    %v3511 = vld [vmem:[%s5 + $0x28] sm:$0xff]
    %v3512 = vld [vmem:[%s5 + $0x30] sm:$0xff]
    %v3513 = vld [vmem:[%s5 + $0x38] sm:$0xff]
    %v3514 = vld [vmem:[%s5 + $0x40] sm:$0xff]
    %v3515 = vld [vmem:[%s5 + $0x48] sm:$0xff]
    %v3516 = vld [vmem:[%s5 + $0x50] sm:$0xff]
    %v3517 = vld [vmem:[%s5 + $0x58] sm:$0xff]
    %v3518 = vld [vmem:[%s5 + $0x60] sm:$0xff]
    %v3519 = vld [vmem:[%s5 + $0x68] sm:$0xff]
    %v3520 = vld [vmem:[%s5 + $0x70] sm:$0xff]
    %v3521 = vld [vmem:[%s5 + $0x78] sm:$0xff]
    %v3522 = vld [vmem:[%s6] sm:$0x1]
    %v3524 = vlaneseq
    %v3525 = vshrl.u32 %v3524, 7
    %v3526 = vsub.s32 0, %v3525
    %v3527 = vrot.slane %v3522, %v3526
    %vm3531 = vcmask 1041409
    %v3532 = vsel %vm3531, %v3505, %v3504
    %3534 = vmatprep.subr.mxu0 0.0
    %3535 = vmatpush1.msra.mxu0 %v3506
    %3536 = vmatprep.subr.mxu0 0.0
    %3537 = vmatpush1.msra.mxu0 %v3507
    %3538 = vmatprep.subr.mxu0 0.0
    %3539 = vmatpush1.msra.mxu0 %v3508
    %3540 = vmatprep.subr.mxu0 0.0
    %3541 = vmatpush1.msra.mxu0 %v3509
    %3542 = vmatprep.subr.mxu0 0.0
    %3543 = vmatpush1.msra.mxu0 %v3510
    %3544 = vmatprep.subr.mxu0 0.0
    %3545 = vmatpush1.msra.mxu0 %v3511
    %3546 = vmatprep.subr.mxu0 0.0
    %3547 = vmatpush1.msra.mxu0 %v3512
    %3548 = vmatprep.subr.mxu0 0.0
    %3549 = vmatpush1.msra.mxu0 %v3513
    %3550 = vmatprep.subr.mxu0 0.0
    %3551 = vmatpush1.msra.mxu0 %v3514
    %3552 = vmatprep.subr.mxu0 0.0
    %3553 = vmatpush1.msra.mxu0 %v3515
    %3554 = vmatprep.subr.mxu0 0.0
    %3555 = vmatpush1.msra.mxu0 %v3516
    %3556 = vmatprep.subr.mxu0 0.0
    %3557 = vmatpush1.msra.mxu0 %v3517
    %3558 = vmatprep.subr.mxu0 0.0
    %3559 = vmatpush1.msra.mxu0 %v3518
    %3560 = vmatprep.subr.mxu0 0.0
    %3561 = vmatpush1.msra.mxu0 %v3519
    %3562 = vmatprep.subr.mxu0 0.0
    %3563 = vmatpush1.msra.mxu0 %v3520
    %3564 = vmatprep.subr.mxu0 0.0
    %3565 = vmatpush1.msra.mxu0 %v3521
    %3566 = vmatprep.subr.mxu0 0.0
    %3567 = vmatpush1.msra.mxu0 0.0
    %3568 = vmatprep.subr.mxu0 0.0
    %3569 = vmatpush1.msra.mxu0 0.0
    %3570 = vmatprep.subr.mxu0 0.0
    %3571 = vmatpush1.msra.mxu0 0.0
    %3572 = vmatprep.subr.mxu0 0.0
    %3573 = vmatpush1.msra.mxu0 0.0
    %3574 = vmatprep.subr.mxu0 0.0
    %3575 = vmatpush1.msra.mxu0 0.0
    %3576 = vmatprep.subr.mxu0 0.0
    %3577 = vmatpush1.msra.mxu0 0.0
    %3578 = vmatprep.subr.mxu0 0.0
    %3579 = vmatpush1.msra.mxu0 0.0
    %3580 = vmatprep.subr.mxu0 0.0
    %3581 = vmatpush1.msra.mxu0 0.0
    %3582 = vmatprep.subr.mxu0 0.0
    %3583 = vmatpush1.msra.mxu0 0.0
    %3584 = vmatprep.subr.mxu0 0.0
    %3585 = vmatpush1.msra.mxu0 0.0
    %3586 = vmatprep.subr.mxu0 0.0
    %3587 = vmatpush1.msra.mxu0 0.0
    %3588 = vmatprep.subr.mxu0 0.0
    %3589 = vmatpush1.msra.mxu0 0.0
    %3590 = vmatprep.subr.mxu0 0.0
    %3591 = vmatpush1.msra.mxu0 0.0
    %3592 = vmatprep.subr.mxu0 0.0
    %3593 = vmatpush1.msra.mxu0 0.0
    %3594 = vmatprep.subr.mxu0 0.0
    %3595 = vmatpush1.msra.mxu0 0.0
    %3596 = vmatprep.subr.mxu0 0.0
    %3597 = vmatpush1.msra.mxu0 0.0
    %3598 = vmatprep.mubr.f32.mxu0 0.0
    %3599 = vmatmul.mubr.f32.gmra.mrb[0].mxu0 %v3532
    %v3600 = vpop.f32.mrb[0].mxu0
    %v3601 = vadd.f32 %v3527, %v3600
    %v3602 = vpop.f32.mrb[0].mxu0
    %3603 = vdwg.mxu0
    %v3604 = vxor.u32 %v3601, 2147483648
    %v3605 = vmul.f32 %v3604, 1.442695
    %v3606 = vpow.pop %v3605
    %v3607 = vadd.f32 %v3606, 1.0
    %v3608 = vrcp.pop %v3607
    %v3609 = vmul.f32 1.0, %v3608
    %v3610 = vmul.f32 %v3601, %v3609
    %v3611 = vld [vmem:[%s7] sm:$0xff]
    %v3612 = vld [vmem:[%s8] sm:$0x1]
    %v3614 = vlaneseq
    %v3615 = vshrl.u32 %v3614, 7
    %v3616 = vsub.s32 0, %v3615
    %v3617 = vrot.slane %v3612, %v3616
    %vm3619 = vcmask 64512
    %v3621 = vsel %vm3619, %v3610, 0
    %3623 = vmatprep.subr.mxu0 0.0
    %3624 = vmatpush1.msra.mxu0 %v3611
    %3625 = vmatprep.subr.mxu0 0.0
    %3626 = vmatpush1.msra.mxu0 0.0
    %3627 = vmatprep.subr.mxu0 0.0
    %3628 = vmatpush1.msra.mxu0 0.0
    %3629 = vmatprep.subr.mxu0 0.0
    %3630 = vmatpush1.msra.mxu0 0.0
    %3631 = vmatprep.subr.mxu0 0.0
    %3632 = vmatpush1.msra.mxu0 0.0
    %3633 = vmatprep.subr.mxu0 0.0
    %3634 = vmatpush1.msra.mxu0 0.0
    %3635 = vmatprep.subr.mxu0 0.0
    %3636 = vmatpush1.msra.mxu0 0.0
    %3637 = vmatprep.subr.mxu0 0.0
    %3638 = vmatpush1.msra.mxu0 0.0
    %3639 = vmatprep.subr.mxu0 0.0
    %3640 = vmatpush1.msra.mxu0 0.0
    %3641 = vmatprep.subr.mxu0 0.0
    %3642 = vmatpush1.msra.mxu0 0.0
    %3643 = vmatprep.subr.mxu0 0.0
    %3644 = vmatpush1.msra.mxu0 0.0
    %3645 = vmatprep.subr.mxu0 0.0
    %3646 = vmatpush1.msra.mxu0 0.0
    %3647 = vmatprep.subr.mxu0 0.0
    %3648 = vmatpush1.msra.mxu0 0.0
    %3649 = vmatprep.subr.mxu0 0.0
    %3650 = vmatpush1.msra.mxu0 0.0
    %3651 = vmatprep.subr.mxu0 0.0
    %3652 = vmatpush1.msra.mxu0 0.0
    %3653 = vmatprep.subr.mxu0 0.0
    %3654 = vmatpush1.msra.mxu0 0.0
    %3655 = vmatprep.subr.mxu0 0.0
    %3656 = vmatpush1.msra.mxu0 0.0
    %3657 = vmatprep.subr.mxu0 0.0
    %3658 = vmatpush1.msra.mxu0 0.0
    %3659 = vmatprep.subr.mxu0 0.0
    %3660 = vmatpush1.msra.mxu0 0.0
    %3661 = vmatprep.subr.mxu0 0.0
    %3662 = vmatpush1.msra.mxu0 0.0
    %3663 = vmatprep.subr.mxu0 0.0
    %3664 = vmatpush1.msra.mxu0 0.0
    %3665 = vmatprep.subr.mxu0 0.0
    %3666 = vmatpush1.msra.mxu0 0.0
    %3667 = vmatprep.subr.mxu0 0.0
    %3668 = vmatpush1.msra.mxu0 0.0
    %3669 = vmatprep.subr.mxu0 0.0
    %3670 = vmatpush1.msra.mxu0 0.0
    %3671 = vmatprep.subr.mxu0 0.0
    %3672 = vmatpush1.msra.mxu0 0.0
    %3673 = vmatprep.subr.mxu0 0.0
    %3674 = vmatpush1.msra.mxu0 0.0
    %3675 = vmatprep.subr.mxu0 0.0
    %3676 = vmatpush1.msra.mxu0 0.0
    %3677 = vmatprep.subr.mxu0 0.0
    %3678 = vmatpush1.msra.mxu0 0.0
    %3679 = vmatprep.subr.mxu0 0.0
    %3680 = vmatpush1.msra.mxu0 0.0
    %3681 = vmatprep.subr.mxu0 0.0
    %3682 = vmatpush1.msra.mxu0 0.0
    %3683 = vmatprep.subr.mxu0 0.0
    %3684 = vmatpush1.msra.mxu0 0.0
    %3685 = vmatprep.subr.mxu0 0.0
    %3686 = vmatpush1.msra.mxu0 0.0
    %3687 = vmatprep.mubr.f32.mxu0 0.0
    %3688 = vmatmul.mubr.f32.gmra.mrb[0].mxu0 %v3621
    %v3689 = vpop.f32.mrb[0].mxu0
    %v3690 = vadd.f32 %v3617, %v3689
    %v3691 = vpop.f32.mrb[0].mxu0
    %3692 = vdwg.mxu0
    %v3693 = vxor.u32 %v3690, 2147483648
    %v3694 = vmul.f32 %v3693, 1.442695
    %v3695 = vpow.pop %v3694
    %v3696 = vadd.f32 %v3695, 1.0
    %v3697 = vrcp.pop %v3696
    %v3698 = vmul.f32 1.0, %v3697
    %v3701 = vunpack.c.l.s4 1966171168
    %v3702 = vunpack.c.0.s8 %v3701
    %v3703 = vlaneseq
    %v3704 = vshrl.u32 %v3703, 7
    %v3705 = vsub.s32 %v3702, %v3704
    %v3706 = vrot.slane %v3698, %v3705
    %v3707 = vcombine.high %v3706, %v3706
    %v3709 = vunpack.c.l.s4 1966171168
    %v3710 = vunpack.c.0.s8 %v3709
    %v3711 = vlaneseq
    %v3712 = vshrl.u32 %v3711, 7
    %v3713 = vsub.s32 %v3710, %v3712
    %v3714 = vrot.slane %v3706, %v3713
    %v3716 = vunpack.c.l.s4 1966171168
    %v3717 = vunpack.c.0.s8 %v3716
    %v3718 = vlaneseq
    %v3719 = vshrl.u32 %v3718, 7
    %v3720 = vsub.s32 %v3717, %v3719
    %v3721 = vrot.slane %v3707, %v3720
    %v3722 = vlaneseq
    %v3723 = vshrl.u32 %v3722, 7
    %v3724 = vsub.s32 0, %v3723
    %v3725 = vrot.slane %v3714, %v3724
    %v3726 = vlaneseq
    %v3727 = vshrl.u32 %v3726, 7
    %v3728 = vsub.s32 0, %v3727
    %v3729 = vrot.slane %v3721, %v3728
    %v3732 = vmul.f32 %v3366, %v3725
    %v3733 = vmul.f32 %v3367, %v3725
    %v3734 = vmul.f32 %v3368, %v3725
    %v3735 = vmul.f32 %v3369, %v3725
    %v3736 = vmul.f32 %v3370, %v3725
    %v3737 = vmul.f32 %v3371, %v3725
    %v3738 = vmul.f32 %v3372, %v3725
    %v3739 = vmul.f32 %v3373, %v3725
    %v3740 = vmul.f32 %v3374, %v3725
    %v3741 = vmul.f32 %v3375, %v3725
    %v3742 = vmul.f32 %v3376, %v3725
    %v3743 = vmul.f32 %v3377, %v3725
    %v3744 = vmul.f32 %v3378, %v3725
    %v3745 = vmul.f32 %v3379, %v3725
    %v3746 = vmul.f32 %v3380, %v3725
    %v3747 = vmul.f32 %v3381, %v3725
    %v3748 = vmul.f32 %v3382, %v3725
    %v3749 = vmul.f32 %v3383, %v3725
    %v3750 = vmul.f32 %v3384, %v3725
    %v3751 = vmul.f32 %v3385, %v3725
    %v3752 = vmul.f32 %v3386, %v3725
    %v3753 = vmul.f32 %v3387, %v3725
    %v3754 = vmul.f32 %v3388, %v3725
    %v3755 = vmul.f32 %v3389, %v3725
    %v3756 = vmul.f32 %v3390, %v3725
    %v3757 = vmul.f32 %v3391, %v3725
    %v3758 = vmul.f32 %v3392, %v3725
    %v3759 = vmul.f32 %v3393, %v3725
    %v3760 = vmul.f32 %v3394, %v3725
    %v3761 = vmul.f32 %v3395, %v3725
    %v3762 = vmul.f32 %v3396, %v3725
    %v3763 = vmul.f32 %v3397, %v3725
    %v3764 = vmul.f32 %v3398, %v3729
    %v3765 = vmul.f32 %v3399, %v3729
    %v3766 = vmul.f32 %v3400, %v3729
    %v3767 = vmul.f32 %v3401, %v3729
    %v3768 = vmul.f32 %v3402, %v3729
    %v3769 = vmul.f32 %v3403, %v3729
    %v3770 = vmul.f32 %v3404, %v3729
    %v3771 = vmul.f32 %v3405, %v3729
    %v3772 = vmul.f32 %v3406, %v3729
    %v3773 = vmul.f32 %v3407, %v3729
    %v3774 = vmul.f32 %v3408, %v3729
    %v3775 = vmul.f32 %v3409, %v3729
    %v3776 = vmul.f32 %v3410, %v3729
    %v3777 = vmul.f32 %v3411, %v3729
    %v3778 = vmul.f32 %v3412, %v3729
    %v3779 = vmul.f32 %v3413, %v3729
    %v3780 = vmul.f32 %v3414, %v3729
    %v3781 = vmul.f32 %v3415, %v3729
    %v3782 = vmul.f32 %v3416, %v3729
    %v3783 = vmul.f32 %v3417, %v3729
    %v3784 = vmul.f32 %v3418, %v3729
    %v3785 = vmul.f32 %v3419, %v3729
    %v3786 = vmul.f32 %v3420, %v3729
    %v3787 = vmul.f32 %v3421, %v3729
    %v3788 = vmul.f32 %v3422, %v3729
    %v3789 = vmul.f32 %v3423, %v3729
    %v3790 = vmul.f32 %v3424, %v3729
    %v3791 = vmul.f32 %v3425, %v3729
    %v3792 = vmul.f32 %v3426, %v3729
    %v3793 = vmul.f32 %v3427, %v3729
    %v3794 = vmul.f32 %v3428, %v3729
    %v3795 = vmul.f32 %v3429, %v3729
    %v3796 = vld [vmem:[#allocation6] sm:$0xff]
    %v3797 = vld [vmem:[#allocation6 + $0x8] sm:$0xff]
    %v3798 = vld [vmem:[#allocation6 + $0x10] sm:$0xff]
    %v3799 = vld [vmem:[#allocation6 + $0x18] sm:$0xff]
    %v3800 = vld [vmem:[#allocation6 + $0x20] sm:$0xff]
    %v3801 = vld [vmem:[#allocation6 + $0x28] sm:$0xff]
    %v3802 = vld [vmem:[#allocation6 + $0x30] sm:$0xff]
    %v3803 = vld [vmem:[#allocation6 + $0x38] sm:$0xff]
    %v3804 = vld [vmem:[#allocation6 + $0x40] sm:$0xff]
    %v3805 = vld [vmem:[#allocation6 + $0x48] sm:$0xff]
    %v3806 = vld [vmem:[#allocation6 + $0x50] sm:$0xff]
    %v3807 = vld [vmem:[#allocation6 + $0x58] sm:$0xff]
    %v3808 = vld [vmem:[#allocation6 + $0x60] sm:$0xff]
    %v3809 = vld [vmem:[#allocation6 + $0x68] sm:$0xff]
    %v3810 = vld [vmem:[#allocation6 + $0x70] sm:$0xff]
    %v3811 = vld [vmem:[#allocation6 + $0x78] sm:$0xff]
    %v3812 = vld [vmem:[%s10] sm:$0x1]
    %v3814 = vlaneseq
    %v3815 = vshrl.u32 %v3814, 7
    %v3816 = vsub.s32 0, %v3815
    %v3817 = vrot.slane %v3812, %v3816
    %3819 = vmatprep.subr.mxu0 0.0
    %3820 = vmatpush1.msra.mxu0 %v3796
    %3821 = vmatprep.subr.mxu0 0.0
    %3822 = vmatpush1.msra.mxu0 %v3797
    %3823 = vmatprep.subr.mxu0 0.0
    %3824 = vmatpush1.msra.mxu0 %v3798
    %3825 = vmatprep.subr.mxu0 0.0
    %3826 = vmatpush1.msra.mxu0 %v3799
    %3827 = vmatprep.subr.mxu0 0.0
    %3828 = vmatpush1.msra.mxu0 %v3800
    %3829 = vmatprep.subr.mxu0 0.0
    %3830 = vmatpush1.msra.mxu0 %v3801
    %3831 = vmatprep.subr.mxu0 0.0
    %3832 = vmatpush1.msra.mxu0 %v3802
    %3833 = vmatprep.subr.mxu0 0.0
    %3834 = vmatpush1.msra.mxu0 %v3803
    %3835 = vmatprep.subr.mxu0 0.0
    %3836 = vmatpush1.msra.mxu0 %v3804
    %3837 = vmatprep.subr.mxu0 0.0
    %3838 = vmatpush1.msra.mxu0 %v3805
    %3839 = vmatprep.subr.mxu0 0.0
    %3840 = vmatpush1.msra.mxu0 %v3806
    %3841 = vmatprep.subr.mxu0 0.0
    %3842 = vmatpush1.msra.mxu0 %v3807
    %3843 = vmatprep.subr.mxu0 0.0
    %3844 = vmatpush1.msra.mxu0 %v3808
    %3845 = vmatprep.subr.mxu0 0.0
    %3846 = vmatpush1.msra.mxu0 %v3809
    %3847 = vmatprep.subr.mxu0 0.0
    %3848 = vmatpush1.msra.mxu0 %v3810
    %3849 = vmatprep.subr.mxu0 0.0
    %3850 = vmatpush1.msra.mxu0 %v3811
    %3851 = vmatprep.subr.mxu0 0.0
    %3852 = vmatpush1.msra.mxu0 0.0
    %3853 = vmatprep.subr.mxu0 0.0
    %3854 = vmatpush1.msra.mxu0 0.0
    %3855 = vmatprep.subr.mxu0 0.0
    %3856 = vmatpush1.msra.mxu0 0.0
    %3857 = vmatprep.subr.mxu0 0.0
    %3858 = vmatpush1.msra.mxu0 0.0
    %3859 = vmatprep.subr.mxu0 0.0
    %3860 = vmatpush1.msra.mxu0 0.0
    %3861 = vmatprep.subr.mxu0 0.0
    %3862 = vmatpush1.msra.mxu0 0.0
    %3863 = vmatprep.subr.mxu0 0.0
    %3864 = vmatpush1.msra.mxu0 0.0
    %3865 = vmatprep.subr.mxu0 0.0
    %3866 = vmatpush1.msra.mxu0 0.0
    %3867 = vmatprep.subr.mxu0 0.0
    %3868 = vmatpush1.msra.mxu0 0.0
    %3869 = vmatprep.subr.mxu0 0.0
    %3870 = vmatpush1.msra.mxu0 0.0
    %3871 = vmatprep.subr.mxu0 0.0
    %3872 = vmatpush1.msra.mxu0 0.0
    %3873 = vmatprep.subr.mxu0 0.0
    %3874 = vmatpush1.msra.mxu0 0.0
    %3875 = vmatprep.subr.mxu0 0.0
    %3876 = vmatpush1.msra.mxu0 0.0
    %3877 = vmatprep.subr.mxu0 0.0
    %3878 = vmatpush1.msra.mxu0 0.0
    %3879 = vmatprep.subr.mxu0 0.0
    %3880 = vmatpush1.msra.mxu0 0.0
    %3881 = vmatprep.subr.mxu0 0.0
    %3882 = vmatpush1.msra.mxu0 0.0
    %3883 = vmatprep.mubr.f32.mxu0 0.0
    %3884 = vmatmul.mubr.f32.gmra.mrb[0].mxu0 %v3732
    %v3885 = vpop.f32.mrb[0].mxu0
    %v3886 = vadd.f32 %v3817, %v3885
    %v3887 = vpop.f32.mrb[0].mxu0
    %3888 = vmatprep.mubr.f32.mxu0 0.0
    %3889 = vmatmul.mubr.f32.gmra.mrb[0].mxu0 %v3733
    %v3890 = vpop.f32.mrb[0].mxu0
    %v3891 = vadd.f32 %v3817, %v3890
    %v3892 = vpop.f32.mrb[0].mxu0
    %3893 = vmatprep.mubr.f32.mxu0 0.0
    %3894 = vmatmul.mubr.f32.gmra.mrb[0].mxu0 %v3734
    %v3895 = vpop.f32.mrb[0].mxu0
    %v3896 = vadd.f32 %v3817, %v3895
    %v3897 = vpop.f32.mrb[0].mxu0
    %3898 = vmatprep.mubr.f32.mxu0 0.0
    %3899 = vmatmul.mubr.f32.gmra.mrb[0].mxu0 %v3735
    %v3900 = vpop.f32.mrb[0].mxu0
    %v3901 = vadd.f32 %v3817, %v3900
    %v3902 = vpop.f32.mrb[0].mxu0
    %3903 = vmatprep.mubr.f32.mxu0 0.0
    %3904 = vmatmul.mubr.f32.gmra.mrb[0].mxu0 %v3736
    %v3905 = vpop.f32.mrb[0].mxu0
    %v3906 = vadd.f32 %v3817, %v3905
    %v3907 = vpop.f32.mrb[0].mxu0
    %3908 = vmatprep.mubr.f32.mxu0 0.0
    %3909 = vmatmul.mubr.f32.gmra.mrb[0].mxu0 %v3737
    %v3910 = vpop.f32.mrb[0].mxu0
    %v3911 = vadd.f32 %v3817, %v3910
    %v3912 = vpop.f32.mrb[0].mxu0
    %3913 = vmatprep.mubr.f32.mxu0 0.0
    %3914 = vmatmul.mubr.f32.gmra.mrb[0].mxu0 %v3738
    %v3915 = vpop.f32.mrb[0].mxu0
    %v3916 = vadd.f32 %v3817, %v3915
    %v3917 = vpop.f32.mrb[0].mxu0
    %3918 = vmatprep.mubr.f32.mxu0 0.0
    %3919 = vmatmul.mubr.f32.gmra.mrb[0].mxu0 %v3739
    %v3920 = vpop.f32.mrb[0].mxu0
    %v3921 = vadd.f32 %v3817, %v3920
    %v3922 = vpop.f32.mrb[0].mxu0
    %3923 = vmatprep.mubr.f32.mxu0 0.0
    %3924 = vmatmul.mubr.f32.gmra.mrb[0].mxu0 %v3740
    %v3925 = vpop.f32.mrb[0].mxu0
    %v3926 = vadd.f32 %v3817, %v3925
    %v3927 = vpop.f32.mrb[0].mxu0
    %3928 = vmatprep.mubr.f32.mxu0 0.0
    %3929 = vmatmul.mubr.f32.gmra.mrb[0].mxu0 %v3741
    %v3930 = vpop.f32.mrb[0].mxu0
    %v3931 = vadd.f32 %v3817, %v3930
    %v3932 = vpop.f32.mrb[0].mxu0
    %3933 = vmatprep.mubr.f32.mxu0 0.0
    %3934 = vmatmul.mubr.f32.gmra.mrb[0].mxu0 %v3742
    %v3935 = vpop.f32.mrb[0].mxu0
    %v3936 = vadd.f32 %v3817, %v3935
    %v3937 = vpop.f32.mrb[0].mxu0
    %3938 = vmatprep.mubr.f32.mxu0 0.0
    %3939 = vmatmul.mubr.f32.gmra.mrb[0].mxu0 %v3743
    %v3940 = vpop.f32.mrb[0].mxu0
    %v3941 = vadd.f32 %v3817, %v3940
    %v3942 = vpop.f32.mrb[0].mxu0
    %3943 = vmatprep.mubr.f32.mxu0 0.0
    %3944 = vmatmul.mubr.f32.gmra.mrb[0].mxu0 %v3744
    %v3945 = vpop.f32.mrb[0].mxu0
    %v3946 = vadd.f32 %v3817, %v3945
    %v3947 = vpop.f32.mrb[0].mxu0
    %3948 = vmatprep.mubr.f32.mxu0 0.0
    %3949 = vmatmul.mubr.f32.gmra.mrb[0].mxu0 %v3745
    %v3950 = vpop.f32.mrb[0].mxu0
    %v3951 = vadd.f32 %v3817, %v3950
    %v3952 = vpop.f32.mrb[0].mxu0
    %3953 = vmatprep.mubr.f32.mxu0 0.0
    %3954 = vmatmul.mubr.f32.gmra.mrb[0].mxu0 %v3746
    %v3955 = vpop.f32.mrb[0].mxu0
    %v3956 = vadd.f32 %v3817, %v3955
    %v3957 = vpop.f32.mrb[0].mxu0
    %3958 = vmatprep.mubr.f32.mxu0 0.0
    %3959 = vmatmul.mubr.f32.gmra.mrb[0].mxu0 %v3747
    %v3960 = vpop.f32.mrb[0].mxu0
    %v3961 = vadd.f32 %v3817, %v3960
    %v3962 = vpop.f32.mrb[0].mxu0
    %3963 = vmatprep.mubr.f32.mxu0 0.0
    %3964 = vmatmul.mubr.f32.gmra.mrb[0].mxu0 %v3748
    %v3965 = vpop.f32.mrb[0].mxu0
    %v3966 = vadd.f32 %v3817, %v3965
    %v3967 = vpop.f32.mrb[0].mxu0
    %3968 = vmatprep.mubr.f32.mxu0 0.0
    %3969 = vmatmul.mubr.f32.gmra.mrb[0].mxu0 %v3749
    %v3970 = vpop.f32.mrb[0].mxu0
    %v3971 = vadd.f32 %v3817, %v3970
    %v3972 = vpop.f32.mrb[0].mxu0
    %3973 = vmatprep.mubr.f32.mxu0 0.0
    %3974 = vmatmul.mubr.f32.gmra.mrb[0].mxu0 %v3750
    %v3975 = vpop.f32.mrb[0].mxu0
    %v3976 = vadd.f32 %v3817, %v3975
    %v3977 = vpop.f32.mrb[0].mxu0
    %3978 = vmatprep.mubr.f32.mxu0 0.0
    %3979 = vmatmul.mubr.f32.gmra.mrb[0].mxu0 %v3751
    %v3980 = vpop.f32.mrb[0].mxu0
    %v3981 = vadd.f32 %v3817, %v3980
    %v3982 = vpop.f32.mrb[0].mxu0
    %3983 = vmatprep.mubr.f32.mxu0 0.0
    %3984 = vmatmul.mubr.f32.gmra.mrb[0].mxu0 %v3752
    %v3985 = vpop.f32.mrb[0].mxu0
    %v3986 = vadd.f32 %v3817, %v3985
    %v3987 = vpop.f32.mrb[0].mxu0
    %3988 = vmatprep.mubr.f32.mxu0 0.0
    %3989 = vmatmul.mubr.f32.gmra.mrb[0].mxu0 %v3753
    %v3990 = vpop.f32.mrb[0].mxu0
    %v3991 = vadd.f32 %v3817, %v3990
    %v3992 = vpop.f32.mrb[0].mxu0
    %3993 = vmatprep.mubr.f32.mxu0 0.0
    %3994 = vmatmul.mubr.f32.gmra.mrb[0].mxu0 %v3754
    %v3995 = vpop.f32.mrb[0].mxu0
    %v3996 = vadd.f32 %v3817, %v3995
    %v3997 = vpop.f32.mrb[0].mxu0
    %3998 = vmatprep.mubr.f32.mxu0 0.0
    %3999 = vmatmul.mubr.f32.gmra.mrb[0].mxu0 %v3755
    %v4000 = vpop.f32.mrb[0].mxu0
    %v4001 = vadd.f32 %v3817, %v4000
    %v4002 = vpop.f32.mrb[0].mxu0
    %4003 = vmatprep.mubr.f32.mxu0 0.0
    %4004 = vmatmul.mubr.f32.gmra.mrb[0].mxu0 %v3756
    %v4005 = vpop.f32.mrb[0].mxu0
    %v4006 = vadd.f32 %v3817, %v4005
    %v4007 = vpop.f32.mrb[0].mxu0
    %4008 = vmatprep.mubr.f32.mxu0 0.0
    %4009 = vmatmul.mubr.f32.gmra.mrb[0].mxu0 %v3757
    %v4010 = vpop.f32.mrb[0].mxu0
    %v4011 = vadd.f32 %v3817, %v4010
    %v4012 = vpop.f32.mrb[0].mxu0
    %4013 = vmatprep.mubr.f32.mxu0 0.0
    %4014 = vmatmul.mubr.f32.gmra.mrb[0].mxu0 %v3758
    %v4015 = vpop.f32.mrb[0].mxu0
    %v4016 = vadd.f32 %v3817, %v4015
    %v4017 = vpop.f32.mrb[0].mxu0
    %4018 = vmatprep.mubr.f32.mxu0 0.0
    %4019 = vmatmul.mubr.f32.gmra.mrb[0].mxu0 %v3759
    %v4020 = vpop.f32.mrb[0].mxu0
    %v4021 = vadd.f32 %v3817, %v4020
    %v4022 = vpop.f32.mrb[0].mxu0
    %4023 = vmatprep.mubr.f32.mxu0 0.0
    %4024 = vmatmul.mubr.f32.gmra.mrb[0].mxu0 %v3760
    %v4025 = vpop.f32.mrb[0].mxu0
    %v4026 = vadd.f32 %v3817, %v4025
    %v4027 = vpop.f32.mrb[0].mxu0
    %4028 = vmatprep.mubr.f32.mxu0 0.0
    %4029 = vmatmul.mubr.f32.gmra.mrb[0].mxu0 %v3761
    %v4030 = vpop.f32.mrb[0].mxu0
    %v4031 = vadd.f32 %v3817, %v4030
    %v4032 = vpop.f32.mrb[0].mxu0
    %4033 = vmatprep.mubr.f32.mxu0 0.0
    %4034 = vmatmul.mubr.f32.gmra.mrb[0].mxu0 %v3762
    %v4035 = vpop.f32.mrb[0].mxu0
    %v4036 = vadd.f32 %v3817, %v4035
    %v4037 = vpop.f32.mrb[0].mxu0
    %4038 = vmatprep.mubr.f32.mxu0 0.0
    %4039 = vmatmul.mubr.f32.gmra.mrb[0].mxu0 %v3763
    %v4040 = vpop.f32.mrb[0].mxu0
    %v4041 = vadd.f32 %v3817, %v4040
    %v4042 = vpop.f32.mrb[0].mxu0
    %4043 = vmatprep.mubr.f32.mxu0 0.0
    %4044 = vmatmul.mubr.f32.gmra.mrb[0].mxu0 %v3764
    %v4045 = vpop.f32.mrb[0].mxu0
    %v4046 = vadd.f32 %v3817, %v4045
    %v4047 = vpop.f32.mrb[0].mxu0
    %4048 = vmatprep.mubr.f32.mxu0 0.0
    %4049 = vmatmul.mubr.f32.gmra.mrb[0].mxu0 %v3765
    %v4050 = vpop.f32.mrb[0].mxu0
    %v4051 = vadd.f32 %v3817, %v4050
    %v4052 = vpop.f32.mrb[0].mxu0
    %4053 = vmatprep.mubr.f32.mxu0 0.0
    %4054 = vmatmul.mubr.f32.gmra.mrb[0].mxu0 %v3766
    %v4055 = vpop.f32.mrb[0].mxu0
    %v4056 = vadd.f32 %v3817, %v4055
    %v4057 = vpop.f32.mrb[0].mxu0
    %4058 = vmatprep.mubr.f32.mxu0 0.0
    %4059 = vmatmul.mubr.f32.gmra.mrb[0].mxu0 %v3767
    %v4060 = vpop.f32.mrb[0].mxu0
    %v4061 = vadd.f32 %v3817, %v4060
    %v4062 = vpop.f32.mrb[0].mxu0
    %4063 = vmatprep.mubr.f32.mxu0 0.0
    %4064 = vmatmul.mubr.f32.gmra.mrb[0].mxu0 %v3768
    %v4065 = vpop.f32.mrb[0].mxu0
    %v4066 = vadd.f32 %v3817, %v4065
    %v4067 = vpop.f32.mrb[0].mxu0
    %4068 = vmatprep.mubr.f32.mxu0 0.0
    %4069 = vmatmul.mubr.f32.gmra.mrb[0].mxu0 %v3769
    %v4070 = vpop.f32.mrb[0].mxu0
    %v4071 = vadd.f32 %v3817, %v4070
    %v4072 = vpop.f32.mrb[0].mxu0
    %4073 = vmatprep.mubr.f32.mxu0 0.0
    %4074 = vmatmul.mubr.f32.gmra.mrb[0].mxu0 %v3770
    %v4075 = vpop.f32.mrb[0].mxu0
    %v4076 = vadd.f32 %v3817, %v4075
    %v4077 = vpop.f32.mrb[0].mxu0
    %4078 = vmatprep.mubr.f32.mxu0 0.0
    %4079 = vmatmul.mubr.f32.gmra.mrb[0].mxu0 %v3771
    %v4080 = vpop.f32.mrb[0].mxu0
    %v4081 = vadd.f32 %v3817, %v4080
    %v4082 = vpop.f32.mrb[0].mxu0
    %4083 = vmatprep.mubr.f32.mxu0 0.0
    %4084 = vmatmul.mubr.f32.gmra.mrb[0].mxu0 %v3772
    %v4085 = vpop.f32.mrb[0].mxu0
    %v4086 = vadd.f32 %v3817, %v4085
    %v4087 = vpop.f32.mrb[0].mxu0
    %4088 = vmatprep.mubr.f32.mxu0 0.0
    %4089 = vmatmul.mubr.f32.gmra.mrb[0].mxu0 %v3773
    %v4090 = vpop.f32.mrb[0].mxu0
    %v4091 = vadd.f32 %v3817, %v4090
    %v4092 = vpop.f32.mrb[0].mxu0
    %4093 = vmatprep.mubr.f32.mxu0 0.0
    %4094 = vmatmul.mubr.f32.gmra.mrb[0].mxu0 %v3774
    %v4095 = vpop.f32.mrb[0].mxu0
    %v4096 = vadd.f32 %v3817, %v4095
    %v4097 = vpop.f32.mrb[0].mxu0
    %4098 = vmatprep.mubr.f32.mxu0 0.0
    %4099 = vmatmul.mubr.f32.gmra.mrb[0].mxu0 %v3775
    %v4100 = vpop.f32.mrb[0].mxu0
    %v4101 = vadd.f32 %v3817, %v4100
    %v4102 = vpop.f32.mrb[0].mxu0
    %4103 = vmatprep.mubr.f32.mxu0 0.0
    %4104 = vmatmul.mubr.f32.gmra.mrb[0].mxu0 %v3776
    %v4105 = vpop.f32.mrb[0].mxu0
    %v4106 = vadd.f32 %v3817, %v4105
    %v4107 = vpop.f32.mrb[0].mxu0
    %4108 = vmatprep.mubr.f32.mxu0 0.0
    %4109 = vmatmul.mubr.f32.gmra.mrb[0].mxu0 %v3777
    %v4110 = vpop.f32.mrb[0].mxu0
    %v4111 = vadd.f32 %v3817, %v4110
    %v4112 = vpop.f32.mrb[0].mxu0
    %4113 = vmatprep.mubr.f32.mxu0 0.0
    %4114 = vmatmul.mubr.f32.gmra.mrb[0].mxu0 %v3778
    %v4115 = vpop.f32.mrb[0].mxu0
    %v4116 = vadd.f32 %v3817, %v4115
    %v4117 = vpop.f32.mrb[0].mxu0
    %4118 = vmatprep.mubr.f32.mxu0 0.0
    %4119 = vmatmul.mubr.f32.gmra.mrb[0].mxu0 %v3779
    %v4120 = vpop.f32.mrb[0].mxu0
    %v4121 = vadd.f32 %v3817, %v4120
    %v4122 = vpop.f32.mrb[0].mxu0
    %4123 = vmatprep.mubr.f32.mxu0 0.0
    %4124 = vmatmul.mubr.f32.gmra.mrb[0].mxu0 %v3780
    %v4125 = vpop.f32.mrb[0].mxu0
    %v4126 = vadd.f32 %v3817, %v4125
    %v4127 = vpop.f32.mrb[0].mxu0
    %4128 = vmatprep.mubr.f32.mxu0 0.0
    %4129 = vmatmul.mubr.f32.gmra.mrb[0].mxu0 %v3781
    %v4130 = vpop.f32.mrb[0].mxu0
    %v4131 = vadd.f32 %v3817, %v4130
    %v4132 = vpop.f32.mrb[0].mxu0
    %4133 = vmatprep.mubr.f32.mxu0 0.0
    %4134 = vmatmul.mubr.f32.gmra.mrb[0].mxu0 %v3782
    %v4135 = vpop.f32.mrb[0].mxu0
    %v4136 = vadd.f32 %v3817, %v4135
    %v4137 = vpop.f32.mrb[0].mxu0
    %4138 = vmatprep.mubr.f32.mxu0 0.0
    %4139 = vmatmul.mubr.f32.gmra.mrb[0].mxu0 %v3783
    %v4140 = vpop.f32.mrb[0].mxu0
    %v4141 = vadd.f32 %v3817, %v4140
    %v4142 = vpop.f32.mrb[0].mxu0
    %4143 = vmatprep.mubr.f32.mxu0 0.0
    %4144 = vmatmul.mubr.f32.gmra.mrb[0].mxu0 %v3784
    %v4145 = vpop.f32.mrb[0].mxu0
    %v4146 = vadd.f32 %v3817, %v4145
    %v4147 = vpop.f32.mrb[0].mxu0
    %4148 = vmatprep.mubr.f32.mxu0 0.0
    %4149 = vmatmul.mubr.f32.gmra.mrb[0].mxu0 %v3785
    %v4150 = vpop.f32.mrb[0].mxu0
    %v4151 = vadd.f32 %v3817, %v4150
    %v4152 = vpop.f32.mrb[0].mxu0
    %4153 = vmatprep.mubr.f32.mxu0 0.0
    %4154 = vmatmul.mubr.f32.gmra.mrb[0].mxu0 %v3786
    %v4155 = vpop.f32.mrb[0].mxu0
    %v4156 = vadd.f32 %v3817, %v4155
    %v4157 = vpop.f32.mrb[0].mxu0
    %4158 = vmatprep.mubr.f32.mxu0 0.0
    %4159 = vmatmul.mubr.f32.gmra.mrb[0].mxu0 %v3787
    %v4160 = vpop.f32.mrb[0].mxu0
    %v4161 = vadd.f32 %v3817, %v4160
    %v4162 = vpop.f32.mrb[0].mxu0
    %4163 = vmatprep.mubr.f32.mxu0 0.0
    %4164 = vmatmul.mubr.f32.gmra.mrb[0].mxu0 %v3788
    %v4165 = vpop.f32.mrb[0].mxu0
    %v4166 = vadd.f32 %v3817, %v4165
    %v4167 = vpop.f32.mrb[0].mxu0
    %4168 = vmatprep.mubr.f32.mxu0 0.0
    %4169 = vmatmul.mubr.f32.gmra.mrb[0].mxu0 %v3789
    %v4170 = vpop.f32.mrb[0].mxu0
    %v4171 = vadd.f32 %v3817, %v4170
    %v4172 = vpop.f32.mrb[0].mxu0
    %4173 = vmatprep.mubr.f32.mxu0 0.0
    %4174 = vmatmul.mubr.f32.gmra.mrb[0].mxu0 %v3790
    %v4175 = vpop.f32.mrb[0].mxu0
    %v4176 = vadd.f32 %v3817, %v4175
    %v4177 = vpop.f32.mrb[0].mxu0
    %4178 = vmatprep.mubr.f32.mxu0 0.0
    %4179 = vmatmul.mubr.f32.gmra.mrb[0].mxu0 %v3791
    %v4180 = vpop.f32.mrb[0].mxu0
    %v4181 = vadd.f32 %v3817, %v4180
    %v4182 = vpop.f32.mrb[0].mxu0
    %4183 = vmatprep.mubr.f32.mxu0 0.0
    %4184 = vmatmul.mubr.f32.gmra.mrb[0].mxu0 %v3792
    %v4185 = vpop.f32.mrb[0].mxu0
    %v4186 = vadd.f32 %v3817, %v4185
    %v4187 = vpop.f32.mrb[0].mxu0
    %4188 = vmatprep.mubr.f32.mxu0 0.0
    %4189 = vmatmul.mubr.f32.gmra.mrb[0].mxu0 %v3793
    %v4190 = vpop.f32.mrb[0].mxu0
    %v4191 = vadd.f32 %v3817, %v4190
    %v4192 = vpop.f32.mrb[0].mxu0
    %4193 = vmatprep.mubr.f32.mxu0 0.0
    %4194 = vmatmul.mubr.f32.gmra.mrb[0].mxu0 %v3794
    %v4195 = vpop.f32.mrb[0].mxu0
    %v4196 = vadd.f32 %v3817, %v4195
    %v4197 = vpop.f32.mrb[0].mxu0
    %4198 = vmatprep.mubr.f32.mxu0 0.0
    %4199 = vmatmul.mubr.f32.gmra.mrb[0].mxu0 %v3795
    %v4200 = vpop.f32.mrb[0].mxu0
    %v4201 = vadd.f32 %v3817, %v4200
    %v4202 = vpop.f32.mrb[0].mxu0
    %4203 = vdwg.mxu0
    %v4204 = vadd.f32 %v3886, %v67
    %v4205 = vadd.f32 %v3891, %v68
    %v4206 = vadd.f32 %v3896, %v69
    %v4207 = vadd.f32 %v3901, %v70
    %v4208 = vadd.f32 %v3906, %v71
    %v4209 = vadd.f32 %v3911, %v72
    %v4210 = vadd.f32 %v3916, %v73
    %v4211 = vadd.f32 %v3921, %v74
    %v4212 = vadd.f32 %v3926, %v75
    %v4213 = vadd.f32 %v3931, %v76
    %v4214 = vadd.f32 %v3936, %v77
    %v4215 = vadd.f32 %v3941, %v78
    %v4216 = vadd.f32 %v3946, %v79
    %v4217 = vadd.f32 %v3951, %v80
    %v4218 = vadd.f32 %v3956, %v81
    %v4219 = vadd.f32 %v3961, %v82
    %v4220 = vadd.f32 %v3966, %v83
    %v4221 = vadd.f32 %v3971, %v84
    %v4222 = vadd.f32 %v3976, %v85
    %v4223 = vadd.f32 %v3981, %v86
    %v4224 = vadd.f32 %v3986, %v87
    %v4225 = vadd.f32 %v3991, %v88
    %v4226 = vadd.f32 %v3996, %v89
    %v4227 = vadd.f32 %v4001, %v90
    %v4228 = vadd.f32 %v4006, %v91
    %v4229 = vadd.f32 %v4011, %v92
    %v4230 = vadd.f32 %v4016, %v93
    %v4231 = vadd.f32 %v4021, %v94
    %v4232 = vadd.f32 %v4026, %v95
    %v4233 = vadd.f32 %v4031, %v96
    %v4234 = vadd.f32 %v4036, %v97
    %v4235 = vadd.f32 %v4041, %v98
    %v4236 = vadd.f32 %v4046, %v99
    %v4237 = vadd.f32 %v4051, %v100
    %v4238 = vadd.f32 %v4056, %v101
    %v4239 = vadd.f32 %v4061, %v102
    %v4240 = vadd.f32 %v4066, %v103
    %v4241 = vadd.f32 %v4071, %v104
    %v4242 = vadd.f32 %v4076, %v105
    %v4243 = vadd.f32 %v4081, %v106
    %v4244 = vadd.f32 %v4086, %v107
    %v4245 = vadd.f32 %v4091, %v108
    %v4246 = vadd.f32 %v4096, %v109
    %v4247 = vadd.f32 %v4101, %v110
    %v4248 = vadd.f32 %v4106, %v111
    %v4249 = vadd.f32 %v4111, %v112
    %v4250 = vadd.f32 %v4116, %v113
    %v4251 = vadd.f32 %v4121, %v114
    %v4252 = vadd.f32 %v4126, %v115
    %v4253 = vadd.f32 %v4131, %v116
    %v4254 = vadd.f32 %v4136, %v117
    %v4255 = vadd.f32 %v4141, %v118
    %v4256 = vadd.f32 %v4146, %v119
    %v4257 = vadd.f32 %v4151, %v120
    %v4258 = vadd.f32 %v4156, %v121
    %v4259 = vadd.f32 %v4161, %v122
    %v4260 = vadd.f32 %v4166, %v123
    %v4261 = vadd.f32 %v4171, %v124
    %v4262 = vadd.f32 %v4176, %v125
    %v4263 = vadd.f32 %v4181, %v126
    %v4264 = vadd.f32 %v4186, %v127
    %v4265 = vadd.f32 %v4191, %v128
    %v4266 = vadd.f32 %v4196, %v129
    %v4267 = vadd.f32 %v4201, %v130
    %4268 = vst [vmem:[#allocation8] sm:$0xff] %v4204
    %4269 = vst [vmem:[#allocation8 + $0x8] sm:$0xff] %v4205
    %4270 = vst [vmem:[#allocation8 + $0x10] sm:$0xff] %v4206
    %4271 = vst [vmem:[#allocation8 + $0x18] sm:$0xff] %v4207
    %4272 = vst [vmem:[#allocation8 + $0x20] sm:$0xff] %v4208
    %4273 = vst [vmem:[#allocation8 + $0x28] sm:$0xff] %v4209
    %4274 = vst [vmem:[#allocation8 + $0x30] sm:$0xff] %v4210
    %4275 = vst [vmem:[#allocation8 + $0x38] sm:$0xff] %v4211
    %4276 = vst [vmem:[#allocation8 + $0x40] sm:$0xff] %v4212
    %4277 = vst [vmem:[#allocation8 + $0x48] sm:$0xff] %v4213
    %4278 = vst [vmem:[#allocation8 + $0x50] sm:$0xff] %v4214
    %4279 = vst [vmem:[#allocation8 + $0x58] sm:$0xff] %v4215
    %4280 = vst [vmem:[#allocation8 + $0x60] sm:$0xff] %v4216
    %4281 = vst [vmem:[#allocation8 + $0x68] sm:$0xff] %v4217
    %4282 = vst [vmem:[#allocation8 + $0x70] sm:$0xff] %v4218
    %4283 = vst [vmem:[#allocation8 + $0x78] sm:$0xff] %v4219
    %4284 = vst [vmem:[#allocation8 + $0x80] sm:$0xff] %v4220
    %4285 = vst [vmem:[#allocation8 + $0x88] sm:$0xff] %v4221
    %4286 = vst [vmem:[#allocation8 + $0x90] sm:$0xff] %v4222
    %4287 = vst [vmem:[#allocation8 + $0x98] sm:$0xff] %v4223
    %4288 = vst [vmem:[#allocation8 + $0xa0] sm:$0xff] %v4224
    %4289 = vst [vmem:[#allocation8 + $0xa8] sm:$0xff] %v4225
    %4290 = vst [vmem:[#allocation8 + $0xb0] sm:$0xff] %v4226
    %4291 = vst [vmem:[#allocation8 + $0xb8] sm:$0xff] %v4227
    %4292 = vst [vmem:[#allocation8 + $0xc0] sm:$0xff] %v4228
    %4293 = vst [vmem:[#allocation8 + $0xc8] sm:$0xff] %v4229
    %4294 = vst [vmem:[#allocation8 + $0xd0] sm:$0xff] %v4230
    %4295 = vst [vmem:[#allocation8 + $0xd8] sm:$0xff] %v4231
    %4296 = vst [vmem:[#allocation8 + $0xe0] sm:$0xff] %v4232
    %4297 = vst [vmem:[#allocation8 + $0xe8] sm:$0xff] %v4233
    %4298 = vst [vmem:[#allocation8 + $0xf0] sm:$0xff] %v4234
    %4299 = vst [vmem:[#allocation8 + $0xf8] sm:$0xff] %v4235
    %4300 = vst [vmem:[#allocation8 + $0x100] sm:$0xff] %v4236
    %4301 = vst [vmem:[#allocation8 + $0x108] sm:$0xff] %v4237
    %4302 = vst [vmem:[#allocation8 + $0x110] sm:$0xff] %v4238
    %4303 = vst [vmem:[#allocation8 + $0x118] sm:$0xff] %v4239
    %4304 = vst [vmem:[#allocation8 + $0x120] sm:$0xff] %v4240
    %4305 = vst [vmem:[#allocation8 + $0x128] sm:$0xff] %v4241
    %4306 = vst [vmem:[#allocation8 + $0x130] sm:$0xff] %v4242
    %4307 = vst [vmem:[#allocation8 + $0x138] sm:$0xff] %v4243
    %4308 = vst [vmem:[#allocation8 + $0x140] sm:$0xff] %v4244
    %4309 = vst [vmem:[#allocation8 + $0x148] sm:$0xff] %v4245
    %4310 = vst [vmem:[#allocation8 + $0x150] sm:$0xff] %v4246
    %4311 = vst [vmem:[#allocation8 + $0x158] sm:$0xff] %v4247
    %4312 = vst [vmem:[#allocation8 + $0x160] sm:$0xff] %v4248
    %4313 = vst [vmem:[#allocation8 + $0x168] sm:$0xff] %v4249
    %4314 = vst [vmem:[#allocation8 + $0x170] sm:$0xff] %v4250
    %4315 = vst [vmem:[#allocation8 + $0x178] sm:$0xff] %v4251
    %4316 = vst [vmem:[#allocation8 + $0x180] sm:$0xff] %v4252
    %4317 = vst [vmem:[#allocation8 + $0x188] sm:$0xff] %v4253
    %4318 = vst [vmem:[#allocation8 + $0x190] sm:$0xff] %v4254
    %4319 = vst [vmem:[#allocation8 + $0x198] sm:$0xff] %v4255
    %4320 = vst [vmem:[#allocation8 + $0x1a0] sm:$0xff] %v4256
    %4321 = vst [vmem:[#allocation8 + $0x1a8] sm:$0xff] %v4257
    %4322 = vst [vmem:[#allocation8 + $0x1b0] sm:$0xff] %v4258
    %4323 = vst [vmem:[#allocation8 + $0x1b8] sm:$0xff] %v4259
    %4324 = vst [vmem:[#allocation8 + $0x1c0] sm:$0xff] %v4260
    %4325 = vst [vmem:[#allocation8 + $0x1c8] sm:$0xff] %v4261
    %4326 = vst [vmem:[#allocation8 + $0x1d0] sm:$0xff] %v4262
    %4327 = vst [vmem:[#allocation8 + $0x1d8] sm:$0xff] %v4263
    %4328 = vst [vmem:[#allocation8 + $0x1e0] sm:$0xff] %v4264
    %4329 = vst [vmem:[#allocation8 + $0x1e8] sm:$0xff] %v4265
    %4330 = vst [vmem:[#allocation8 + $0x1f0] sm:$0xff] %v4266
    %4331 = vst [vmem:[#allocation8 + $0x1f8] sm:$0xff] %v4267
    // Predicated region
    $region54: #{tpu_custom_call.1} parent=1 // pred_check
      _
    $region55: #{tpu_custom_call.1} parent=1 // pred_check_branch
      %4333 = sbr.rel (0) target = $region57
    $region56: #{tpu_custom_call.1} parent=1 // pred_region
      %s4335 = ssub.s32 8192, 8192
      %4336 = vsyncadd [#allocation5], %s4335
      %s4337 = sshll.u32 [#allocation8], 4
      %s4338 = int_to_ptr.vmem [resolvable:$true] %s4337
      %4343 = dma.vmem_to_hbm [thread:$0]  %s4338, 8192, %s11, [#allocation5], 128, 128, 8
    $region57: #{tpu_custom_call.1} parent=1 // pred_fallthru
      _
    // Predicated region
    $region58: #{tpu_custom_call.1} parent=1 // pred_check
      _
    $region59: #{tpu_custom_call.1} parent=1 // pred_check_branch
      %4345 = sbr.rel (0) target = $region61
    $region60: #{tpu_custom_call.1} parent=1 // pred_region
      %4346 = dma.done [#allocation5], 8192
    $region61: #{tpu_custom_call.1} parent=1 // pred_fallthru
      _
    %4347 = vsyncpa [#allocation4], 1
    %4348 = vsyncpa [#allocation7], 1
    %4349 = vsyncpa [#allocation5], 1

</llo_original>
